<compile_context>
chip_gen: v6e
topology: v6e:2x2x1
jax: 0.10.0
libtpu: 0.0.40
codegen_flags: <defaults>
</compile_context>

<pallas_src>
import functools

import jax
import jax.numpy as jnp
from jax import lax
from jax.experimental import pallas as pl
from jax.experimental.pallas import tpu as pltpu

LANE = 128  # pad every channel dim to a multiple of the 128-lane vreg width


# ----------------------------------------------------------------------------
# small helpers (wrapper side, plain XLA)
# ----------------------------------------------------------------------------
def _rup(c):
    return max(LANE, ((c + LANE - 1) // LANE) * LANE)


def _pad_last(a, cp):
    c = a.shape[-1]
    if c == cp:
        return a
    return jnp.pad(a, [(0, 0)] * (a.ndim - 1) + [(0, cp - c)])


def _pad_hwio(w, cin_p, cout_p):
    _, _, cin, cout = w.shape
    return jnp.pad(w, ((0, 0), (0, 0), (0, cin_p - cin), (0, cout_p - cout)))


def _pad2(a, rp_, cp_):
    r, c = a.shape
    return jnp.pad(a, ((0, rp_ - r), (0, cp_ - c)))


def _pick_th(H, W):
    """Largest divisor of H giving a modest strip (single strip for small images)."""
    target = max(8, 2048 // max(W, 1))
    th = 1
    for d in range(1, H + 1):
        if H % d == 0 and d <= target:
            th = d
    return th


def _polyphase_dx_fused_weights(w):
    """3x3 conv on a 2x nearest-upsampled image == 4 phase-specific 2x2 convs on the
    original grid.  The two dx phases are fused into the matmul N dim.
    w: (3,3,C,Co) f32 -> (2, 6, C, 2*Co); tap index = 3*r + c, r in {0,1}, c in {0,1,2}."""
    groups = (((0,), (1, 2)), ((0, 1), (2,)))   # [phase][tap] -> contributing 3x3 taps
    C, Co = w.shape[2], w.shape[3]

    def acc(dy, dx, r, c):
        a = jnp.zeros((C, Co), jnp.float32)
        for ky in groups[dy][r]:
            for kx in groups[dx][c]:
                a = a + w[ky, kx]
        return a

    zeros = jnp.zeros((C, Co), jnp.float32)
    out = []
    for dy in range(2):
        taps = []
        for r in range(2):
            for c in range(3):
                left = acc(dy, 0, r, c) if c <= 1 else zeros       # dx = 0 phase
                right = acc(dy, 1, r, c - 1) if c >= 1 else zeros  # dx = 1 phase
                taps.append(jnp.concatenate([left, right], axis=1))  # (C, 2*Co)
        out.append(jnp.stack(taps))                                   # (6, C, 2*Co)
    return jnp.stack(out)                                             # (2, 6, C, 2*Co)


# ----------------------------------------------------------------------------
# Pallas kernels
# ----------------------------------------------------------------------------
def _resblock_kernel(x_hbm, s_hbm,
                     sc1x_ref, sh1x_ref, sc1s_ref, sh1s_ref,
                     w1_ref, b1_ref, sc2_ref, sh2_ref, w2_ref, b2_ref,
                     idwx_ref, idws_ref, idb_ref,
                     o_ref,
                     xraw, sraw, padc, padh, sems,
                     *, W, TH, Cxp, Csp, Cp):
    """Fully fused UnetResBlock for one H-strip of one batch element.

    x_hbm: (N, H+4, W, Cxp) f32 HBM (H pre-padded by 2 zero rows top/bottom)
    s_hbm: (N, H+4, W, Csp) f32 HBM
    w1: (9, Cxp+Csp, Cp) bf16   w2: (3, 3*Cp, Cp) bf16   idw*: (C*, Cp) bf16
    BN scales/shifts, biases: (1, C) f32.   o_ref block: (1, TH, W, Cp) f32.
    """
    f32, bf16 = jnp.float32, jnp.bfloat16
    Ccat = Cxp + Csp
    n = pl.program_id(0)
    t = pl.program_id(1)
    last_t = pl.num_programs(1) - 1
    r0 = pl.multiple_of(t * TH, TH)          # padded-array row of the strip's halo top

    # ---- fetch the haloed raw strips (halo = 2 rows each side, recomputed)
    cpx = pltpu.make_async_copy(x_hbm.at[n, pl.ds(r0, TH + 4)], xraw, sems.at[0])
    cps = pltpu.make_async_copy(s_hbm.at[n, pl.ds(r0, TH + 4)], sraw, sems.at[1])
    cpx.start()
    cps.start()
    cpx.wait()
    cps.wait()

    def silu(v):
        return v * jax.nn.sigmoid(v)

    # ---- stage 1: folded-BN affine + SiLU, split over the (virtual) concat boundary
    x = xraw[...]                                                    # (TH+4, W, Cxp)
    s = sraw[...]                                                    # (TH+4, W, Csp)
    hx = silu(x * sc1x_ref[...].reshape(1, 1, Cxp) + sh1x_ref[...].reshape(1, 1, Cxp))
    hs = silu(s * sc1s_ref[...].reshape(1, 1, Csp) + sh1s_ref[...].reshape(1, 1, Csp))

    # virtual concat in VMEM (bf16): x -> lanes [0,Cxp), skip -> lanes [Cxp,Ccat)
    zx = jnp.zeros((TH + 4, 1, Cxp), f32)
    zs = jnp.zeros((TH + 4, 1, Csp), f32)
    padc[:, :, :Cxp] = jnp.concatenate([zx, hx, zx], axis=1).astype(bf16)
    padc[:, :, Cxp:] = jnp.concatenate([zs, hs, zs], axis=1).astype(bf16)

    # image-boundary halo rows must read as conv zero-padding (BN+SiLU of the padded
    # zeros is not zero).  Interior-strip halos hold real rows -> left untouched.
    @pl.when(t == 0)
    def _zero_top_c():
        padc[0:2, :, :] = jnp.zeros((2, W + 2, Ccat), bf16)

    @pl.when(t == last_t)
    def _zero_bot_c():
        padc[TH + 2:TH + 4, :, :] = jnp.zeros((2, W + 2, Ccat), bf16)

    # ---- conv1 (3x3 SAME): 9 accumulating tap matmuls, K = Ccat (no im2col buffer)
    M1 = (TH + 2) * W
    h1 = jnp.zeros((M1, Cp), f32)
    for ky in range(3):
        for kx in range(3):
            tap = padc[ky:ky + TH + 2, kx:kx + W, :].reshape(M1, Ccat)
            h1 = h1 + jnp.dot(tap, w1_ref[3 * ky + kx], preferred_element_type=f32)
    h1 = h1 + b1_ref[...]

    # ---- stage 2: BN + SiLU, pad into the conv2 scratch
    h2 = silu(h1 * sc2_ref[...] + sh2_ref[...]).reshape(TH + 2, W, Cp)
    zc = jnp.zeros((TH + 2, 1, Cp), f32)
    padh[...] = jnp.concatenate([zc, h2, zc], axis=1).astype(bf16)

    @pl.when(t == 0)
    def _zero_top_h():
        padh[0:1, :, :] = jnp.zeros((1, W + 2, Cp), bf16)

    @pl.when(t == last_t)
    def _zero_bot_h():
        padh[TH + 1:TH + 2, :, :] = jnp.zeros((1, W + 2, Cp), bf16)

    # ---- conv2 (3x3 SAME): 3 kx-grouped dots, K = 3*Cp
    M0 = TH * W
    h3 = jnp.zeros((M0, Cp), f32)
    for kx in range(3):
        op = jnp.concatenate([padh[ky:ky + TH, kx:kx + W, :] for ky in range(3)],
                             axis=-1).reshape(M0, 3 * Cp)
        h3 = h3 + jnp.dot(op, w2_ref[kx], preferred_element_type=f32)
    h3 = h3 + b2_ref[...]

    # ---- 1x1 id-conv on the (virtual) concat input + residual add
    xr = xraw[2:TH + 2, :, :].reshape(M0, Cxp).astype(bf16)
    sr = sraw[2:TH + 2, :, :].reshape(M0, Csp).astype(bf16)
    res = jnp.dot(xr, idwx_ref[...], preferred_element_type=f32)
    res = res + jnp.dot(sr, idws_ref[...], preferred_element_type=f32)
    res = res + idb_ref[...]

    o_ref[0] = (h3 + res).reshape(TH, W, Cp).astype(o_ref.dtype)


def _upconv_kernel(x_hbm, w_ref, b_ref, o_ref, xu, sem, *, W, TH, Cp):
    """Fused nearest-upsample(x2) + conv3x3 for one H-strip (polyphase, dx-fused).

    x_hbm: (N, H+2, W+2, Cp) bf16 HBM (zero-padded spatially in the wrapper).
    w_ref: (2, 6, Cp, 2*Cp) bf16    b_ref: (1, 2*Cp) f32
    o_ref block: (1, TH, 2, W, 2*Cp) f32; reshapes to (2*TH, 2*W, Cp) rows for free.
    """
    f32 = jnp.float32
    n = pl.program_id(0)
    t = pl.program_id(1)
    r0 = pl.multiple_of(t * TH, TH)

    cp = pltpu.make_async_copy(x_hbm.at[n, pl.ds(r0, TH + 2)], xu, sem.at[0])
    cp.start()
    cp.wait()

    M = TH * W
    for dy in range(2):
        acc = jnp.zeros((M, 2 * Cp), f32)
        for r in range(2):
            for c in range(3):
                tap = xu[dy + r:dy + r + TH, c:c + W, :].reshape(M, Cp)
                acc = acc + jnp.dot(tap, w_ref[dy, 3 * r + c],
                                    preferred_element_type=f32)
        acc = acc + b_ref[...]
        o_ref[0, :, dy, :, :] = acc.reshape(TH, W, 2 * Cp).astype(o_ref.dtype)


# ----------------------------------------------------------------------------
# pallas_call wrappers
# ----------------------------------------------------------------------------
def pallas_resblock(x, skip, rp):
    N, H, W, _ = x.shape
    Cxp, Csp, Cp = rp["Cxp"], rp["Csp"], rp["Cp"]
    Ccat = Cxp + Csp
    TH = _pick_th(H, W)

    # channel pad to lane width, spatial pad of 2 zero rows top/bottom (DMA halo)
    xpad = jnp.pad(_pad_last(x, Cxp), ((0, 0), (2, 2), (0, 0), (0, 0)))
    spad = jnp.pad(_pad_last(skip, Csp), ((0, 0), (2, 2), (0, 0), (0, 0)))

    kernel = functools.partial(_resblock_kernel, W=W, TH=TH, Cxp=Cxp, Csp=Csp, Cp=Cp)
    vec = lambda c: pl.BlockSpec((1, c), lambda n, t: (0, 0))

    return pl.pallas_call(
        kernel,
        out_shape=jax.ShapeDtypeStruct((N, H, W, Cp), jnp.float32),
        grid_spec=pltpu.PrefetchScalarGridSpec(
            num_scalar_prefetch=0,
            grid=(N, H // TH),
            in_specs=[
                pl.BlockSpec(memory_space=pl.ANY),                 # x  (manual DMA)
                pl.BlockSpec(memory_space=pl.ANY),                 # skip
                vec(Cxp), vec(Cxp), vec(Csp), vec(Csp),            # BN1 scale/shift
                pl.BlockSpec((9, Ccat, Cp), lambda n, t: (0, 0, 0)),   # conv1 w
                vec(Cp),                                           # conv1 b
                vec(Cp), vec(Cp),                                  # BN2 scale/shift
                pl.BlockSpec((3, 3 * Cp, Cp), lambda n, t: (0, 0, 0)),  # conv2 w
                vec(Cp),                                           # conv2 b
                pl.BlockSpec((Cxp, Cp), lambda n, t: (0, 0)),      # id-conv w (x half)
                pl.BlockSpec((Csp, Cp), lambda n, t: (0, 0)),      # id-conv w (skip)
                vec(Cp),                                           # id-conv b
            ],
            out_specs=pl.BlockSpec((1, TH, W, Cp), lambda n, t: (n, t, 0, 0)),
            scratch_shapes=[
                pltpu.VMEM((TH + 4, W, Cxp), jnp.float32),         # raw x strip
                pltpu.VMEM((TH + 4, W, Csp), jnp.float32),         # raw skip strip
                pltpu.VMEM((TH + 4, W + 2, Ccat), jnp.bfloat16),   # conv1 input pad
                pltpu.VMEM((TH + 2, W + 2, Cp), jnp.bfloat16),     # conv2 input pad
                pltpu.SemaphoreType.DMA((2,)),
            ],
        ),
        compiler_params=pltpu.CompilerParams(
            dimension_semantics=("parallel", "parallel"),
            vmem_limit_bytes=48 * 1024 * 1024,   # fits v7x's 64 MiB with headroom
        ),
    )(xpad, spad,
      rp["sc1x"], rp["sh1x"], rp["sc1s"], rp["sh1s"],
      rp["w1"], rp["b1"], rp["sc2"], rp["sh2"], rp["w2"], rp["b2"],
      rp["idwx"], rp["idws"], rp["idb"])


def pallas_upsample_conv(x, wph, b):
    N, H, W, Cp = x.shape
    TH = _pick_th(H, W)
    # the up-conv padding is plain zero padding -> pre-pad (and cast to bf16) once
    xpad = jnp.pad(x, ((0, 0), (1, 1), (1, 1), (0, 0))).astype(jnp.bfloat16)

    kernel = functools.partial(_upconv_kernel, W=W, TH=TH, Cp=Cp)
    y = pl.pallas_call(
        kernel,
        out_shape=jax.ShapeDtypeStruct((N, H, 2, W, 2 * Cp), jnp.float32),
        grid_spec=pltpu.PrefetchScalarGridSpec(
            num_scalar_prefetch=0,
            grid=(N, H // TH),
            in_specs=[
                pl.BlockSpec(memory_space=pl.ANY),
                pl.BlockSpec((2, 6, Cp, 2 * Cp), lambda n, t: (0, 0, 0, 0)),
                pl.BlockSpec((1, 2 * Cp), lambda n, t: (0, 0)),
            ],
            out_specs=pl.BlockSpec((1, TH, 2, W, 2 * Cp),
                                   lambda n, t: (n, t, 0, 0, 0)),
            scratch_shapes=[
                pltpu.VMEM((TH + 2, W + 2, Cp), jnp.bfloat16),
                pltpu.SemaphoreType.DMA((1,)),
            ],
        ),
        compiler_params=pltpu.CompilerParams(
            dimension_semantics=("parallel", "parallel"),
            vmem_limit_bytes=48 * 1024 * 1024,
        ),
    )(xpad, wph, b)
    # (N, H, 2, W, 2*Cp) -> (N, 2H, 2W, Cp): pure row-major reshape, no transpose.
    return y.reshape(N, 2 * H, 2 * W, Cp)


# ----------------------------------------------------------------------------
# UpBlock forward (glue in JAX, compute in Pallas)
# ----------------------------------------------------------------------------
def upblock_forward(x, ups, prepared):
    ups = list(ups)
    for rp in prepared["resnets"]:
        skip = ups.pop()
        x = pallas_resblock(x, skip, rp)           # (N, H, W, Cp) f32, lane-padded
    if prepared["add_up"]:
        out = pallas_upsample_conv(x, prepared["up_wph"], prepared["up_b"])
    else:
        out = x
    return out[..., :prepared["nf"]]


# ----------------------------------------------------------------------------
# Parameter init (logical, f32) + kernel-ready preparation (padded / bf16)
# ----------------------------------------------------------------------------
def init_upblock_params(key, ni, prev_nf, nf, num_layers=2, add_up=True):
    eps = 1e-5
    params = {"resnets": [], "add_up": add_up}

    def conv_params(k, cin, cout, ks):
        kw, kb = jax.random.split(k)
        w = jax.random.normal(kw, (ks, ks, cin, cout), jnp.float32) * 0.1
        b = jax.random.normal(kb, (1, cout), jnp.float32) * 0.1
        return w, b

    def bn_params(k, c):
        k1, k2, k3, k4 = jax.random.split(k, 4)
        gamma = jax.random.uniform(k1, (1, c), jnp.float32, 0.5, 1.5)
        beta = jax.random.normal(k2, (1, c), jnp.float32) * 0.1
        mean = jax.random.normal(k3, (1, c), jnp.float32) * 0.1
        var = jax.random.uniform(k4, (1, c), jnp.float32, 0.5, 1.5)
        scale = gamma / jnp.sqrt(var + eps)
        shift = beta - mean * scale
        return scale, shift

    for i in range(num_layers):
        cin = (prev_nf if i == 0 else nf) + (ni if i == num_layers - 1 else nf)
        key, k1, k2, k3, k4, k5 = jax.random.split(key, 6)
        w1, b1 = conv_params(k1, cin, nf, 3)
        s1, t1 = bn_params(k2, cin)
        w2, b2 = conv_params(k3, nf, nf, 3)
        s2, t2 = bn_params(k4, nf)
        if cin != nf:
            idw4, idb = conv_params(k5, cin, nf, 1)
            idw = idw4[0, 0]                      # (cin, nf)
        else:
            idw, idb = None, None
        params["resnets"].append(dict(w1=w1, b1=b1, s1=s1, t1=t1,
                                      w2=w2, b2=b2, s2=s2, t2=t2,
                                      idw=idw, idb=idb))
    if add_up:
        key, ku = jax.random.split(key)
        params["up_w"], params["up_b"] = conv_params(ku, nf, nf, 3)
    return params


def prepare_upblock_params(params, *, ni, prev_nf, nf, num_layers=2):
    prepared = {"resnets": [], "add_up": params["add_up"], "nf": nf}
    cp = _rup(nf)
    bf16 = jnp.bfloat16
    for i, rp in enumerate(params["resnets"]):
        cx = prev_nf if i == 0 else nf            # channels coming from x
        cs = ni if i == num_layers - 1 else nf    # channels coming from ups.pop()
        cxp, csp = _rup(cx), _rup(cs)
        ccat = cxp + csp
        w1, w2 = rp["w1"], rp["w2"]

        # conv1 weights, rows re-indexed for the lane-concatenated [x | skip] input
        w1p = jnp.zeros((3, 3, ccat, cp), jnp.float32)
        w1p = w1p.at[:, :, :cx, :nf].set(w1[:, :, :cx, :])
        w1p = w1p.at[:, :, cxp:cxp + cs, :nf].set(w1[:, :, cx:, :])
        w1t = w1p.reshape(9, ccat, cp).astype(bf16)

        # conv2 weights grouped by kx (K = 3*cp per dot)
        w2p = jnp.zeros((3, 3, cp, cp), jnp.float32).at[:, :, :nf, :nf].set(w2)
        w2g = jnp.stack([jnp.concatenate([w2p[ky, kx] for ky in range(3)], axis=0)
                         for kx in range(3)]).astype(bf16)          # (3, 3*cp, cp)

        pr = {
            "Cxp": cxp, "Csp": csp, "Cp": cp,
            "sc1x": _pad_last(rp["s1"][:, :cx], cxp),
            "sh1x": _pad_last(rp["t1"][:, :cx], cxp),
            "sc1s": _pad_last(rp["s1"][:, cx:], csp),
            "sh1s": _pad_last(rp["t1"][:, cx:], csp),
            "w1": w1t, "b1": _pad_last(rp["b1"], cp),
            "sc2": _pad_last(rp["s2"], cp), "sh2": _pad_last(rp["t2"], cp),
            "w2": w2g, "b2": _pad_last(rp["b2"], cp),
        }
        if rp["idw"] is None:
            # TODO(synk): identity residual (cin == nf) cannot occur inside UpBlock
            # (cin = nf + skip channels > nf); not implemented for the fused kernel.
            raise NotImplementedError("identity residual not supported in UpBlock")
        idw = rp["idw"]                           # (cin, nf) with cin = cx + cs
        pr["idwx"] = _pad2(idw[:cx], cxp, cp).astype(bf16)
        pr["idws"] = _pad2(idw[cx:], csp, cp).astype(bf16)
        pr["idb"] = _pad_last(rp["idb"], cp)
        prepared["resnets"].append(pr)

    if params["add_up"]:
        wpad = _pad_hwio(params["up_w"], cp, cp)
        prepared["up_wph"] = _polyphase_dx_fused_weights(wpad).astype(bf16)  # (2,6,cp,2cp)
        bpad = _pad_last(params["up_b"], cp)
        prepared["up_b"] = jnp.concatenate([bpad, bpad], axis=-1)            # (1, 2cp)
    return prepared


# ----------------------------------------------------------------------------
# Pure-JAX reference (exact f32, for correctness check)
# ----------------------------------------------------------------------------
def _ref_conv3x3(x, w, b):
    y = lax.conv_general_dilated(x, w, (1, 1), "SAME",
                                 dimension_numbers=("NHWC", "HWIO", "NHWC"))
    return y + b.reshape(1, 1, 1, -1)


def ref_forward(x, ups, params):
    ups = list(ups)
    for rp in params["resnets"]:
        xin = jnp.concatenate([x, ups.pop()], axis=-1)
        h = xin * rp["s1"].reshape(1, 1, 1, -1) + rp["t1"].reshape(1, 1, 1, -1)
        h = h * jax.nn.sigmoid(h)
        h = _ref_conv3x3(h, rp["w1"], rp["b1"])
        h = h * rp["s2"].reshape(1, 1, 1, -1) + rp["t2"].reshape(1, 1, 1, -1)
        h = h * jax.nn.sigmoid(h)
        h = _ref_conv3x3(h, rp["w2"], rp["b2"])
        if rp["idw"] is not None:
            idx = jnp.einsum("nhwc,cd->nhwd", xin, rp["idw"]) \
                + rp["idb"].reshape(1, 1, 1, -1)
        else:
            idx = xin
        x = h + idx
    if params["add_up"]:
        x = jnp.repeat(jnp.repeat(x, 2, axis=1), 2, axis=2)
        x = _ref_conv3x3(x, params["up_w"], params["up_b"])
    return x


# ----------------------------------------------------------------------------
if __name__ == "__main__":
    key = jax.random.PRNGKey(0)
    ni, prev_nf, nf = 4, 8, 8                    # UpBlock(ni=4, prev_nf=8, nf=8)
    N, H, W = 2, 8, 8
    kx, ku_first, ku_last, kp = jax.random.split(key, 4)

    # x: (N, H, W, prev_nf) NHWC.  ups is popped from the end:
    #   first pop -> nf channels (resnet 0), second pop -> ni channels (resnet 1)
    x = jax.random.normal(kx, (N, H, W, prev_nf), jnp.float32)
    ups = [jax.random.normal(ku_last, (N, H, W, ni), jnp.float32),
           jax.random.normal(ku_first, (N, H, W, nf), jnp.float32)]

    logical = init_upblock_params(kp, ni, prev_nf, nf, num_layers=2, add_up=True)
    prepared = prepare_upblock_params(logical, ni=ni, prev_nf=prev_nf, nf=nf,
                                      num_layers=2)

    out = jax.block_until_ready(upblock_forward(x, ups, prepared))
    assert out.shape == (N, 2 * H, 2 * W, nf), out.shape

    ref = ref_forward(x, ups, logical)
    # bf16 MXU operands (f32 accumulation) -> widened tolerance vs the exact-f32 ref.
    if not jnp.allclose(out, ref, atol=5e-2, rtol=5e-2):
        err = float(jnp.max(jnp.abs(out - ref)))
        raise AssertionError(f"Pallas UpBlock mismatch vs reference (max|err|={err})")

    print("KERNEL_OK")
</pallas_src>

<mosaic_0001>
module attributes {stable_mosaic.version = 11 : i64} {
  func.func @_resblock_kernel(%arg0: i32, %arg1: i32, %arg2: memref<2x12x8x128xf32, #tpu.memory_space<any>>, %arg3: memref<2x12x8x128xf32, #tpu.memory_space<any>>, %arg4: memref<1x128xf32, #tpu.memory_space<vmem>>, %arg5: memref<1x128xf32, #tpu.memory_space<vmem>>, %arg6: memref<1x128xf32, #tpu.memory_space<vmem>>, %arg7: memref<1x128xf32, #tpu.memory_space<vmem>>, %arg8: memref<9x256x128xbf16, #tpu.memory_space<vmem>>, %arg9: memref<1x128xf32, #tpu.memory_space<vmem>>, %arg10: memref<1x128xf32, #tpu.memory_space<vmem>>, %arg11: memref<1x128xf32, #tpu.memory_space<vmem>>, %arg12: memref<3x384x128xbf16, #tpu.memory_space<vmem>>, %arg13: memref<1x128xf32, #tpu.memory_space<vmem>>, %arg14: memref<128x128xbf16, #tpu.memory_space<vmem>>, %arg15: memref<128x128xbf16, #tpu.memory_space<vmem>>, %arg16: memref<1x128xf32, #tpu.memory_space<vmem>>, %arg17: memref<1x8x8x128xf32, #tpu.memory_space<vmem>>, %arg18: memref<12x8x128xf32, #tpu.memory_space<vmem>>, %arg19: memref<12x8x128xf32, #tpu.memory_space<vmem>>, %arg20: memref<12x10x256xbf16, #tpu.memory_space<vmem>>, %arg21: memref<10x10x128xbf16, #tpu.memory_space<vmem>>, %arg22: memref<2x!tpu.dma_semaphore, #tpu.memory_space<semaphore_mem>>) attributes {dimension_semantics = [#tpu.dimension_semantics<parallel>, #tpu.dimension_semantics<parallel>], iteration_bounds = array<i64: 2, 1>, scalar_prefetch = 0 : i64, scratch_operands = 5 : i64, tpu.core_type = #tpu.core_type<tc>, window_params = [{}, {}, {pipeline_mode = #tpu.pipeline_mode<synchronous>, transform_indices = @transform_2, window_bounds = array<i64: 1, 128>}, {pipeline_mode = #tpu.pipeline_mode<synchronous>, transform_indices = @transform_3, window_bounds = array<i64: 1, 128>}, {pipeline_mode = #tpu.pipeline_mode<synchronous>, transform_indices = @transform_4, window_bounds = array<i64: 1, 128>}, {pipeline_mode = #tpu.pipeline_mode<synchronous>, transform_indices = @transform_5, window_bounds = array<i64: 1, 128>}, {pipeline_mode = #tpu.pipeline_mode<synchronous>, transform_indices = @transform_6, window_bounds = array<i64: 9, 256, 128>}, {pipeline_mode = #tpu.pipeline_mode<synchronous>, transform_indices = @transform_7, window_bounds = array<i64: 1, 128>}, {pipeline_mode = #tpu.pipeline_mode<synchronous>, transform_indices = @transform_8, window_bounds = array<i64: 1, 128>}, {pipeline_mode = #tpu.pipeline_mode<synchronous>, transform_indices = @transform_9, window_bounds = array<i64: 1, 128>}, {pipeline_mode = #tpu.pipeline_mode<synchronous>, transform_indices = @transform_10, window_bounds = array<i64: 3, 384, 128>}, {pipeline_mode = #tpu.pipeline_mode<synchronous>, transform_indices = @transform_11, window_bounds = array<i64: 1, 128>}, {pipeline_mode = #tpu.pipeline_mode<synchronous>, transform_indices = @transform_12, window_bounds = array<i64: 128, 128>}, {pipeline_mode = #tpu.pipeline_mode<synchronous>, transform_indices = @transform_13, window_bounds = array<i64: 128, 128>}, {pipeline_mode = #tpu.pipeline_mode<synchronous>, transform_indices = @transform_14, window_bounds = array<i64: 1, 128>}, {transform_indices = @transform_15, window_bounds = array<i64: 1, 8, 8, 128>}]} {
    %c8_i32 = arith.constant 8 : i32
    %0 = arith.muli %arg1, %c8_i32 : i32
    %1 = tpu.assume_multiple %0, 8 : i32
    %c0_i32 = arith.constant 0 : i32
    %c0_i32_0 = arith.constant 0 : i32
    %c0_i32_1 = arith.constant 0 : i32
    %2 = tpu.memref_slice %arg2[%arg0, %1, %c0_i32_0, %c0_i32_1] : memref<2x12x8x128xf32, #tpu.memory_space<any>> -> memref<1x12x8x128xf32, #tpu.memory_space<any>>
    %3 = tpu.memref_squeeze %2 : memref<1x12x8x128xf32, #tpu.memory_space<any>> -> memref<12x8x128xf32, #tpu.memory_space<any>>
    %4 = tpu.memref_slice %arg22[%c0_i32] : memref<2x!tpu.dma_semaphore, #tpu.memory_space<semaphore_mem>> -> memref<1x!tpu.dma_semaphore, #tpu.memory_space<semaphore_mem>>
    %5 = tpu.memref_squeeze %4 : memref<1x!tpu.dma_semaphore, #tpu.memory_space<semaphore_mem>> -> memref<!tpu.dma_semaphore, #tpu.memory_space<semaphore_mem>>
    tpu.enqueue_dma source(%3 : memref<12x8x128xf32, #tpu.memory_space<any>>) target(%arg18 : memref<12x8x128xf32, #tpu.memory_space<vmem>>) target_semaphore(%5 : memref<!tpu.dma_semaphore, #tpu.memory_space<semaphore_mem>>)
    %c1_i32 = arith.constant 1 : i32
    %c0_i32_2 = arith.constant 0 : i32
    %c0_i32_3 = arith.constant 0 : i32
    %6 = tpu.memref_slice %arg3[%arg0, %1, %c0_i32_2, %c0_i32_3] : memref<2x12x8x128xf32, #tpu.memory_space<any>> -> memref<1x12x8x128xf32, #tpu.memory_space<any>>
    %7 = tpu.memref_squeeze %6 : memref<1x12x8x128xf32, #tpu.memory_space<any>> -> memref<12x8x128xf32, #tpu.memory_space<any>>
    %8 = tpu.memref_slice %arg22[%c1_i32] : memref<2x!tpu.dma_semaphore, #tpu.memory_space<semaphore_mem>> -> memref<1x!tpu.dma_semaphore, #tpu.memory_space<semaphore_mem>>
    %9 = tpu.memref_squeeze %8 : memref<1x!tpu.dma_semaphore, #tpu.memory_space<semaphore_mem>> -> memref<!tpu.dma_semaphore, #tpu.memory_space<semaphore_mem>>
    tpu.enqueue_dma source(%7 : memref<12x8x128xf32, #tpu.memory_space<any>>) target(%arg19 : memref<12x8x128xf32, #tpu.memory_space<vmem>>) target_semaphore(%9 : memref<!tpu.dma_semaphore, #tpu.memory_space<semaphore_mem>>)
    %c0_i32_4 = arith.constant 0 : i32
    %c0_i32_5 = arith.constant 0 : i32
    %c0_i32_6 = arith.constant 0 : i32
    %10 = tpu.memref_slice %arg2[%arg0, %1, %c0_i32_5, %c0_i32_6] : memref<2x12x8x128xf32, #tpu.memory_space<any>> -> memref<1x12x8x128xf32, #tpu.memory_space<any>>
    %11 = tpu.memref_squeeze %10 : memref<1x12x8x128xf32, #tpu.memory_space<any>> -> memref<12x8x128xf32, #tpu.memory_space<any>>
    %12 = tpu.memref_slice %arg22[%c0_i32_4] : memref<2x!tpu.dma_semaphore, #tpu.memory_space<semaphore_mem>> -> memref<1x!tpu.dma_semaphore, #tpu.memory_space<semaphore_mem>>
    %13 = tpu.memref_squeeze %12 : memref<1x!tpu.dma_semaphore, #tpu.memory_space<semaphore_mem>> -> memref<!tpu.dma_semaphore, #tpu.memory_space<semaphore_mem>>
    tpu.wait_dma2 semaphore(%13 : memref<!tpu.dma_semaphore, #tpu.memory_space<semaphore_mem>>) src(%11 : memref<12x8x128xf32, #tpu.memory_space<any>>) dst(%arg18 : memref<12x8x128xf32, #tpu.memory_space<vmem>>)
    %c1_i32_7 = arith.constant 1 : i32
    %c0_i32_8 = arith.constant 0 : i32
    %c0_i32_9 = arith.constant 0 : i32
    %14 = tpu.memref_slice %arg3[%arg0, %1, %c0_i32_8, %c0_i32_9] : memref<2x12x8x128xf32, #tpu.memory_space<any>> -> memref<1x12x8x128xf32, #tpu.memory_space<any>>
    %15 = tpu.memref_squeeze %14 : memref<1x12x8x128xf32, #tpu.memory_space<any>> -> memref<12x8x128xf32, #tpu.memory_space<any>>
    %16 = tpu.memref_slice %arg22[%c1_i32_7] : memref<2x!tpu.dma_semaphore, #tpu.memory_space<semaphore_mem>> -> memref<1x!tpu.dma_semaphore, #tpu.memory_space<semaphore_mem>>
    %17 = tpu.memref_squeeze %16 : memref<1x!tpu.dma_semaphore, #tpu.memory_space<semaphore_mem>> -> memref<!tpu.dma_semaphore, #tpu.memory_space<semaphore_mem>>
    tpu.wait_dma2 semaphore(%17 : memref<!tpu.dma_semaphore, #tpu.memory_space<semaphore_mem>>) src(%15 : memref<12x8x128xf32, #tpu.memory_space<any>>) dst(%arg19 : memref<12x8x128xf32, #tpu.memory_space<vmem>>)
    %c0 = arith.constant 0 : index
    %c0_10 = arith.constant 0 : index
    %c0_11 = arith.constant 0 : index
    %18 = vector.load %arg18[%c0, %c0_10, %c0_11] : memref<12x8x128xf32, #tpu.memory_space<vmem>>, vector<12x8x128xf32>
    %c0_12 = arith.constant 0 : index
    %c0_13 = arith.constant 0 : index
    %c0_14 = arith.constant 0 : index
    %19 = vector.load %arg19[%c0_12, %c0_13, %c0_14] : memref<12x8x128xf32, #tpu.memory_space<vmem>>, vector<12x8x128xf32>
    %c0_15 = arith.constant 0 : index
    %c0_16 = arith.constant 0 : index
    %20 = vector.load %arg4[%c0_15, %c0_16] : memref<1x128xf32, #tpu.memory_space<vmem>>, vector<1x128xf32>
    %21 = vector.shape_cast %20 : vector<1x128xf32> to vector<1x1x128xf32>
    %22 = vector.broadcast %21 : vector<1x1x128xf32> to vector<12x8x128xf32>
    %23 = arith.mulf %18, %22 : vector<12x8x128xf32>
    %c0_17 = arith.constant 0 : index
    %c0_18 = arith.constant 0 : index
    %24 = vector.load %arg5[%c0_17, %c0_18] : memref<1x128xf32, #tpu.memory_space<vmem>>, vector<1x128xf32>
    %25 = vector.shape_cast %24 : vector<1x128xf32> to vector<1x1x128xf32>
    %26 = vector.broadcast %25 : vector<1x1x128xf32> to vector<12x8x128xf32>
    %27 = arith.addf %23, %26 : vector<12x8x128xf32>
    %28 = arith.negf %27 : vector<12x8x128xf32>
    %29 = math.exp %28 : vector<12x8x128xf32>
    %cst = arith.constant 1.000000e+00 : f32
    %30 = vector.broadcast %cst : f32 to vector<12x8x128xf32>
    %31 = arith.addf %30, %29 : vector<12x8x128xf32>
    %32 = arith.divf %30, %31 : vector<12x8x128xf32>
    %33 = arith.mulf %27, %32 : vector<12x8x128xf32>
    %c0_19 = arith.constant 0 : index
    %c0_20 = arith.constant 0 : index
    %34 = vector.load %arg6[%c0_19, %c0_20] : memref<1x128xf32, #tpu.memory_space<vmem>>, vector<1x128xf32>
    %35 = vector.shape_cast %34 : vector<1x128xf32> to vector<1x1x128xf32>
    %36 = vector.broadcast %35 : vector<1x1x128xf32> to vector<12x8x128xf32>
    %37 = arith.mulf %19, %36 : vector<12x8x128xf32>
    %c0_21 = arith.constant 0 : index
    %c0_22 = arith.constant 0 : index
    %38 = vector.load %arg7[%c0_21, %c0_22] : memref<1x128xf32, #tpu.memory_space<vmem>>, vector<1x128xf32>
    %39 = vector.shape_cast %38 : vector<1x128xf32> to vector<1x1x128xf32>
    %40 = vector.broadcast %39 : vector<1x1x128xf32> to vector<12x8x128xf32>
    %41 = arith.addf %37, %40 : vector<12x8x128xf32>
    %42 = arith.negf %41 : vector<12x8x128xf32>
    %43 = math.exp %42 : vector<12x8x128xf32>
    %cst_23 = arith.constant 1.000000e+00 : f32
    %44 = vector.broadcast %cst_23 : f32 to vector<12x8x128xf32>
    %45 = arith.addf %44, %43 : vector<12x8x128xf32>
    %46 = arith.divf %44, %45 : vector<12x8x128xf32>
    %47 = arith.mulf %41, %46 : vector<12x8x128xf32>
    %cst_24 = arith.constant 0.000000e+00 : f32
    %48 = vector.broadcast %cst_24 : f32 to vector<12x1x128xf32>
    %cst_25 = arith.constant 0.000000e+00 : f32
    %49 = vector.broadcast %cst_25 : f32 to vector<12x1x128xf32>
    %50 = tpu.concatenate %48, %33, %48 in 1 : vector<12x1x128xf32>, vector<12x8x128xf32>, vector<12x1x128xf32> -> vector<12x10x128xf32>
    %51 = arith.truncf %50 : vector<12x10x128xf32> to vector<12x10x128xbf16>
    %c0_26 = arith.constant 0 : index
    %c0_27 = arith.constant 0 : index
    %c0_28 = arith.constant 0 : index
    %52 = vector.load %arg20[%c0_26, %c0_27, %c0_28] : memref<12x10x256xbf16, #tpu.memory_space<vmem>>, vector<12x10x128xbf16>
    tpu.vector_store %arg20[%c0_26, %c0_27, %c0_28], %51 {strides = array<i32>} : memref<12x10x256xbf16, #tpu.memory_space<vmem>>, vector<12x10x128xbf16>,
    %53 = tpu.concatenate %49, %47, %49 in 1 : vector<12x1x128xf32>, vector<12x8x128xf32>, vector<12x1x128xf32> -> vector<12x10x128xf32>
    %54 = arith.truncf %53 : vector<12x10x128xf32> to vector<12x10x128xbf16>
    %c0_29 = arith.constant 0 : index
    %c0_30 = arith.constant 0 : index
    %c128 = arith.constant 128 : index
    %55 = vector.load %arg20[%c0_29, %c0_30, %c128] : memref<12x10x256xbf16, #tpu.memory_space<vmem>>, vector<12x10x128xbf16>
    tpu.vector_store %arg20[%c0_29, %c0_30, %c128], %54 {strides = array<i32>} : memref<12x10x256xbf16, #tpu.memory_space<vmem>>, vector<12x10x128xbf16>,
    %c0_i32_31 = arith.constant 0 : i32
    %56 = arith.cmpi eq, %arg1, %c0_i32_31 : i32
    %57 = arith.extui %56 : i1 to i32
    %c0_i32_32 = arith.constant 0 : i32
    %58 = arith.cmpi ne, %57, %c0_i32_32 : i32
    scf.if %58 {
      %cst_166 = arith.constant 0.000000e+00 : bf16
      %193 = vector.broadcast %cst_166 : bf16 to vector<2x10x256xbf16>
      %c0_167 = arith.constant 0 : index
      %c0_168 = arith.constant 0 : index
      %c0_169 = arith.constant 0 : index
      %194 = vector.load %arg20[%c0_167, %c0_168, %c0_169] : memref<12x10x256xbf16, #tpu.memory_space<vmem>>, vector<2x10x256xbf16>
      tpu.vector_store %arg20[%c0_167, %c0_168, %c0_169], %193 {strides = array<i32>} : memref<12x10x256xbf16, #tpu.memory_space<vmem>>, vector<2x10x256xbf16>,
    } else {
    }
    %c0_i32_33 = arith.constant 0 : i32
    %59 = arith.cmpi eq, %arg1, %c0_i32_33 : i32
    %60 = arith.extui %59 : i1 to i32
    %c0_i32_34 = arith.constant 0 : i32
    %61 = arith.cmpi ne, %60, %c0_i32_34 : i32
    scf.if %61 {
      %cst_166 = arith.constant 0.000000e+00 : bf16
      %193 = vector.broadcast %cst_166 : bf16 to vector<2x10x256xbf16>
      %c10 = arith.constant 10 : index
      %c0_167 = arith.constant 0 : index
      %c0_168 = arith.constant 0 : index
      %194 = vector.load %arg20[%c10, %c0_167, %c0_168] : memref<12x10x256xbf16, #tpu.memory_space<vmem>>, vector<2x10x256xbf16>
      tpu.vector_store %arg20[%c10, %c0_167, %c0_168], %193 {strides = array<i32>} : memref<12x10x256xbf16, #tpu.memory_space<vmem>>, vector<2x10x256xbf16>,
    } else {
    }
    %cst_35 = arith.constant 0.000000e+00 : f32
    %62 = vector.broadcast %cst_35 : f32 to vector<80x128xf32>
    %c0_36 = arith.constant 0 : index
    %c0_37 = arith.constant 0 : index
    %c0_38 = arith.constant 0 : index
    %63 = vector.load %arg20[%c0_36, %c0_37, %c0_38] : memref<12x10x256xbf16, #tpu.memory_space<vmem>>, vector<10x8x256xbf16>
    %64 = vector.shape_cast %63 : vector<10x8x256xbf16> to vector<80x256xbf16>
    %c0_39 = arith.constant 0 : index
    %c0_40 = arith.constant 0 : index
    %c0_41 = arith.constant 0 : index
    %65 = vector.load %arg8[%c0_39, %c0_40, %c0_41] : memref<9x256x128xbf16, #tpu.memory_space<vmem>>, vector<1x256x128xbf16>
    %66 = vector.shape_cast %65 : vector<1x256x128xbf16> to vector<256x128xbf16>
    %cst_42 = arith.constant dense<0.000000e+00> : vector<80x128xf32>
    %67 = tpu.matmul %64, %66, %cst_42 {dimension_numbers = #tpu.dot_dimension_numbers<[1], [0], [0], [1], [0, 0, 1, 1], [], []>} : vector<80x256xbf16>, vector<256x128xbf16>, vector<80x128xf32> -> vector<80x128xf32>
    %68 = arith.addf %62, %67 : vector<80x128xf32>
    %c0_43 = arith.constant 0 : index
    %c1 = arith.constant 1 : index
    %c0_44 = arith.constant 0 : index
    %69 = vector.load %arg20[%c0_43, %c1, %c0_44] : memref<12x10x256xbf16, #tpu.memory_space<vmem>>, vector<10x8x256xbf16>
    %70 = vector.shape_cast %69 : vector<10x8x256xbf16> to vector<80x256xbf16>
    %c1_45 = arith.constant 1 : index
    %c0_46 = arith.constant 0 : index
    %c0_47 = arith.constant 0 : index
    %71 = vector.load %arg8[%c1_45, %c0_46, %c0_47] : memref<9x256x128xbf16, #tpu.memory_space<vmem>>, vector<1x256x128xbf16>
    %72 = vector.shape_cast %71 : vector<1x256x128xbf16> to vector<256x128xbf16>
    %cst_48 = arith.constant dense<0.000000e+00> : vector<80x128xf32>
    %73 = tpu.matmul %70, %72, %cst_48 {dimension_numbers = #tpu.dot_dimension_numbers<[1], [0], [0], [1], [0, 0, 1, 1], [], []>} : vector<80x256xbf16>, vector<256x128xbf16>, vector<80x128xf32> -> vector<80x128xf32>
    %74 = arith.addf %68, %73 : vector<80x128xf32>
    %c0_49 = arith.constant 0 : index
    %c2 = arith.constant 2 : index
    %c0_50 = arith.constant 0 : index
    %75 = vector.load %arg20[%c0_49, %c2, %c0_50] : memref<12x10x256xbf16, #tpu.memory_space<vmem>>, vector<10x8x256xbf16>
    %76 = vector.shape_cast %75 : vector<10x8x256xbf16> to vector<80x256xbf16>
    %c2_51 = arith.constant 2 : index
    %c0_52 = arith.constant 0 : index
    %c0_53 = arith.constant 0 : index
    %77 = vector.load %arg8[%c2_51, %c0_52, %c0_53] : memref<9x256x128xbf16, #tpu.memory_space<vmem>>, vector<1x256x128xbf16>
    %78 = vector.shape_cast %77 : vector<1x256x128xbf16> to vector<256x128xbf16>
    %cst_54 = arith.constant dense<0.000000e+00> : vector<80x128xf32>
    %79 = tpu.matmul %76, %78, %cst_54 {dimension_numbers = #tpu.dot_dimension_numbers<[1], [0], [0], [1], [0, 0, 1, 1], [], []>} : vector<80x256xbf16>, vector<256x128xbf16>, vector<80x128xf32> -> vector<80x128xf32>
    %80 = arith.addf %74, %79 : vector<80x128xf32>
    %c1_55 = arith.constant 1 : index
    %c0_56 = arith.constant 0 : index
    %c0_57 = arith.constant 0 : index
    %81 = vector.load %arg20[%c1_55, %c0_56, %c0_57] : memref<12x10x256xbf16, #tpu.memory_space<vmem>>, vector<10x8x256xbf16>
    %82 = vector.shape_cast %81 : vector<10x8x256xbf16> to vector<80x256xbf16>
    %c3 = arith.constant 3 : index
    %c0_58 = arith.constant 0 : index
    %c0_59 = arith.constant 0 : index
    %83 = vector.load %arg8[%c3, %c0_58, %c0_59] : memref<9x256x128xbf16, #tpu.memory_space<vmem>>, vector<1x256x128xbf16>
    %84 = vector.shape_cast %83 : vector<1x256x128xbf16> to vector<256x128xbf16>
    %cst_60 = arith.constant dense<0.000000e+00> : vector<80x128xf32>
    %85 = tpu.matmul %82, %84, %cst_60 {dimension_numbers = #tpu.dot_dimension_numbers<[1], [0], [0], [1], [0, 0, 1, 1], [], []>} : vector<80x256xbf16>, vector<256x128xbf16>, vector<80x128xf32> -> vector<80x128xf32>
    %86 = arith.addf %80, %85 : vector<80x128xf32>
    %c1_61 = arith.constant 1 : index
    %c1_62 = arith.constant 1 : index
    %c0_63 = arith.constant 0 : index
    %87 = vector.load %arg20[%c1_61, %c1_62, %c0_63] : memref<12x10x256xbf16, #tpu.memory_space<vmem>>, vector<10x8x256xbf16>
    %88 = vector.shape_cast %87 : vector<10x8x256xbf16> to vector<80x256xbf16>
    %c4 = arith.constant 4 : index
    %c0_64 = arith.constant 0 : index
    %c0_65 = arith.constant 0 : index
    %89 = vector.load %arg8[%c4, %c0_64, %c0_65] : memref<9x256x128xbf16, #tpu.memory_space<vmem>>, vector<1x256x128xbf16>
    %90 = vector.shape_cast %89 : vector<1x256x128xbf16> to vector<256x128xbf16>
    %cst_66 = arith.constant dense<0.000000e+00> : vector<80x128xf32>
    %91 = tpu.matmul %88, %90, %cst_66 {dimension_numbers = #tpu.dot_dimension_numbers<[1], [0], [0], [1], [0, 0, 1, 1], [], []>} : vector<80x256xbf16>, vector<256x128xbf16>, vector<80x128xf32> -> vector<80x128xf32>
    %92 = arith.addf %86, %91 : vector<80x128xf32>
    %c1_67 = arith.constant 1 : index
    %c2_68 = arith.constant 2 : index
    %c0_69 = arith.constant 0 : index
    %93 = vector.load %arg20[%c1_67, %c2_68, %c0_69] : memref<12x10x256xbf16, #tpu.memory_space<vmem>>, vector<10x8x256xbf16>
    %94 = vector.shape_cast %93 : vector<10x8x256xbf16> to vector<80x256xbf16>
    %c5 = arith.constant 5 : index
    %c0_70 = arith.constant 0 : index
    %c0_71 = arith.constant 0 : index
    %95 = vector.load %arg8[%c5, %c0_70, %c0_71] : memref<9x256x128xbf16, #tpu.memory_space<vmem>>, vector<1x256x128xbf16>
    %96 = vector.shape_cast %95 : vector<1x256x128xbf16> to vector<256x128xbf16>
    %cst_72 = arith.constant dense<0.000000e+00> : vector<80x128xf32>
    %97 = tpu.matmul %94, %96, %cst_72 {dimension_numbers = #tpu.dot_dimension_numbers<[1], [0], [0], [1], [0, 0, 1, 1], [], []>} : vector<80x256xbf16>, vector<256x128xbf16>, vector<80x128xf32> -> vector<80x128xf32>
    %98 = arith.addf %92, %97 : vector<80x128xf32>
    %c2_73 = arith.constant 2 : index
    %c0_74 = arith.constant 0 : index
    %c0_75 = arith.constant 0 : index
    %99 = vector.load %arg20[%c2_73, %c0_74, %c0_75] : memref<12x10x256xbf16, #tpu.memory_space<vmem>>, vector<10x8x256xbf16>
    %100 = vector.shape_cast %99 : vector<10x8x256xbf16> to vector<80x256xbf16>
    %c6 = arith.constant 6 : index
    %c0_76 = arith.constant 0 : index
    %c0_77 = arith.constant 0 : index
    %101 = vector.load %arg8[%c6, %c0_76, %c0_77] : memref<9x256x128xbf16, #tpu.memory_space<vmem>>, vector<1x256x128xbf16>
    %102 = vector.shape_cast %101 : vector<1x256x128xbf16> to vector<256x128xbf16>
    %cst_78 = arith.constant dense<0.000000e+00> : vector<80x128xf32>
    %103 = tpu.matmul %100, %102, %cst_78 {dimension_numbers = #tpu.dot_dimension_numbers<[1], [0], [0], [1], [0, 0, 1, 1], [], []>} : vector<80x256xbf16>, vector<256x128xbf16>, vector<80x128xf32> -> vector<80x128xf32>
    %104 = arith.addf %98, %103 : vector<80x128xf32>
    %c2_79 = arith.constant 2 : index
    %c1_80 = arith.constant 1 : index
    %c0_81 = arith.constant 0 : index
    %105 = vector.load %arg20[%c2_79, %c1_80, %c0_81] : memref<12x10x256xbf16, #tpu.memory_space<vmem>>, vector<10x8x256xbf16>
    %106 = vector.shape_cast %105 : vector<10x8x256xbf16> to vector<80x256xbf16>
    %c7 = arith.constant 7 : index
    %c0_82 = arith.constant 0 : index
    %c0_83 = arith.constant 0 : index
    %107 = vector.load %arg8[%c7, %c0_82, %c0_83] : memref<9x256x128xbf16, #tpu.memory_space<vmem>>, vector<1x256x128xbf16>
    %108 = vector.shape_cast %107 : vector<1x256x128xbf16> to vector<256x128xbf16>
    %cst_84 = arith.constant dense<0.000000e+00> : vector<80x128xf32>
    %109 = tpu.matmul %106, %108, %cst_84 {dimension_numbers = #tpu.dot_dimension_numbers<[1], [0], [0], [1], [0, 0, 1, 1], [], []>} : vector<80x256xbf16>, vector<256x128xbf16>, vector<80x128xf32> -> vector<80x128xf32>
    %110 = arith.addf %104, %109 : vector<80x128xf32>
    %c2_85 = arith.constant 2 : index
    %c2_86 = arith.constant 2 : index
    %c0_87 = arith.constant 0 : index
    %111 = vector.load %arg20[%c2_85, %c2_86, %c0_87] : memref<12x10x256xbf16, #tpu.memory_space<vmem>>, vector<10x8x256xbf16>
    %112 = vector.shape_cast %111 : vector<10x8x256xbf16> to vector<80x256xbf16>
    %c8 = arith.constant 8 : index
    %c0_88 = arith.constant 0 : index
    %c0_89 = arith.constant 0 : index
    %113 = vector.load %arg8[%c8, %c0_88, %c0_89] : memref<9x256x128xbf16, #tpu.memory_space<vmem>>, vector<1x256x128xbf16>
    %114 = vector.shape_cast %113 : vector<1x256x128xbf16> to vector<256x128xbf16>
    %cst_90 = arith.constant dense<0.000000e+00> : vector<80x128xf32>
    %115 = tpu.matmul %112, %114, %cst_90 {dimension_numbers = #tpu.dot_dimension_numbers<[1], [0], [0], [1], [0, 0, 1, 1], [], []>} : vector<80x256xbf16>, vector<256x128xbf16>, vector<80x128xf32> -> vector<80x128xf32>
    %116 = arith.addf %110, %115 : vector<80x128xf32>
    %c0_91 = arith.constant 0 : index
    %c0_92 = arith.constant 0 : index
    %117 = vector.load %arg9[%c0_91, %c0_92] : memref<1x128xf32, #tpu.memory_space<vmem>>, vector<1x128xf32>
    %118 = vector.broadcast %117 : vector<1x128xf32> to vector<80x128xf32>
    %119 = arith.addf %116, %118 : vector<80x128xf32>
    %c0_93 = arith.constant 0 : index
    %c0_94 = arith.constant 0 : index
    %120 = vector.load %arg10[%c0_93, %c0_94] : memref<1x128xf32, #tpu.memory_space<vmem>>, vector<1x128xf32>
    %121 = vector.broadcast %120 : vector<1x128xf32> to vector<80x128xf32>
    %122 = arith.mulf %119, %121 : vector<80x128xf32>
    %c0_95 = arith.constant 0 : index
    %c0_96 = arith.constant 0 : index
    %123 = vector.load %arg11[%c0_95, %c0_96] : memref<1x128xf32, #tpu.memory_space<vmem>>, vector<1x128xf32>
    %124 = vector.broadcast %123 : vector<1x128xf32> to vector<80x128xf32>
    %125 = arith.addf %122, %124 : vector<80x128xf32>
    %126 = arith.negf %125 : vector<80x128xf32>
    %127 = math.exp %126 : vector<80x128xf32>
    %cst_97 = arith.constant 1.000000e+00 : f32
    %128 = vector.broadcast %cst_97 : f32 to vector<80x128xf32>
    %129 = arith.addf %128, %127 : vector<80x128xf32>
    %130 = arith.divf %128, %129 : vector<80x128xf32>
    %131 = arith.mulf %125, %130 : vector<80x128xf32>
    %132 = vector.shape_cast %131 : vector<80x128xf32> to vector<10x8x128xf32>
    %cst_98 = arith.constant 0.000000e+00 : f32
    %133 = vector.broadcast %cst_98 : f32 to vector<10x1x128xf32>
    %134 = tpu.concatenate %133, %132, %133 in 1 : vector<10x1x128xf32>, vector<10x8x128xf32>, vector<10x1x128xf32> -> vector<10x10x128xf32>
    %135 = arith.truncf %134 : vector<10x10x128xf32> to vector<10x10x128xbf16>
    %c0_99 = arith.constant 0 : index
    %c0_100 = arith.constant 0 : index
    %c0_101 = arith.constant 0 : index
    %136 = vector.load %arg21[%c0_99, %c0_100, %c0_101] : memref<10x10x128xbf16, #tpu.memory_space<vmem>>, vector<10x10x128xbf16>
    tpu.vector_store %arg21[%c0_99, %c0_100, %c0_101], %135 {strides = array<i32>} : memref<10x10x128xbf16, #tpu.memory_space<vmem>>, vector<10x10x128xbf16>,
    %c0_i32_102 = arith.constant 0 : i32
    %137 = arith.cmpi eq, %arg1, %c0_i32_102 : i32
    %138 = arith.extui %137 : i1 to i32
    %c0_i32_103 = arith.constant 0 : i32
    %139 = arith.cmpi ne, %138, %c0_i32_103 : i32
    scf.if %139 {
      %cst_166 = arith.constant 0.000000e+00 : bf16
      %193 = vector.broadcast %cst_166 : bf16 to vector<1x10x128xbf16>
      %c0_167 = arith.constant 0 : index
      %c0_168 = arith.constant 0 : index
      %c0_169 = arith.constant 0 : index
      %194 = vector.load %arg21[%c0_167, %c0_168, %c0_169] : memref<10x10x128xbf16, #tpu.memory_space<vmem>>, vector<1x10x128xbf16>
      tpu.vector_store %arg21[%c0_167, %c0_168, %c0_169], %193 {strides = array<i32>} : memref<10x10x128xbf16, #tpu.memory_space<vmem>>, vector<1x10x128xbf16>,
    } else {
    }
    %c0_i32_104 = arith.constant 0 : i32
    %140 = arith.cmpi eq, %arg1, %c0_i32_104 : i32
    %141 = arith.extui %140 : i1 to i32
    %c0_i32_105 = arith.constant 0 : i32
    %142 = arith.cmpi ne, %141, %c0_i32_105 : i32
    scf.if %142 {
      %cst_166 = arith.constant 0.000000e+00 : bf16
      %193 = vector.broadcast %cst_166 : bf16 to vector<1x10x128xbf16>
      %c9 = arith.constant 9 : index
      %c0_167 = arith.constant 0 : index
      %c0_168 = arith.constant 0 : index
      %194 = vector.load %arg21[%c9, %c0_167, %c0_168] : memref<10x10x128xbf16, #tpu.memory_space<vmem>>, vector<1x10x128xbf16>
      tpu.vector_store %arg21[%c9, %c0_167, %c0_168], %193 {strides = array<i32>} : memref<10x10x128xbf16, #tpu.memory_space<vmem>>, vector<1x10x128xbf16>,
    } else {
    }
    %cst_106 = arith.constant 0.000000e+00 : f32
    %143 = vector.broadcast %cst_106 : f32 to vector<64x128xf32>
    %c0_107 = arith.constant 0 : index
    %c0_108 = arith.constant 0 : index
    %c0_109 = arith.constant 0 : index
    %144 = vector.load %arg21[%c0_107, %c0_108, %c0_109] : memref<10x10x128xbf16, #tpu.memory_space<vmem>>, vector<8x8x128xbf16>
    %c1_110 = arith.constant 1 : index
    %c0_111 = arith.constant 0 : index
    %c0_112 = arith.constant 0 : index
    %145 = vector.load %arg21[%c1_110, %c0_111, %c0_112] : memref<10x10x128xbf16, #tpu.memory_space<vmem>>, vector<8x8x128xbf16>
    %c2_113 = arith.constant 2 : index
    %c0_114 = arith.constant 0 : index
    %c0_115 = arith.constant 0 : index
    %146 = vector.load %arg21[%c2_113, %c0_114, %c0_115] : memref<10x10x128xbf16, #tpu.memory_space<vmem>>, vector<8x8x128xbf16>
    %147 = tpu.concatenate %144, %145, %146 in 2 : vector<8x8x128xbf16>, vector<8x8x128xbf16>, vector<8x8x128xbf16> -> vector<8x8x384xbf16>
    %148 = vector.shape_cast %147 : vector<8x8x384xbf16> to vector<64x384xbf16>
    %c0_116 = arith.constant 0 : index
    %c0_117 = arith.constant 0 : index
    %c0_118 = arith.constant 0 : index
    %149 = vector.load %arg12[%c0_116, %c0_117, %c0_118] : memref<3x384x128xbf16, #tpu.memory_space<vmem>>, vector<1x384x128xbf16>
    %150 = vector.shape_cast %149 : vector<1x384x128xbf16> to vector<384x128xbf16>
    %cst_119 = arith.constant dense<0.000000e+00> : vector<64x128xf32>
    %151 = tpu.matmul %148, %150, %cst_119 {dimension_numbers = #tpu.dot_dimension_numbers<[1], [0], [0], [1], [0, 0, 1, 1], [], []>} : vector<64x384xbf16>, vector<384x128xbf16>, vector<64x128xf32> -> vector<64x128xf32>
    %152 = arith.addf %143, %151 : vector<64x128xf32>
    %c0_120 = arith.constant 0 : index
    %c1_121 = arith.constant 1 : index
    %c0_122 = arith.constant 0 : index
    %153 = vector.load %arg21[%c0_120, %c1_121, %c0_122] : memref<10x10x128xbf16, #tpu.memory_space<vmem>>, vector<8x8x128xbf16>
    %c1_123 = arith.constant 1 : index
    %c1_124 = arith.constant 1 : index
    %c0_125 = arith.constant 0 : index
    %154 = vector.load %arg21[%c1_123, %c1_124, %c0_125] : memref<10x10x128xbf16, #tpu.memory_space<vmem>>, vector<8x8x128xbf16>
    %c2_126 = arith.constant 2 : index
    %c1_127 = arith.constant 1 : index
    %c0_128 = arith.constant 0 : index
    %155 = vector.load %arg21[%c2_126, %c1_127, %c0_128] : memref<10x10x128xbf16, #tpu.memory_space<vmem>>, vector<8x8x128xbf16>
    %156 = tpu.concatenate %153, %154, %155 in 2 : vector<8x8x128xbf16>, vector<8x8x128xbf16>, vector<8x8x128xbf16> -> vector<8x8x384xbf16>
    %157 = vector.shape_cast %156 : vector<8x8x384xbf16> to vector<64x384xbf16>
    %c1_129 = arith.constant 1 : index
    %c0_130 = arith.constant 0 : index
    %c0_131 = arith.constant 0 : index
    %158 = vector.load %arg12[%c1_129, %c0_130, %c0_131] : memref<3x384x128xbf16, #tpu.memory_space<vmem>>, vector<1x384x128xbf16>
    %159 = vector.shape_cast %158 : vector<1x384x128xbf16> to vector<384x128xbf16>
    %cst_132 = arith.constant dense<0.000000e+00> : vector<64x128xf32>
    %160 = tpu.matmul %157, %159, %cst_132 {dimension_numbers = #tpu.dot_dimension_numbers<[1], [0], [0], [1], [0, 0, 1, 1], [], []>} : vector<64x384xbf16>, vector<384x128xbf16>, vector<64x128xf32> -> vector<64x128xf32>
    %161 = arith.addf %152, %160 : vector<64x128xf32>
    %c0_133 = arith.constant 0 : index
    %c2_134 = arith.constant 2 : index
    %c0_135 = arith.constant 0 : index
    %162 = vector.load %arg21[%c0_133, %c2_134, %c0_135] : memref<10x10x128xbf16, #tpu.memory_space<vmem>>, vector<8x8x128xbf16>
    %c1_136 = arith.constant 1 : index
    %c2_137 = arith.constant 2 : index
    %c0_138 = arith.constant 0 : index
    %163 = vector.load %arg21[%c1_136, %c2_137, %c0_138] : memref<10x10x128xbf16, #tpu.memory_space<vmem>>, vector<8x8x128xbf16>
    %c2_139 = arith.constant 2 : index
    %c2_140 = arith.constant 2 : index
    %c0_141 = arith.constant 0 : index
    %164 = vector.load %arg21[%c2_139, %c2_140, %c0_141] : memref<10x10x128xbf16, #tpu.memory_space<vmem>>, vector<8x8x128xbf16>
    %165 = tpu.concatenate %162, %163, %164 in 2 : vector<8x8x128xbf16>, vector<8x8x128xbf16>, vector<8x8x128xbf16> -> vector<8x8x384xbf16>
    %166 = vector.shape_cast %165 : vector<8x8x384xbf16> to vector<64x384xbf16>
    %c2_142 = arith.constant 2 : index
    %c0_143 = arith.constant 0 : index
    %c0_144 = arith.constant 0 : index
    %167 = vector.load %arg12[%c2_142, %c0_143, %c0_144] : memref<3x384x128xbf16, #tpu.memory_space<vmem>>, vector<1x384x128xbf16>
    %168 = vector.shape_cast %167 : vector<1x384x128xbf16> to vector<384x128xbf16>
    %cst_145 = arith.constant dense<0.000000e+00> : vector<64x128xf32>
    %169 = tpu.matmul %166, %168, %cst_145 {dimension_numbers = #tpu.dot_dimension_numbers<[1], [0], [0], [1], [0, 0, 1, 1], [], []>} : vector<64x384xbf16>, vector<384x128xbf16>, vector<64x128xf32> -> vector<64x128xf32>
    %170 = arith.addf %161, %169 : vector<64x128xf32>
    %c0_146 = arith.constant 0 : index
    %c0_147 = arith.constant 0 : index
    %171 = vector.load %arg13[%c0_146, %c0_147] : memref<1x128xf32, #tpu.memory_space<vmem>>, vector<1x128xf32>
    %172 = vector.broadcast %171 : vector<1x128xf32> to vector<64x128xf32>
    %173 = arith.addf %170, %172 : vector<64x128xf32>
    %c2_148 = arith.constant 2 : index
    %c0_149 = arith.constant 0 : index
    %c0_150 = arith.constant 0 : index
    %174 = vector.load %arg18[%c2_148, %c0_149, %c0_150] : memref<12x8x128xf32, #tpu.memory_space<vmem>>, vector<8x8x128xf32>
    %175 = vector.shape_cast %174 : vector<8x8x128xf32> to vector<64x128xf32>
    %176 = arith.truncf %175 : vector<64x128xf32> to vector<64x128xbf16>
    %c2_151 = arith.constant 2 : index
    %c0_152 = arith.constant 0 : index
    %c0_153 = arith.constant 0 : index
    %177 = vector.load %arg19[%c2_151, %c0_152, %c0_153] : memref<12x8x128xf32, #tpu.memory_space<vmem>>, vector<8x8x128xf32>
    %178 = vector.shape_cast %177 : vector<8x8x128xf32> to vector<64x128xf32>
    %179 = arith.truncf %178 : vector<64x128xf32> to vector<64x128xbf16>
    %c0_154 = arith.constant 0 : index
    %c0_155 = arith.constant 0 : index
    %180 = vector.load %arg14[%c0_154, %c0_155] : memref<128x128xbf16, #tpu.memory_space<vmem>>, vector<128x128xbf16>
    %cst_156 = arith.constant dense<0.000000e+00> : vector<64x128xf32>
    %181 = tpu.matmul %176, %180, %cst_156 {dimension_numbers = #tpu.dot_dimension_numbers<[1], [0], [0], [1], [0, 0, 1, 1], [], []>} : vector<64x128xbf16>, vector<128x128xbf16>, vector<64x128xf32> -> vector<64x128xf32>
    %c0_157 = arith.constant 0 : index
    %c0_158 = arith.constant 0 : index
    %182 = vector.load %arg15[%c0_157, %c0_158] : memref<128x128xbf16, #tpu.memory_space<vmem>>, vector<128x128xbf16>
    %cst_159 = arith.constant dense<0.000000e+00> : vector<64x128xf32>
    %183 = tpu.matmul %179, %182, %cst_159 {dimension_numbers = #tpu.dot_dimension_numbers<[1], [0], [0], [1], [0, 0, 1, 1], [], []>} : vector<64x128xbf16>, vector<128x128xbf16>, vector<64x128xf32> -> vector<64x128xf32>
    %184 = arith.addf %181, %183 : vector<64x128xf32>
    %c0_160 = arith.constant 0 : index
    %c0_161 = arith.constant 0 : index
    %185 = vector.load %arg16[%c0_160, %c0_161] : memref<1x128xf32, #tpu.memory_space<vmem>>, vector<1x128xf32>
    %186 = vector.broadcast %185 : vector<1x128xf32> to vector<64x128xf32>
    %187 = arith.addf %184, %186 : vector<64x128xf32>
    %188 = arith.addf %173, %187 : vector<64x128xf32>
    %189 = vector.shape_cast %188 : vector<64x128xf32> to vector<8x8x128xf32>
    %c0_162 = arith.constant 0 : index
    %c0_163 = arith.constant 0 : index
    %c0_164 = arith.constant 0 : index
    %c0_165 = arith.constant 0 : index
    %190 = vector.load %arg17[%c0_162, %c0_163, %c0_164, %c0_165] : memref<1x8x8x128xf32, #tpu.memory_space<vmem>>, vector<1x8x8x128xf32>
    %191 = vector.shape_cast %190 : vector<1x8x8x128xf32> to vector<8x8x128xf32>
    %192 = vector.shape_cast %189 : vector<8x8x128xf32> to vector<1x8x8x128xf32>
    tpu.vector_store %arg17[%c0_162, %c0_163, %c0_164, %c0_165], %192 {strides = array<i32>} : memref<1x8x8x128xf32, #tpu.memory_space<vmem>>, vector<1x8x8x128xf32>,
    return
  }
  func.func @transform_2(%arg0: i32, %arg1: i32) -> (i32, i32) {
    %c0_i32 = arith.constant 0 : i32
    %c0_i32_0 = arith.constant 0 : i32
    %c0_i32_1 = arith.constant 0 : i32
    return %c0_i32, %c0_i32_0 : i32, i32
  }
  func.func @transform_3(%arg0: i32, %arg1: i32) -> (i32, i32) {
    %c0_i32 = arith.constant 0 : i32
    %c0_i32_0 = arith.constant 0 : i32
    %c0_i32_1 = arith.constant 0 : i32
    return %c0_i32, %c0_i32_0 : i32, i32
  }
  func.func @transform_4(%arg0: i32, %arg1: i32) -> (i32, i32) {
    %c0_i32 = arith.constant 0 : i32
    %c0_i32_0 = arith.constant 0 : i32
    %c0_i32_1 = arith.constant 0 : i32
    return %c0_i32, %c0_i32_0 : i32, i32
  }
  func.func @transform_5(%arg0: i32, %arg1: i32) -> (i32, i32) {
    %c0_i32 = arith.constant 0 : i32
    %c0_i32_0 = arith.constant 0 : i32
    %c0_i32_1 = arith.constant 0 : i32
    return %c0_i32, %c0_i32_0 : i32, i32
  }
  func.func @transform_6(%arg0: i32, %arg1: i32) -> (i32, i32, i32) {
    %c0_i32 = arith.constant 0 : i32
    %c0_i32_0 = arith.constant 0 : i32
    %c0_i32_1 = arith.constant 0 : i32
    %c0_i32_2 = arith.constant 0 : i32
    return %c0_i32, %c0_i32_0, %c0_i32_1 : i32, i32, i32
  }
  func.func @transform_7(%arg0: i32, %arg1: i32) -> (i32, i32) {
    %c0_i32 = arith.constant 0 : i32
    %c0_i32_0 = arith.constant 0 : i32
    %c0_i32_1 = arith.constant 0 : i32
    return %c0_i32, %c0_i32_0 : i32, i32
  }
  func.func @transform_8(%arg0: i32, %arg1: i32) -> (i32, i32) {
    %c0_i32 = arith.constant 0 : i32
    %c0_i32_0 = arith.constant 0 : i32
    %c0_i32_1 = arith.constant 0 : i32
    return %c0_i32, %c0_i32_0 : i32, i32
  }
  func.func @transform_9(%arg0: i32, %arg1: i32) -> (i32, i32) {
    %c0_i32 = arith.constant 0 : i32
    %c0_i32_0 = arith.constant 0 : i32
    %c0_i32_1 = arith.constant 0 : i32
    return %c0_i32, %c0_i32_0 : i32, i32
  }
  func.func @transform_10(%arg0: i32, %arg1: i32) -> (i32, i32, i32) {
    %c0_i32 = arith.constant 0 : i32
    %c0_i32_0 = arith.constant 0 : i32
    %c0_i32_1 = arith.constant 0 : i32
    %c0_i32_2 = arith.constant 0 : i32
    return %c0_i32, %c0_i32_0, %c0_i32_1 : i32, i32, i32
  }
  func.func @transform_11(%arg0: i32, %arg1: i32) -> (i32, i32) {
    %c0_i32 = arith.constant 0 : i32
    %c0_i32_0 = arith.constant 0 : i32
    %c0_i32_1 = arith.constant 0 : i32
    return %c0_i32, %c0_i32_0 : i32, i32
  }
  func.func @transform_12(%arg0: i32, %arg1: i32) -> (i32, i32) {
    %c0_i32 = arith.constant 0 : i32
    %c0_i32_0 = arith.constant 0 : i32
    %c0_i32_1 = arith.constant 0 : i32
    return %c0_i32, %c0_i32_0 : i32, i32
  }
  func.func @transform_13(%arg0: i32, %arg1: i32) -> (i32, i32) {
    %c0_i32 = arith.constant 0 : i32
    %c0_i32_0 = arith.constant 0 : i32
    %c0_i32_1 = arith.constant 0 : i32
    return %c0_i32, %c0_i32_0 : i32, i32
  }
  func.func @transform_14(%arg0: i32, %arg1: i32) -> (i32, i32) {
    %c0_i32 = arith.constant 0 : i32
    %c0_i32_0 = arith.constant 0 : i32
    %c0_i32_1 = arith.constant 0 : i32
    return %c0_i32, %c0_i32_0 : i32, i32
  }
  func.func @transform_15(%arg0: i32, %arg1: i32) -> (i32, i32, i32, i32) {
    %c0_i32 = arith.constant 0 : i32
    %c0_i32_0 = arith.constant 0 : i32
    %c0_i32_1 = arith.constant 0 : i32
    return %arg0, %arg1, %c0_i32, %c0_i32_0 : i32, i32, i32, i32
  }
}

</mosaic_0001>

<llo_original>
// kernel: tpu_custom_call.1
$region0: #{tpu_custom_call.1}
  #allocation0 [shape = 'u32[]', space=smem, size = 0x4, offset = 0x4, fixed_abs, tag = 'smem constant byte address 0x4 - core index']
  #allocation1 [shape = 'u32[144,128]{1,0:T(1,128)}', space=vmem, size = 0x12000, scoped, tag = 'internal scratch']
  #allocation2 [shape = 'f32[12,8,128]{2,1,0:T(8,128)}', space=vmem, size = 0xc000, scoped, tag = 'scratch operand']
  #allocation3 [shape = 'f32[12,8,128]{2,1,0:T(8,128)}', space=vmem, size = 0xc000, scoped, tag = 'scratch operand']
  #allocation4 [shape = 'bf16[12,10,256]{2,1,0:T(8,128)(2,1)}', space=vmem, size = 0x18000, scoped, tag = 'scratch operand']
  #allocation5 [shape = 'bf16[10,10,128]{2,1,0:T(8,128)(2,1)}', space=vmem, size = 0xa000, scoped, tag = 'scratch operand']
  #allocation6 [shape = 's32[2]{0}', space=sflag, size = 0x8, scoped, tag = 'scratch operand']
  #allocation16 [shape = 's32[]', space=sflag, size = 0x4, offset = 0, fixed_abs, tag = 'sflag constant byte address 0x0 - dummy sync flag']
  #allocation17 [shape = 's32[]', space=sflag, size = 0x4, offset = 0, fixed_abs, tag = 'sflag constant byte address 0x0 - dummy sync flag']
  #allocation18 [shape = 'u32[]', space=smem, size = 0x4, offset = 0x44, fixed_abs, tag = 'smem constant byte address 0x44 - assertion arg 0']
  #allocation19 [shape = 'u32[]', space=smem, size = 0x4, offset = 0x48, fixed_abs, tag = 'smem constant byte address 0x48 - assertion arg 1']
  #allocation20 [shape = 's32[]', space=sflag, size = 0x4, offset = 0, fixed_abs, tag = 'sflag constant byte address 0x0 - dummy sync flag']
  #allocation21 [shape = 's32[]', space=sflag, size = 0x4, offset = 0, fixed_abs, tag = 'sflag constant byte address 0x0 - dummy sync flag']
  %s0 = inlined_call_operand.hbm [shape: f32[2,12,8,128], index: 0, kind: input, shape index: {}]
  %s1 = inlined_call_operand.hbm [shape: f32[2,12,8,128], index: 1, kind: input, shape index: {}]
  %s2 = inlined_call_operand.vmem [shape: f32[1,128], index: 2, kind: input, shape index: {}]
  %s3 = inlined_call_operand.vmem [shape: f32[1,128], index: 3, kind: input, shape index: {}]
  %s4 = inlined_call_operand.vmem [shape: f32[1,128], index: 4, kind: input, shape index: {}]
  %s5 = inlined_call_operand.vmem [shape: f32[1,128], index: 5, kind: input, shape index: {}]
  %s6 = inlined_call_operand.hbm [shape: bf16[9,256,128], index: 6, kind: input, shape index: {}]
  %s7 = inlined_call_operand.vmem [shape: f32[1,128], index: 7, kind: input, shape index: {}]
  %s8 = inlined_call_operand.vmem [shape: f32[1,128], index: 8, kind: input, shape index: {}]
  %s9 = inlined_call_operand.vmem [shape: f32[1,128], index: 9, kind: input, shape index: {}]
  %s10 = inlined_call_operand.hbm [shape: bf16[3,384,128], index: 10, kind: input, shape index: {}]
  %s11 = inlined_call_operand.vmem [shape: f32[1,128], index: 11, kind: input, shape index: {}]
  %s12 = inlined_call_operand.hbm [shape: bf16[128,128], index: 12, kind: input, shape index: {}]
  %s13 = inlined_call_operand.hbm [shape: bf16[128,128], index: 13, kind: input, shape index: {}]
  %s14 = inlined_call_operand.vmem [shape: f32[1,128], index: 14, kind: input, shape index: {}]
  %s15 = inlined_call_operand.hbm [shape: f32[2,8,8,128], index: 15, kind: output, shape index: {}]
  %s16 = sld [smem:[#allocation0]]
  $region117: #{tpu_custom_call.1} parent=0
    _
  %s18 = ssub.s32 1, %s16
  %s19 = scalar_select 0, %s18, %s16
  $region1: #{tpu_custom_call.1} parent=0
    #allocation7 [shape = 'u8[589824]{0}', space=vmem, size = 0x90000, scoped, tag = 'input window, operand 6, single buffered']
    #allocation8 [shape = 's32[2]{0}', space=sflag, size = 0x8, scoped, tag = 'scoped memory for tpu_custom_call.1']
    #allocation9 [shape = 's32[2]{0}', space=sflag, size = 0x8, scoped, tag = 'scoped memory for tpu_custom_call.1']
    #allocation10 [shape = 'u8[294912]{0}', space=vmem, size = 0x48000, scoped, tag = 'input window, operand 10, single buffered']
    #allocation11 [shape = 's32[1]{0}', space=sflag, size = 0x4, scoped, tag = 'scoped memory for tpu_custom_call.1']
    #allocation12 [shape = 'u8[32768]{0}', space=vmem, size = 0x8000, scoped, tag = 'input window, operand 12, single buffered']
    #allocation13 [shape = 'u8[32768]{0}', space=vmem, size = 0x8000, scoped, tag = 'input window, operand 13, single buffered']
    #allocation14 [shape = 's32[1]{0}', space=sflag, size = 0x4, scoped, tag = 'scoped memory for tpu_custom_call.1']
    #allocation15 [shape = 'u8[65536]{0}', space=vmem, size = 0x10000, scoped, tag = 'output window, operand 0']
    %20 = vsyncpa [#allocation8], 0
    %21 = vsyncpa [#allocation11], 0
    %22 = vsyncpa [#allocation14], 0
    %23 = vsyncpa [#allocation9], 0
    %s24 = scalar_lea.sflag [#allocation9], 1
    %25 = vsyncpa %s24, 0
    loop: start=0, step=1, limit=4
    $region2: #{tpu_custom_call.1} parent=1 // loop_pre_header
      _
    $region3: #{tpu_custom_call.1} parent=1 // loop_header
      %s27 = sphi 0, %s31
      %p28 = scmp.ge.s32.totalorder %s27, 4
      %s34 = sphi 0, %s46
      %s35 = sphi 0, %s42
      %s36 = sphi 0, %s34
      %s37 = sphi 0, %s35
      %s38 = sphi 0, %s36
      %s39 = sphi 0, %s37
      %s47 = sphi 0, %s47
      %s49 = sphi 0, %s47
      %s50 = sphi 0, %s49
      %s64 = sphi 0, %s50
      %s68 = sphi 0, %s68
      %s70 = sphi 0, %s68
      %s71 = sphi 0, %s70
      %s85 = sphi 0, %s71
      %s89 = sphi 0, %s89
      %s91 = sphi 0, %s89
      %s92 = sphi 0, %s91
      %s106 = sphi 0, %s92
      %s110 = sphi 0, %s110
      %s112 = sphi 0, %s110
      %s113 = sphi 0, %s112
      %s127 = sphi 0, %s113
      %s131 = sphi 0, %s131
      %s133 = sphi 0, %s131
      %s134 = sphi 0, %s133
      %s148 = sphi 0, %s134
      %s152 = sphi 0, %s152
      %s154 = sphi 0, %s152
      %s155 = sphi 0, %s154
      %s169 = sphi 0, %s155
      %s173 = sphi 0, %s173
      %s175 = sphi 0, %s173
      %s176 = sphi 0, %s175
      %s190 = sphi 0, %s176
      %s194 = sphi 0, %s194
      %s196 = sphi 0, %s194
      %s197 = sphi 0, %s196
      %s211 = sphi 0, %s197
      %s215 = sphi 0, %s215
      %s217 = sphi 0, %s215
      %s218 = sphi 0, %s217
      %s232 = sphi 0, %s218
      %s236 = sphi 0, %s236
      %s238 = sphi 0, %s236
      %s239 = sphi 0, %s238
      %s253 = sphi 0, %s239
      %s257 = sphi 0, %s257
      %s259 = sphi 0, %s257
      %s260 = sphi 0, %s259
      %s274 = sphi 0, %s260
      %s278 = sphi 0, %s278
      %s280 = sphi 0, %s278
      %s281 = sphi 0, %s280
      %s295 = sphi 0, %s281
      %s299 = sphi 0, %s299
      %s301 = sphi 0, %s299
      %s302 = sphi 0, %s301
      %s316 = sphi 0, %s302
      %s324 = sphi 0, %s326
      %s327 = sphi 0, %s324
      %s328 = sphi 0, %s327
      %s344 = sphi 0, %s328
    $region4: #{tpu_custom_call.1} parent=1 // loop_header_branch
      %30 = sbr.rel (%p28) target = $region8
    $region5: #{tpu_custom_call.1} parent=1 // loop_body
      %s32 = ssub.s32 %s27, 1
      %s33 = ssub.s32 %s27, 2
      %s40 = sadd.s32 1, %s35
      %p41 = scmp.ge.s32.totalorder %s40, 1
      %s42 = scalar_select %p41, 0, %s40
      %s43 = sadd.s32 1, %s34
      %s44 = scalar_select %p41, %s43, %s34
      %p45 = scmp.ge.s32.totalorder %s44, 2
      %s46 = scalar_select %p45, 0, %s44
      %s48 = sadd.s32 %s47, 1
      %p51 = scmp.eq.s32.totalorder %s27, 1
      %p52 = scmp.ne.s32.totalorder %s47, %s49
      %p53 = scmp.eq.s32.totalorder %s27, 0
      %p54 = por %p52, %p53
      %p55 = scmp.ne.s32.totalorder %s47, %s49
      %p56 = scmp.eq.s32.totalorder %s32, 1
      %p57 = por %p55, %p56
      %p58 = scmp.ne.s32.totalorder %s49, %s50
      %p59 = scmp.eq.s32.totalorder %s32, 0
      %p60 = por %p58, %p59
      %p61 = scmp.ne.s32.totalorder %s49, %s50
      %p62 = scmp.eq.s32.totalorder %s33, 1
      %p63 = por %p61, %p62
      %p65 = scmp.ne.s32.totalorder %s50, %s64
      %p66 = scmp.eq.s32.totalorder %s33, 0
      %p67 = por %p65, %p66
      %s69 = sadd.s32 %s68, 1
      %p72 = scmp.eq.s32.totalorder %s27, 1
      %p73 = scmp.ne.s32.totalorder %s68, %s70
      %p74 = scmp.eq.s32.totalorder %s27, 0
      %p75 = por %p73, %p74
      %p76 = scmp.ne.s32.totalorder %s68, %s70
      %p77 = scmp.eq.s32.totalorder %s32, 1
      %p78 = por %p76, %p77
      %p79 = scmp.ne.s32.totalorder %s70, %s71
      %p80 = scmp.eq.s32.totalorder %s32, 0
      %p81 = por %p79, %p80
      %p82 = scmp.ne.s32.totalorder %s70, %s71
      %p83 = scmp.eq.s32.totalorder %s33, 1
      %p84 = por %p82, %p83
      %p86 = scmp.ne.s32.totalorder %s71, %s85
      %p87 = scmp.eq.s32.totalorder %s33, 0
      %p88 = por %p86, %p87
      %s90 = sadd.s32 %s89, 1
      %p93 = scmp.eq.s32.totalorder %s27, 1
      %p94 = scmp.ne.s32.totalorder %s89, %s91
      %p95 = scmp.eq.s32.totalorder %s27, 0
      %p96 = por %p94, %p95
      %p97 = scmp.ne.s32.totalorder %s89, %s91
      %p98 = scmp.eq.s32.totalorder %s32, 1
      %p99 = por %p97, %p98
      %p100 = scmp.ne.s32.totalorder %s91, %s92
      %p101 = scmp.eq.s32.totalorder %s32, 0
      %p102 = por %p100, %p101
      %p103 = scmp.ne.s32.totalorder %s91, %s92
      %p104 = scmp.eq.s32.totalorder %s33, 1
      %p105 = por %p103, %p104
      %p107 = scmp.ne.s32.totalorder %s92, %s106
      %p108 = scmp.eq.s32.totalorder %s33, 0
      %p109 = por %p107, %p108
      %s111 = sadd.s32 %s110, 1
      %p114 = scmp.eq.s32.totalorder %s27, 1
      %p115 = scmp.ne.s32.totalorder %s110, %s112
      %p116 = scmp.eq.s32.totalorder %s27, 0
      %p117 = por %p115, %p116
      %p118 = scmp.ne.s32.totalorder %s110, %s112
      %p119 = scmp.eq.s32.totalorder %s32, 1
      %p120 = por %p118, %p119
      %p121 = scmp.ne.s32.totalorder %s112, %s113
      %p122 = scmp.eq.s32.totalorder %s32, 0
      %p123 = por %p121, %p122
      %p124 = scmp.ne.s32.totalorder %s112, %s113
      %p125 = scmp.eq.s32.totalorder %s33, 1
      %p126 = por %p124, %p125
      %p128 = scmp.ne.s32.totalorder %s113, %s127
      %p129 = scmp.eq.s32.totalorder %s33, 0
      %p130 = por %p128, %p129
      %s132 = sadd.s32 %s131, 1
      %p135 = scmp.eq.s32.totalorder %s27, 1
      %p136 = scmp.ne.s32.totalorder %s131, %s133
      %p137 = scmp.eq.s32.totalorder %s27, 0
      %p138 = por %p136, %p137
      %p139 = scmp.ne.s32.totalorder %s131, %s133
      %p140 = scmp.eq.s32.totalorder %s32, 1
      %p141 = por %p139, %p140
      %p142 = scmp.ne.s32.totalorder %s133, %s134
      %p143 = scmp.eq.s32.totalorder %s32, 0
      %p144 = por %p142, %p143
      %p145 = scmp.ne.s32.totalorder %s133, %s134
      %p146 = scmp.eq.s32.totalorder %s33, 1
      %p147 = por %p145, %p146
      %p149 = scmp.ne.s32.totalorder %s134, %s148
      %p150 = scmp.eq.s32.totalorder %s33, 0
      %p151 = por %p149, %p150
      %s153 = sadd.s32 %s152, 1
      %p156 = scmp.eq.s32.totalorder %s27, 1
      %p157 = scmp.ne.s32.totalorder %s152, %s154
      %p158 = scmp.eq.s32.totalorder %s27, 0
      %p159 = por %p157, %p158
      %p160 = scmp.ne.s32.totalorder %s152, %s154
      %p161 = scmp.eq.s32.totalorder %s32, 1
      %p162 = por %p160, %p161
      %p163 = scmp.ne.s32.totalorder %s154, %s155
      %p164 = scmp.eq.s32.totalorder %s32, 0
      %p165 = por %p163, %p164
      %p166 = scmp.ne.s32.totalorder %s154, %s155
      %p167 = scmp.eq.s32.totalorder %s33, 1
      %p168 = por %p166, %p167
      %p170 = scmp.ne.s32.totalorder %s155, %s169
      %p171 = scmp.eq.s32.totalorder %s33, 0
      %p172 = por %p170, %p171
      %s174 = sadd.s32 %s173, 1
      %p177 = scmp.eq.s32.totalorder %s27, 1
      %p178 = scmp.ne.s32.totalorder %s173, %s175
      %p179 = scmp.eq.s32.totalorder %s27, 0
      %p180 = por %p178, %p179
      %p181 = scmp.ne.s32.totalorder %s173, %s175
      %p182 = scmp.eq.s32.totalorder %s32, 1
      %p183 = por %p181, %p182
      %p184 = scmp.ne.s32.totalorder %s175, %s176
      %p185 = scmp.eq.s32.totalorder %s32, 0
      %p186 = por %p184, %p185
      %p187 = scmp.ne.s32.totalorder %s175, %s176
      %p188 = scmp.eq.s32.totalorder %s33, 1
      %p189 = por %p187, %p188
      %p191 = scmp.ne.s32.totalorder %s176, %s190
      %p192 = scmp.eq.s32.totalorder %s33, 0
      %p193 = por %p191, %p192
      %s195 = sadd.s32 %s194, 1
      %p198 = scmp.eq.s32.totalorder %s27, 1
      %p199 = scmp.ne.s32.totalorder %s194, %s196
      %p200 = scmp.eq.s32.totalorder %s27, 0
      %p201 = por %p199, %p200
      %p202 = scmp.ne.s32.totalorder %s194, %s196
      %p203 = scmp.eq.s32.totalorder %s32, 1
      %p204 = por %p202, %p203
      %p205 = scmp.ne.s32.totalorder %s196, %s197
      %p206 = scmp.eq.s32.totalorder %s32, 0
      %p207 = por %p205, %p206
      %p208 = scmp.ne.s32.totalorder %s196, %s197
      %p209 = scmp.eq.s32.totalorder %s33, 1
      %p210 = por %p208, %p209
      %p212 = scmp.ne.s32.totalorder %s197, %s211
      %p213 = scmp.eq.s32.totalorder %s33, 0
      %p214 = por %p212, %p213
      %s216 = sadd.s32 %s215, 1
      %p219 = scmp.eq.s32.totalorder %s27, 1
      %p220 = scmp.ne.s32.totalorder %s215, %s217
      %p221 = scmp.eq.s32.totalorder %s27, 0
      %p222 = por %p220, %p221
      %p223 = scmp.ne.s32.totalorder %s215, %s217
      %p224 = scmp.eq.s32.totalorder %s32, 1
      %p225 = por %p223, %p224
      %p226 = scmp.ne.s32.totalorder %s217, %s218
      %p227 = scmp.eq.s32.totalorder %s32, 0
      %p228 = por %p226, %p227
      %p229 = scmp.ne.s32.totalorder %s217, %s218
      %p230 = scmp.eq.s32.totalorder %s33, 1
      %p231 = por %p229, %p230
      %p233 = scmp.ne.s32.totalorder %s218, %s232
      %p234 = scmp.eq.s32.totalorder %s33, 0
      %p235 = por %p233, %p234
      %s237 = sadd.s32 %s236, 1
      %p240 = scmp.eq.s32.totalorder %s27, 1
      %p241 = scmp.ne.s32.totalorder %s236, %s238
      %p242 = scmp.eq.s32.totalorder %s27, 0
      %p243 = por %p241, %p242
      %p244 = scmp.ne.s32.totalorder %s236, %s238
      %p245 = scmp.eq.s32.totalorder %s32, 1
      %p246 = por %p244, %p245
      %p247 = scmp.ne.s32.totalorder %s238, %s239
      %p248 = scmp.eq.s32.totalorder %s32, 0
      %p249 = por %p247, %p248
      %p250 = scmp.ne.s32.totalorder %s238, %s239
      %p251 = scmp.eq.s32.totalorder %s33, 1
      %p252 = por %p250, %p251
      %p254 = scmp.ne.s32.totalorder %s239, %s253
      %p255 = scmp.eq.s32.totalorder %s33, 0
      %p256 = por %p254, %p255
      %s258 = sadd.s32 %s257, 1
      %p261 = scmp.eq.s32.totalorder %s27, 1
      %p262 = scmp.ne.s32.totalorder %s257, %s259
      %p263 = scmp.eq.s32.totalorder %s27, 0
      %p264 = por %p262, %p263
      %p265 = scmp.ne.s32.totalorder %s257, %s259
      %p266 = scmp.eq.s32.totalorder %s32, 1
      %p267 = por %p265, %p266
      %p268 = scmp.ne.s32.totalorder %s259, %s260
      %p269 = scmp.eq.s32.totalorder %s32, 0
      %p270 = por %p268, %p269
      %p271 = scmp.ne.s32.totalorder %s259, %s260
      %p272 = scmp.eq.s32.totalorder %s33, 1
      %p273 = por %p271, %p272
      %p275 = scmp.ne.s32.totalorder %s260, %s274
      %p276 = scmp.eq.s32.totalorder %s33, 0
      %p277 = por %p275, %p276
      %s279 = sadd.s32 %s278, 1
      %p282 = scmp.eq.s32.totalorder %s27, 1
      %p283 = scmp.ne.s32.totalorder %s278, %s280
      %p284 = scmp.eq.s32.totalorder %s27, 0
      %p285 = por %p283, %p284
      %p286 = scmp.ne.s32.totalorder %s278, %s280
      %p287 = scmp.eq.s32.totalorder %s32, 1
      %p288 = por %p286, %p287
      %p289 = scmp.ne.s32.totalorder %s280, %s281
      %p290 = scmp.eq.s32.totalorder %s32, 0
      %p291 = por %p289, %p290
      %p292 = scmp.ne.s32.totalorder %s280, %s281
      %p293 = scmp.eq.s32.totalorder %s33, 1
      %p294 = por %p292, %p293
      %p296 = scmp.ne.s32.totalorder %s281, %s295
      %p297 = scmp.eq.s32.totalorder %s33, 0
      %p298 = por %p296, %p297
      %s300 = sadd.s32 %s299, 1
      %p303 = scmp.eq.s32.totalorder %s27, 1
      %p304 = scmp.ne.s32.totalorder %s299, %s301
      %p305 = scmp.eq.s32.totalorder %s27, 0
      %p306 = por %p304, %p305
      %p307 = scmp.ne.s32.totalorder %s299, %s301
      %p308 = scmp.eq.s32.totalorder %s32, 1
      %p309 = por %p307, %p308
      %p310 = scmp.ne.s32.totalorder %s301, %s302
      %p311 = scmp.eq.s32.totalorder %s32, 0
      %p312 = por %p310, %p311
      %p313 = scmp.ne.s32.totalorder %s301, %s302
      %p314 = scmp.eq.s32.totalorder %s33, 1
      %p315 = por %p313, %p314
      %p317 = scmp.ne.s32.totalorder %s302, %s316
      %p318 = scmp.eq.s32.totalorder %s33, 0
      %p319 = por %p317, %p318
      %s320 = ssub.s32 %s34, %s46
      %s321 = ssub.s32 %s35, %s42
      %s322 = sor.u32 %s320, %s321
      %p323 = scmp.eq.s32.totalorder %s322, 0
      %s325 = sadd.s32 %s324, 1
      %s326 = scalar_select %p323, %s324, %s325
      %p329 = pneg %p323
      %p330 = scmp.eq.s32.totalorder %s27, 1
      %p331 = por %p329, %p330
      %p332 = scmp.ne.s32.totalorder %s324, %s327
      %p333 = scmp.eq.s32.totalorder %s27, 0
      %p334 = por %p332, %p333
      %p335 = scmp.ne.s32.totalorder %s324, %s327
      %p336 = scmp.eq.s32.totalorder %s32, 1
      %p337 = por %p335, %p336
      %p338 = scmp.ne.s32.totalorder %s327, %s328
      %p339 = scmp.eq.s32.totalorder %s32, 0
      %p340 = por %p338, %p339
      %p341 = scmp.ne.s32.totalorder %s327, %s328
      %p342 = scmp.eq.s32.totalorder %s33, 1
      %p343 = por %p341, %p342
      %p345 = scmp.ne.s32.totalorder %s328, %s344
      %p346 = scmp.eq.s32.totalorder %s33, 0
      %p347 = por %p345, %p346
      %p348 = scmp.le.s32.totalorder 1, %s27
      %p349 = scmp.lt.s32.totalorder %s27, 3
      %p350 = pnand %p348, %p349
      %p351 = pneg %p350
      // Predicated region
      $region9: #{tpu_custom_call.1} parent=5 // pred_check
        _
      $region10: #{tpu_custom_call.1} parent=5 // pred_check_branch
        %353 = sbr.rel (%p350) target = $region12
      $region11: #{tpu_custom_call.1} parent=5 // pred_region
        %s354 = ssub.s32 %s27, 1
        // Predicated region
        $region13: #{tpu_custom_call.1} parent=11 // pred_check
          %p355 = pneg %p60
        $region14: #{tpu_custom_call.1} parent=11 // pred_check_branch
          %357 = sbr.rel (%p355) target = $region16
        $region15: #{tpu_custom_call.1} parent=11 // pred_region
          _
        $region16: #{tpu_custom_call.1} parent=11 // pred_fallthru
          _
        // Predicated region
        $region17: #{tpu_custom_call.1} parent=11 // pred_check
          %p358 = pneg %p81
        $region18: #{tpu_custom_call.1} parent=11 // pred_check_branch
          %360 = sbr.rel (%p358) target = $region20
        $region19: #{tpu_custom_call.1} parent=11 // pred_region
          _
        $region20: #{tpu_custom_call.1} parent=11 // pred_fallthru
          _
        // Predicated region
        $region21: #{tpu_custom_call.1} parent=11 // pred_check
          %p361 = pneg %p102
        $region22: #{tpu_custom_call.1} parent=11 // pred_check_branch
          %363 = sbr.rel (%p361) target = $region24
        $region23: #{tpu_custom_call.1} parent=11 // pred_region
          _
        $region24: #{tpu_custom_call.1} parent=11 // pred_fallthru
          _
        // Predicated region
        $region25: #{tpu_custom_call.1} parent=11 // pred_check
          %p364 = pneg %p123
        $region26: #{tpu_custom_call.1} parent=11 // pred_check_branch
          %366 = sbr.rel (%p364) target = $region28
        $region27: #{tpu_custom_call.1} parent=11 // pred_region
          _
        $region28: #{tpu_custom_call.1} parent=11 // pred_fallthru
          _
        // Predicated region
        $region29: #{tpu_custom_call.1} parent=11 // pred_check
          %p367 = pneg %p144
        $region30: #{tpu_custom_call.1} parent=11 // pred_check_branch
          %369 = sbr.rel (%p367) target = $region32
        $region31: #{tpu_custom_call.1} parent=11 // pred_region
          %s371 = ssub.s32 18432, 18432
          %372 = vsyncadd [#allocation8], %s371
          %s373 = sshll.u32 [#allocation7], 4
          %s374 = int_to_ptr.vmem [resolvable:$true] %s373
          %379 = dma.hbm_to_vmem [thread:$0]  %s6, 18432, %s374, [#allocation8], 64, 64, 4
        $region32: #{tpu_custom_call.1} parent=11 // pred_fallthru
          _
        // Predicated region
        $region33: #{tpu_custom_call.1} parent=11 // pred_check
          %p380 = pneg %p165
        $region34: #{tpu_custom_call.1} parent=11 // pred_check_branch
          %382 = sbr.rel (%p380) target = $region36
        $region35: #{tpu_custom_call.1} parent=11 // pred_region
          _
        $region36: #{tpu_custom_call.1} parent=11 // pred_fallthru
          _
        // Predicated region
        $region37: #{tpu_custom_call.1} parent=11 // pred_check
          %p383 = pneg %p186
        $region38: #{tpu_custom_call.1} parent=11 // pred_check_branch
          %385 = sbr.rel (%p383) target = $region40
        $region39: #{tpu_custom_call.1} parent=11 // pred_region
          _
        $region40: #{tpu_custom_call.1} parent=11 // pred_fallthru
          _
        // Predicated region
        $region41: #{tpu_custom_call.1} parent=11 // pred_check
          %p386 = pneg %p207
        $region42: #{tpu_custom_call.1} parent=11 // pred_check_branch
          %388 = sbr.rel (%p386) target = $region44
        $region43: #{tpu_custom_call.1} parent=11 // pred_region
          _
        $region44: #{tpu_custom_call.1} parent=11 // pred_fallthru
          _
        // Predicated region
        $region45: #{tpu_custom_call.1} parent=11 // pred_check
          %p389 = pneg %p228
        $region46: #{tpu_custom_call.1} parent=11 // pred_check_branch
          %391 = sbr.rel (%p389) target = $region48
        $region47: #{tpu_custom_call.1} parent=11 // pred_region
          %s393 = ssub.s32 9216, 9216
          %394 = vsyncadd [#allocation11], %s393
          %s395 = sshll.u32 [#allocation10], 4
          %s396 = int_to_ptr.vmem [resolvable:$true] %s395
          %401 = dma.hbm_to_vmem [thread:$0]  %s10, 9216, %s396, [#allocation11], 64, 64, 4
        $region48: #{tpu_custom_call.1} parent=11 // pred_fallthru
          _
        // Predicated region
        $region49: #{tpu_custom_call.1} parent=11 // pred_check
          %p402 = pneg %p249
        $region50: #{tpu_custom_call.1} parent=11 // pred_check_branch
          %404 = sbr.rel (%p402) target = $region52
        $region51: #{tpu_custom_call.1} parent=11 // pred_region
          _
        $region52: #{tpu_custom_call.1} parent=11 // pred_fallthru
          _
        // Predicated region
        $region53: #{tpu_custom_call.1} parent=11 // pred_check
          %p405 = pneg %p270
        $region54: #{tpu_custom_call.1} parent=11 // pred_check_branch
          %407 = sbr.rel (%p405) target = $region56
        $region55: #{tpu_custom_call.1} parent=11 // pred_region
          %s409 = ssub.s32 1024, 1024
          %410 = vsyncadd [#allocation11], %s409
          %s411 = sshll.u32 [#allocation12], 4
          %s412 = int_to_ptr.vmem [resolvable:$true] %s411
          %417 = dma.hbm_to_vmem [thread:$0]  %s12, 1024, %s412, [#allocation11], 64, 64, 4
        $region56: #{tpu_custom_call.1} parent=11 // pred_fallthru
          _
        // Predicated region
        $region57: #{tpu_custom_call.1} parent=11 // pred_check
          %p418 = pneg %p291
        $region58: #{tpu_custom_call.1} parent=11 // pred_check_branch
          %420 = sbr.rel (%p418) target = $region60
        $region59: #{tpu_custom_call.1} parent=11 // pred_region
          %s422 = ssub.s32 1024, 1024
          %423 = vsyncadd [#allocation14], %s422
          %s424 = sshll.u32 [#allocation13], 4
          %s425 = int_to_ptr.vmem [resolvable:$true] %s424
          %430 = dma.hbm_to_vmem [thread:$0]  %s13, 1024, %s425, [#allocation14], 64, 64, 4
        $region60: #{tpu_custom_call.1} parent=11 // pred_fallthru
          _
        // Predicated region
        $region61: #{tpu_custom_call.1} parent=11 // pred_check
          %p431 = pneg %p312
        $region62: #{tpu_custom_call.1} parent=11 // pred_check_branch
          %433 = sbr.rel (%p431) target = $region64
        $region63: #{tpu_custom_call.1} parent=11 // pred_region
          _
        $region64: #{tpu_custom_call.1} parent=11 // pred_fallthru
          _
      $region12: #{tpu_custom_call.1} parent=5 // pred_fallthru
        _
      %p434 = scmp.lt.s32.totalorder %s27, 2
      // Predicated region
      $region65: #{tpu_custom_call.1} parent=5 // pred_check
        %p435 = pneg %p434
      $region66: #{tpu_custom_call.1} parent=5 // pred_check_branch
        %437 = sbr.rel (%p435) target = $region68
      $region67: #{tpu_custom_call.1} parent=5 // pred_region
        _
      $region68: #{tpu_custom_call.1} parent=5 // pred_fallthru
        _
      %p438 = scmp.le.s32.totalorder 1, %s27
      %p439 = scmp.lt.s32.totalorder %s27, 3
      %p440 = pnand %p438, %p439
      %p441 = pneg %p440
      // Predicated region
      $region69: #{tpu_custom_call.1} parent=5 // pred_check
        _
      $region70: #{tpu_custom_call.1} parent=5 // pred_check_branch
        %443 = sbr.rel (%p440) target = $region72
      $region71: #{tpu_custom_call.1} parent=5 // pred_region
        %s444 = ssub.s32 %s27, 1
        // Predicated region
        $region73: #{tpu_custom_call.1} parent=71 // pred_check
          %p445 = pneg %p144
        $region74: #{tpu_custom_call.1} parent=71 // pred_check_branch
          %447 = sbr.rel (%p445) target = $region76
        $region75: #{tpu_custom_call.1} parent=71 // pred_region
          %448 = dma.done [#allocation8], 18432
        $region76: #{tpu_custom_call.1} parent=71 // pred_fallthru
          _
        // Predicated region
        $region77: #{tpu_custom_call.1} parent=71 // pred_check
          %p449 = pneg %p228
        $region78: #{tpu_custom_call.1} parent=71 // pred_check_branch
          %451 = sbr.rel (%p449) target = $region80
        $region79: #{tpu_custom_call.1} parent=71 // pred_region
          %452 = dma.done [#allocation11], 9216
        $region80: #{tpu_custom_call.1} parent=71 // pred_fallthru
          _
        // Predicated region
        $region81: #{tpu_custom_call.1} parent=71 // pred_check
          %p453 = pneg %p270
        $region82: #{tpu_custom_call.1} parent=71 // pred_check_branch
          %455 = sbr.rel (%p453) target = $region84
        $region83: #{tpu_custom_call.1} parent=71 // pred_region
          %456 = dma.done [#allocation11], 1024
        $region84: #{tpu_custom_call.1} parent=71 // pred_fallthru
          _
        // Predicated region
        $region85: #{tpu_custom_call.1} parent=71 // pred_check
          %p457 = pneg %p291
        $region86: #{tpu_custom_call.1} parent=71 // pred_check_branch
          %459 = sbr.rel (%p457) target = $region88
        $region87: #{tpu_custom_call.1} parent=71 // pred_region
          %460 = dma.done [#allocation14], 1024
        $region88: #{tpu_custom_call.1} parent=71 // pred_fallthru
          _
        %p461 = pneg %p60
        %p462 = pneg %p57
        %p463 = pneg %p81
        %p464 = pneg %p78
        %p465 = pneg %p102
        %p466 = pneg %p99
        %p467 = pneg %p123
        %p468 = pneg %p120
        %p469 = pneg %p144
        %p470 = pneg %p141
        %p471 = pneg %p165
        %p472 = pneg %p162
        %p473 = pneg %p186
        %p474 = pneg %p183
        %p475 = pneg %p207
        %p476 = pneg %p204
        %p477 = pneg %p228
        %p478 = pneg %p225
        %p479 = pneg %p249
        %p480 = pneg %p246
        %p481 = pneg %p270
        %p482 = pneg %p267
        %p483 = pneg %p291
        %p484 = pneg %p288
        %p485 = pneg %p312
        %p486 = pneg %p309
        %p487 = pneg %p340
        %p488 = pneg %p337
        %s489 = sand.u32 %s327, 1
        %s490 = scalar_lea.sflag [#allocation9], %s489
        %s491 = sand.u32 %s327, 1
        %s492 = smul.addr %s491, 64
        %s493 = scalar_lea.vmem [#allocation15], %s492
        %s494 = smul.u32 8, %s37
        %s496 = smul.u32 %s37, 8
        %s497 = smul.u32 %s496, 8
        %s498 = smul.u32 %s36, 96
        %s499 = sadd.s32 %s497, %s498
        %s500 = smul.addr %s499, 16
        %s501 = scalar_lea.hbm %s0, %s500
        // Predicated region
        $region89: #{tpu_custom_call.1} parent=71 // pred_check
          _
        $region90: #{tpu_custom_call.1} parent=71 // pred_check_branch
          %503 = sbr.rel target = $region92
        $region91: #{tpu_custom_call.1} parent=71 // pred_region
          %504 = sst [smem:[#allocation18]] [#allocation17]
          %505 = sst [smem:[#allocation19]] [#allocation16]
        $region92: #{tpu_custom_call.1} parent=71 // pred_fallthru
          _
        %507 = shalt.err (0)
        %s509 = sshll.u32 [#allocation2], 4
        %s510 = int_to_ptr.vmem [resolvable:$true] %s509
        %512 = dma.hbm_to_vmem [thread:$0]  %s501, 1536, %s510, [#allocation6]
        %s513 = smul.addr %s499, 16
        %s514 = scalar_lea.hbm %s1, %s513
        %s515 = scalar_lea.sflag [#allocation6], 1
        // Predicated region
        $region93: #{tpu_custom_call.1} parent=71 // pred_check
          _
        $region94: #{tpu_custom_call.1} parent=71 // pred_check_branch
          %517 = sbr.rel target = $region96
        $region95: #{tpu_custom_call.1} parent=71 // pred_region
          %518 = sst [smem:[#allocation18]] [#allocation21]
          %519 = sst [smem:[#allocation19]] [#allocation20]
        $region96: #{tpu_custom_call.1} parent=71 // pred_fallthru
          _
        %521 = shalt.err (0)
        %s523 = sshll.u32 [#allocation3], 4
        %s524 = int_to_ptr.vmem [resolvable:$true] %s523
        %526 = dma.hbm_to_vmem [thread:$0]  %s514, 1536, %s524, %s515
        %s527 = smul.u32 12, 8
        %s528 = smul.u32 %s527, 1
        %s529 = sshll.u32 %s528, 4
        %530 = dma.done [#allocation6], %s529
        %s531 = sshll.u32 %s528, 4
        %532 = dma.done %s515, %s531
        %v533 = vld [vmem:[#allocation2] sm:$0xff]
        %v534 = vld [vmem:[#allocation2 + $0x8] sm:$0xff]
        %v535 = vld [vmem:[#allocation2 + $0x10] sm:$0xff]
        %v536 = vld [vmem:[#allocation2 + $0x18] sm:$0xff]
        %v537 = vld [vmem:[#allocation2 + $0x20] sm:$0xff]
        %v538 = vld [vmem:[#allocation2 + $0x28] sm:$0xff]
        %v539 = vld [vmem:[#allocation2 + $0x30] sm:$0xff]
        %v540 = vld [vmem:[#allocation2 + $0x38] sm:$0xff]
        %v541 = vld [vmem:[#allocation2 + $0x40] sm:$0xff]
        %v542 = vld [vmem:[#allocation2 + $0x48] sm:$0xff]
        %v543 = vld [vmem:[#allocation2 + $0x50] sm:$0xff]
        %v544 = vld [vmem:[#allocation2 + $0x58] sm:$0xff]
        %v545 = vld [vmem:[#allocation3] sm:$0xff]
        %v546 = vld [vmem:[#allocation3 + $0x8] sm:$0xff]
        %v547 = vld [vmem:[#allocation3 + $0x10] sm:$0xff]
        %v548 = vld [vmem:[#allocation3 + $0x18] sm:$0xff]
        %v549 = vld [vmem:[#allocation3 + $0x20] sm:$0xff]
        %v550 = vld [vmem:[#allocation3 + $0x28] sm:$0xff]
        %v551 = vld [vmem:[#allocation3 + $0x30] sm:$0xff]
        %v552 = vld [vmem:[#allocation3 + $0x38] sm:$0xff]
        %v553 = vld [vmem:[#allocation3 + $0x40] sm:$0xff]
        %v554 = vld [vmem:[#allocation3 + $0x48] sm:$0xff]
        %v555 = vld [vmem:[#allocation3 + $0x50] sm:$0xff]
        %v556 = vld [vmem:[#allocation3 + $0x58] sm:$0xff]
        %v557 = vld [vmem:[%s2] sm:$0x1]
        %v559 = vlaneseq
        %v560 = vshrl.u32 %v559, 7
        %v561 = vsub.s32 0, %v560
        %v562 = vrot.slane %v557, %v561
        %v564 = vmul.f32 %v533, %v562
        %v565 = vmul.f32 %v534, %v562
        %v566 = vmul.f32 %v535, %v562
        %v567 = vmul.f32 %v536, %v562
        %v568 = vmul.f32 %v537, %v562
        %v569 = vmul.f32 %v538, %v562
        %v570 = vmul.f32 %v539, %v562
        %v571 = vmul.f32 %v540, %v562
        %v572 = vmul.f32 %v541, %v562
        %v573 = vmul.f32 %v542, %v562
        %v574 = vmul.f32 %v543, %v562
        %v575 = vmul.f32 %v544, %v562
        %v576 = vld [vmem:[%s3] sm:$0x1]
        %v578 = vlaneseq
        %v579 = vshrl.u32 %v578, 7
        %v580 = vsub.s32 0, %v579
        %v581 = vrot.slane %v576, %v580
        %v583 = vadd.f32 %v564, %v581
        %v584 = vadd.f32 %v565, %v581
        %v585 = vadd.f32 %v566, %v581
        %v586 = vadd.f32 %v567, %v581
        %v587 = vadd.f32 %v568, %v581
        %v588 = vadd.f32 %v569, %v581
        %v589 = vadd.f32 %v570, %v581
        %v590 = vadd.f32 %v571, %v581
        %v591 = vadd.f32 %v572, %v581
        %v592 = vadd.f32 %v573, %v581
        %v593 = vadd.f32 %v574, %v581
        %v594 = vadd.f32 %v575, %v581
        %v595 = vxor.u32 %v583, 2147483648
        %v596 = vxor.u32 %v584, 2147483648
        %v597 = vxor.u32 %v585, 2147483648
        %v598 = vxor.u32 %v586, 2147483648
        %v599 = vxor.u32 %v587, 2147483648
        %v600 = vxor.u32 %v588, 2147483648
        %v601 = vxor.u32 %v589, 2147483648
        %v602 = vxor.u32 %v590, 2147483648
        %v603 = vxor.u32 %v591, 2147483648
        %v604 = vxor.u32 %v592, 2147483648
        %v605 = vxor.u32 %v593, 2147483648
        %v606 = vxor.u32 %v594, 2147483648
        %v607 = vmul.f32 %v595, 1.442695
        %v608 = vpow.pop %v607
        %v609 = vmul.f32 %v596, 1.442695
        %v610 = vpow.pop %v609
        %v611 = vmul.f32 %v597, 1.442695
        %v612 = vpow.pop %v611
        %v613 = vmul.f32 %v598, 1.442695
        %v614 = vpow.pop %v613
        %v615 = vmul.f32 %v599, 1.442695
        %v616 = vpow.pop %v615
        %v617 = vmul.f32 %v600, 1.442695
        %v618 = vpow.pop %v617
        %v619 = vmul.f32 %v601, 1.442695
        %v620 = vpow.pop %v619
        %v621 = vmul.f32 %v602, 1.442695
        %v622 = vpow.pop %v621
        %v623 = vmul.f32 %v603, 1.442695
        %v624 = vpow.pop %v623
        %v625 = vmul.f32 %v604, 1.442695
        %v626 = vpow.pop %v625
        %v627 = vmul.f32 %v605, 1.442695
        %v628 = vpow.pop %v627
        %v629 = vmul.f32 %v606, 1.442695
        %v630 = vpow.pop %v629
        %v631 = vadd.f32 %v608, 1.0
        %v632 = vadd.f32 %v610, 1.0
        %v633 = vadd.f32 %v612, 1.0
        %v634 = vadd.f32 %v614, 1.0
        %v635 = vadd.f32 %v616, 1.0
        %v636 = vadd.f32 %v618, 1.0
        %v637 = vadd.f32 %v620, 1.0
        %v638 = vadd.f32 %v622, 1.0
        %v639 = vadd.f32 %v624, 1.0
        %v640 = vadd.f32 %v626, 1.0
        %v641 = vadd.f32 %v628, 1.0
        %v642 = vadd.f32 %v630, 1.0
        %v643 = vrcp.pop %v631
        %v644 = vmul.f32 1.0, %v643
        %v645 = vrcp.pop %v632
        %v646 = vmul.f32 1.0, %v645
        %v647 = vrcp.pop %v633
        %v648 = vmul.f32 1.0, %v647
        %v649 = vrcp.pop %v634
        %v650 = vmul.f32 1.0, %v649
        %v651 = vrcp.pop %v635
        %v652 = vmul.f32 1.0, %v651
        %v653 = vrcp.pop %v636
        %v654 = vmul.f32 1.0, %v653
        %v655 = vrcp.pop %v637
        %v656 = vmul.f32 1.0, %v655
        %v657 = vrcp.pop %v638
        %v658 = vmul.f32 1.0, %v657
        %v659 = vrcp.pop %v639
        %v660 = vmul.f32 1.0, %v659
        %v661 = vrcp.pop %v640
        %v662 = vmul.f32 1.0, %v661
        %v663 = vrcp.pop %v641
        %v664 = vmul.f32 1.0, %v663
        %v665 = vrcp.pop %v642
        %v666 = vmul.f32 1.0, %v665
        %v667 = vmul.f32 %v583, %v644
        %v668 = vmul.f32 %v584, %v646
        %v669 = vmul.f32 %v585, %v648
        %v670 = vmul.f32 %v586, %v650
        %v671 = vmul.f32 %v587, %v652
        %v672 = vmul.f32 %v588, %v654
        %v673 = vmul.f32 %v589, %v656
        %v674 = vmul.f32 %v590, %v658
        %v675 = vmul.f32 %v591, %v660
        %v676 = vmul.f32 %v592, %v662
        %v677 = vmul.f32 %v593, %v664
        %v678 = vmul.f32 %v594, %v666
        %v679 = vld [vmem:[%s4] sm:$0x1]
        %v681 = vlaneseq
        %v682 = vshrl.u32 %v681, 7
        %v683 = vsub.s32 0, %v682
        %v684 = vrot.slane %v679, %v683
        %v686 = vmul.f32 %v545, %v684
        %v687 = vmul.f32 %v546, %v684
        %v688 = vmul.f32 %v547, %v684
        %v689 = vmul.f32 %v548, %v684
        %v690 = vmul.f32 %v549, %v684
        %v691 = vmul.f32 %v550, %v684
        %v692 = vmul.f32 %v551, %v684
        %v693 = vmul.f32 %v552, %v684
        %v694 = vmul.f32 %v553, %v684
        %v695 = vmul.f32 %v554, %v684
        %v696 = vmul.f32 %v555, %v684
        %v697 = vmul.f32 %v556, %v684
        %v698 = vld [vmem:[%s5] sm:$0x1]
        %v700 = vlaneseq
        %v701 = vshrl.u32 %v700, 7
        %v702 = vsub.s32 0, %v701
        %v703 = vrot.slane %v698, %v702
        %v705 = vadd.f32 %v686, %v703
        %v706 = vadd.f32 %v687, %v703
        %v707 = vadd.f32 %v688, %v703
        %v708 = vadd.f32 %v689, %v703
        %v709 = vadd.f32 %v690, %v703
        %v710 = vadd.f32 %v691, %v703
        %v711 = vadd.f32 %v692, %v703
        %v712 = vadd.f32 %v693, %v703
        %v713 = vadd.f32 %v694, %v703
        %v714 = vadd.f32 %v695, %v703
        %v715 = vadd.f32 %v696, %v703
        %v716 = vadd.f32 %v697, %v703
        %v717 = vxor.u32 %v705, 2147483648
        %v718 = vxor.u32 %v706, 2147483648
        %v719 = vxor.u32 %v707, 2147483648
        %v720 = vxor.u32 %v708, 2147483648
        %v721 = vxor.u32 %v709, 2147483648
        %v722 = vxor.u32 %v710, 2147483648
        %v723 = vxor.u32 %v711, 2147483648
        %v724 = vxor.u32 %v712, 2147483648
        %v725 = vxor.u32 %v713, 2147483648
        %v726 = vxor.u32 %v714, 2147483648
        %v727 = vxor.u32 %v715, 2147483648
        %v728 = vxor.u32 %v716, 2147483648
        %v729 = vmul.f32 %v717, 1.442695
        %v730 = vpow.pop %v729
        %v731 = vmul.f32 %v718, 1.442695
        %v732 = vpow.pop %v731
        %v733 = vmul.f32 %v719, 1.442695
        %v734 = vpow.pop %v733
        %v735 = vmul.f32 %v720, 1.442695
        %v736 = vpow.pop %v735
        %v737 = vmul.f32 %v721, 1.442695
        %v738 = vpow.pop %v737
        %v739 = vmul.f32 %v722, 1.442695
        %v740 = vpow.pop %v739
        %v741 = vmul.f32 %v723, 1.442695
        %v742 = vpow.pop %v741
        %v743 = vmul.f32 %v724, 1.442695
        %v744 = vpow.pop %v743
        %v745 = vmul.f32 %v725, 1.442695
        %v746 = vpow.pop %v745
        %v747 = vmul.f32 %v726, 1.442695
        %v748 = vpow.pop %v747
        %v749 = vmul.f32 %v727, 1.442695
        %v750 = vpow.pop %v749
        %v751 = vmul.f32 %v728, 1.442695
        %v752 = vpow.pop %v751
        %v753 = vadd.f32 %v730, 1.0
        %v754 = vadd.f32 %v732, 1.0
        %v755 = vadd.f32 %v734, 1.0
        %v756 = vadd.f32 %v736, 1.0
        %v757 = vadd.f32 %v738, 1.0
        %v758 = vadd.f32 %v740, 1.0
        %v759 = vadd.f32 %v742, 1.0
        %v760 = vadd.f32 %v744, 1.0
        %v761 = vadd.f32 %v746, 1.0
        %v762 = vadd.f32 %v748, 1.0
        %v763 = vadd.f32 %v750, 1.0
        %v764 = vadd.f32 %v752, 1.0
        %v765 = vrcp.pop %v753
        %v766 = vmul.f32 1.0, %v765
        %v767 = vrcp.pop %v754
        %v768 = vmul.f32 1.0, %v767
        %v769 = vrcp.pop %v755
        %v770 = vmul.f32 1.0, %v769
        %v771 = vrcp.pop %v756
        %v772 = vmul.f32 1.0, %v771
        %v773 = vrcp.pop %v757
        %v774 = vmul.f32 1.0, %v773
        %v775 = vrcp.pop %v758
        %v776 = vmul.f32 1.0, %v775
        %v777 = vrcp.pop %v759
        %v778 = vmul.f32 1.0, %v777
        %v779 = vrcp.pop %v760
        %v780 = vmul.f32 1.0, %v779
        %v781 = vrcp.pop %v761
        %v782 = vmul.f32 1.0, %v781
        %v783 = vrcp.pop %v762
        %v784 = vmul.f32 1.0, %v783
        %v785 = vrcp.pop %v763
        %v786 = vmul.f32 1.0, %v785
        %v787 = vrcp.pop %v764
        %v788 = vmul.f32 1.0, %v787
        %v789 = vmul.f32 %v705, %v766
        %v790 = vmul.f32 %v706, %v768
        %v791 = vmul.f32 %v707, %v770
        %v792 = vmul.f32 %v708, %v772
        %v793 = vmul.f32 %v709, %v774
        %v794 = vmul.f32 %v710, %v776
        %v795 = vmul.f32 %v711, %v778
        %v796 = vmul.f32 %v712, %v780
        %v797 = vmul.f32 %v713, %v782
        %v798 = vmul.f32 %v714, %v784
        %v799 = vmul.f32 %v715, %v786
        %v800 = vmul.f32 %v716, %v788
        %v813 = vrot.slane %v667, 7
        %v814 = vrot.slane %v668, 7
        %v815 = vrot.slane %v669, 7
        %v816 = vrot.slane %v670, 7
        %v817 = vrot.slane %v671, 7
        %v818 = vrot.slane %v672, 7
        %v819 = vrot.slane %v673, 7
        %v820 = vrot.slane %v674, 7
        %v821 = vrot.slane %v675, 7
        %v822 = vrot.slane %v676, 7
        %v823 = vrot.slane %v677, 7
        %v824 = vrot.slane %v678, 7
        %vm837 = vcmask 1040384
        %v838 = vsel %vm837, 0.0, %v813
        %v839 = vsel %vm837, 0.0, %v814
        %v840 = vsel %vm837, 0.0, %v815
        %v841 = vsel %vm837, 0.0, %v816
        %v842 = vsel %vm837, 0.0, %v817
        %v843 = vsel %vm837, 0.0, %v818
        %v844 = vsel %vm837, 0.0, %v819
        %v845 = vsel %vm837, 0.0, %v820
        %v846 = vsel %vm837, 0.0, %v821
        %v847 = vsel %vm837, 0.0, %v822
        %v848 = vsel %vm837, 0.0, %v823
        %v849 = vsel %vm837, 0.0, %v824
        %v850 = vsel %vm837, %v813, 0.0
        %v851 = vsel %vm837, %v814, 0.0
        %v852 = vsel %vm837, %v815, 0.0
        %v853 = vsel %vm837, %v816, 0.0
        %v854 = vsel %vm837, %v817, 0.0
        %v855 = vsel %vm837, %v818, 0.0
        %v856 = vsel %vm837, %v819, 0.0
        %v857 = vsel %vm837, %v820, 0.0
        %v858 = vsel %vm837, %v821, 0.0
        %v859 = vsel %vm837, %v822, 0.0
        %v860 = vsel %vm837, %v823, 0.0
        %v861 = vsel %vm837, %v824, 0.0
        %v862 = vpack.c.bf16 %v850, %v838
        %v863 = vpack.c.bf16 %v851, %v839
        %v864 = vpack.c.bf16 %v852, %v840
        %v865 = vpack.c.bf16 %v853, %v841
        %v866 = vpack.c.bf16 %v854, %v842
        %v867 = vpack.c.bf16 %v855, %v843
        %v868 = vpack.c.bf16 %v856, %v844
        %v869 = vpack.c.bf16 %v857, %v845
        %v870 = vpack.c.bf16 %v858, %v846
        %v871 = vpack.c.bf16 %v859, %v847
        %v872 = vpack.c.bf16 %v860, %v848
        %v873 = vpack.c.bf16 %v861, %v849
        %v886 = vunpack.c.l.b16 %v862
        %v887 = vunpack.c.h.b16 %v862
        %v888 = vunpack.c.l.b16 %v863
        %v889 = vunpack.c.h.b16 %v863
        %v890 = vunpack.c.l.b16 %v864
        %v891 = vunpack.c.h.b16 %v864
        %v892 = vunpack.c.l.b16 %v865
        %v893 = vunpack.c.h.b16 %v865
        %v894 = vunpack.c.l.b16 %v866
        %v895 = vunpack.c.h.b16 %v866
        %v896 = vunpack.c.l.b16 %v867
        %v897 = vunpack.c.h.b16 %v867
        %v898 = vunpack.c.l.b16 %v868
        %v899 = vunpack.c.h.b16 %v868
        %v900 = vunpack.c.l.b16 %v869
        %v901 = vunpack.c.h.b16 %v869
        %v902 = vunpack.c.l.b16 %v870
        %v903 = vunpack.c.h.b16 %v870
        %v904 = vunpack.c.l.b16 %v871
        %v905 = vunpack.c.h.b16 %v871
        %v906 = vunpack.c.l.b16 %v872
        %v907 = vunpack.c.h.b16 %v872
        %v908 = vunpack.c.l.b16 %v873
        %v909 = vunpack.c.h.b16 %v873
        %v910 = vpack.c.b16 %v886, %v886
        %v911 = vpack.c.b16 %v887, %v887
        %v912 = vpack.c.b16 %v888, %v888
        %v913 = vpack.c.b16 %v889, %v889
        %v914 = vpack.c.b16 %v890, %v890
        %v915 = vpack.c.b16 %v891, %v891
        %v916 = vpack.c.b16 %v892, %v892
        %v917 = vpack.c.b16 %v893, %v893
        %v918 = vpack.c.b16 %v894, %v894
        %v919 = vpack.c.b16 %v895, %v895
        %v920 = vpack.c.b16 %v896, %v896
        %v921 = vpack.c.b16 %v897, %v897
        %v922 = vpack.c.b16 %v898, %v898
        %v923 = vpack.c.b16 %v899, %v899
        %v924 = vpack.c.b16 %v900, %v900
        %v925 = vpack.c.b16 %v901, %v901
        %v926 = vpack.c.b16 %v902, %v902
        %v927 = vpack.c.b16 %v903, %v903
        %v928 = vpack.c.b16 %v904, %v904
        %v929 = vpack.c.b16 %v905, %v905
        %v930 = vpack.c.b16 %v906, %v906
        %v931 = vpack.c.b16 %v907, %v907
        %v932 = vpack.c.b16 %v908, %v908
        %v933 = vpack.c.b16 %v909, %v909
        %958 = vst [vmem:[#allocation4] sm:$0xf] %v910
        %959 = vst [vmem:[#allocation4 + $0x8] sm:$0x1] %v911
        %960 = vst [vmem:[#allocation4 + $0x10] sm:$0xf] %v912
        %961 = vst [vmem:[#allocation4 + $0x18] sm:$0x1] %v913
        %962 = vst [vmem:[#allocation4 + $0x20] sm:$0xf] %v914
        %963 = vst [vmem:[#allocation4 + $0x28] sm:$0x1] %v915
        %964 = vst [vmem:[#allocation4 + $0x30] sm:$0xf] %v916
        %965 = vst [vmem:[#allocation4 + $0x38] sm:$0x1] %v917
        %966 = vst [vmem:[#allocation4 + $0x40] sm:$0xf] %v918
        %967 = vst [vmem:[#allocation4 + $0x48] sm:$0x1] %v919
        %968 = vst [vmem:[#allocation4 + $0x50] sm:$0xf] %v920
        %969 = vst [vmem:[#allocation4 + $0x58] sm:$0x1] %v921
        %970 = vst [vmem:[#allocation4 + $0x60] sm:$0xf] %v922
        %971 = vst [vmem:[#allocation4 + $0x68] sm:$0x1] %v923
        %972 = vst [vmem:[#allocation4 + $0x70] sm:$0xf] %v924
        %973 = vst [vmem:[#allocation4 + $0x78] sm:$0x1] %v925
        %974 = vst [vmem:[#allocation4 + $0x80] sm:$0xf] %v926
        %975 = vst [vmem:[#allocation4 + $0x88] sm:$0x1] %v927
        %976 = vst [vmem:[#allocation4 + $0x90] sm:$0xf] %v928
        %977 = vst [vmem:[#allocation4 + $0x98] sm:$0x1] %v929
        %978 = vst [vmem:[#allocation4 + $0xa0] sm:$0xf] %v930
        %979 = vst [vmem:[#allocation4 + $0xa8] sm:$0x1] %v931
        %980 = vst [vmem:[#allocation4 + $0xb0] sm:$0xf] %v932
        %981 = vst [vmem:[#allocation4 + $0xb8] sm:$0x1] %v933
        %v994 = vrot.slane %v789, 7
        %v995 = vrot.slane %v790, 7
        %v996 = vrot.slane %v791, 7
        %v997 = vrot.slane %v792, 7
        %v998 = vrot.slane %v793, 7
        %v999 = vrot.slane %v794, 7
        %v1000 = vrot.slane %v795, 7
        %v1001 = vrot.slane %v796, 7
        %v1002 = vrot.slane %v797, 7
        %v1003 = vrot.slane %v798, 7
        %v1004 = vrot.slane %v799, 7
        %v1005 = vrot.slane %v800, 7
        %v1018 = vsel %vm837, 0.0, %v994
        %v1019 = vsel %vm837, 0.0, %v995
        %v1020 = vsel %vm837, 0.0, %v996
        %v1021 = vsel %vm837, 0.0, %v997
        %v1022 = vsel %vm837, 0.0, %v998
        %v1023 = vsel %vm837, 0.0, %v999
        %v1024 = vsel %vm837, 0.0, %v1000
        %v1025 = vsel %vm837, 0.0, %v1001
        %v1026 = vsel %vm837, 0.0, %v1002
        %v1027 = vsel %vm837, 0.0, %v1003
        %v1028 = vsel %vm837, 0.0, %v1004
        %v1029 = vsel %vm837, 0.0, %v1005
        %v1030 = vsel %vm837, %v994, 0.0
        %v1031 = vsel %vm837, %v995, 0.0
        %v1032 = vsel %vm837, %v996, 0.0
        %v1033 = vsel %vm837, %v997, 0.0
        %v1034 = vsel %vm837, %v998, 0.0
        %v1035 = vsel %vm837, %v999, 0.0
        %v1036 = vsel %vm837, %v1000, 0.0
        %v1037 = vsel %vm837, %v1001, 0.0
        %v1038 = vsel %vm837, %v1002, 0.0
        %v1039 = vsel %vm837, %v1003, 0.0
        %v1040 = vsel %vm837, %v1004, 0.0
        %v1041 = vsel %vm837, %v1005, 0.0
        %v1042 = vpack.c.bf16 %v1030, %v1018
        %v1043 = vpack.c.bf16 %v1031, %v1019
        %v1044 = vpack.c.bf16 %v1032, %v1020
        %v1045 = vpack.c.bf16 %v1033, %v1021
        %v1046 = vpack.c.bf16 %v1034, %v1022
        %v1047 = vpack.c.bf16 %v1035, %v1023
        %v1048 = vpack.c.bf16 %v1036, %v1024
        %v1049 = vpack.c.bf16 %v1037, %v1025
        %v1050 = vpack.c.bf16 %v1038, %v1026
        %v1051 = vpack.c.bf16 %v1039, %v1027
        %v1052 = vpack.c.bf16 %v1040, %v1028
        %v1053 = vpack.c.bf16 %v1041, %v1029
        %v1066 = vunpack.c.l.b16 %v1042
        %v1067 = vunpack.c.h.b16 %v1042
        %v1068 = vunpack.c.l.b16 %v1043
        %v1069 = vunpack.c.h.b16 %v1043
        %v1070 = vunpack.c.l.b16 %v1044
        %v1071 = vunpack.c.h.b16 %v1044
        %v1072 = vunpack.c.l.b16 %v1045
        %v1073 = vunpack.c.h.b16 %v1045
        %v1074 = vunpack.c.l.b16 %v1046
        %v1075 = vunpack.c.h.b16 %v1046
        %v1076 = vunpack.c.l.b16 %v1047
        %v1077 = vunpack.c.h.b16 %v1047
        %v1078 = vunpack.c.l.b16 %v1048
        %v1079 = vunpack.c.h.b16 %v1048
        %v1080 = vunpack.c.l.b16 %v1049
        %v1081 = vunpack.c.h.b16 %v1049
        %v1082 = vunpack.c.l.b16 %v1050
        %v1083 = vunpack.c.h.b16 %v1050
        %v1084 = vunpack.c.l.b16 %v1051
        %v1085 = vunpack.c.h.b16 %v1051
        %v1086 = vunpack.c.l.b16 %v1052
        %v1087 = vunpack.c.h.b16 %v1052
        %v1088 = vunpack.c.l.b16 %v1053
        %v1089 = vunpack.c.h.b16 %v1053
        %v1090 = vpack.c.b16 %v1066, %v1066
        %v1091 = vpack.c.b16 %v1067, %v1067
        %v1092 = vpack.c.b16 %v1068, %v1068
        %v1093 = vpack.c.b16 %v1069, %v1069
        %v1094 = vpack.c.b16 %v1070, %v1070
        %v1095 = vpack.c.b16 %v1071, %v1071
        %v1096 = vpack.c.b16 %v1072, %v1072
        %v1097 = vpack.c.b16 %v1073, %v1073
        %v1098 = vpack.c.b16 %v1074, %v1074
        %v1099 = vpack.c.b16 %v1075, %v1075
        %v1100 = vpack.c.b16 %v1076, %v1076
        %v1101 = vpack.c.b16 %v1077, %v1077
        %v1102 = vpack.c.b16 %v1078, %v1078
        %v1103 = vpack.c.b16 %v1079, %v1079
        %v1104 = vpack.c.b16 %v1080, %v1080
        %v1105 = vpack.c.b16 %v1081, %v1081
        %v1106 = vpack.c.b16 %v1082, %v1082
        %v1107 = vpack.c.b16 %v1083, %v1083
        %v1108 = vpack.c.b16 %v1084, %v1084
        %v1109 = vpack.c.b16 %v1085, %v1085
        %v1110 = vpack.c.b16 %v1086, %v1086
        %v1111 = vpack.c.b16 %v1087, %v1087
        %v1112 = vpack.c.b16 %v1088, %v1088
        %v1113 = vpack.c.b16 %v1089, %v1089
        %1138 = vst [vmem:[#allocation4 + $0x4] sm:$0xf] %v1090
        %1139 = vst [vmem:[#allocation4 + $0xc] sm:$0x1] %v1091
        %1140 = vst [vmem:[#allocation4 + $0x14] sm:$0xf] %v1092
        %1141 = vst [vmem:[#allocation4 + $0x1c] sm:$0x1] %v1093
        %1142 = vst [vmem:[#allocation4 + $0x24] sm:$0xf] %v1094
        %1143 = vst [vmem:[#allocation4 + $0x2c] sm:$0x1] %v1095
        %1144 = vst [vmem:[#allocation4 + $0x34] sm:$0xf] %v1096
        %1145 = vst [vmem:[#allocation4 + $0x3c] sm:$0x1] %v1097
        %1146 = vst [vmem:[#allocation4 + $0x44] sm:$0xf] %v1098
        %1147 = vst [vmem:[#allocation4 + $0x4c] sm:$0x1] %v1099
        %1148 = vst [vmem:[#allocation4 + $0x54] sm:$0xf] %v1100
        %1149 = vst [vmem:[#allocation4 + $0x5c] sm:$0x1] %v1101
        %1150 = vst [vmem:[#allocation4 + $0x64] sm:$0xf] %v1102
        %1151 = vst [vmem:[#allocation4 + $0x6c] sm:$0x1] %v1103
        %1152 = vst [vmem:[#allocation4 + $0x74] sm:$0xf] %v1104
        %1153 = vst [vmem:[#allocation4 + $0x7c] sm:$0x1] %v1105
        %1154 = vst [vmem:[#allocation4 + $0x84] sm:$0xf] %v1106
        %1155 = vst [vmem:[#allocation4 + $0x8c] sm:$0x1] %v1107
        %1156 = vst [vmem:[#allocation4 + $0x94] sm:$0xf] %v1108
        %1157 = vst [vmem:[#allocation4 + $0x9c] sm:$0x1] %v1109
        %1158 = vst [vmem:[#allocation4 + $0xa4] sm:$0xf] %v1110
        %1159 = vst [vmem:[#allocation4 + $0xac] sm:$0x1] %v1111
        %1160 = vst [vmem:[#allocation4 + $0xb4] sm:$0xf] %v1112
        %1161 = vst [vmem:[#allocation4 + $0xbc] sm:$0x1] %v1113
        %p1162 = scmp.eq.s32.totalorder %s37, 0
        // Predicated region
        $region97: #{tpu_custom_call.1} parent=71 // pred_check
          %p1163 = pneg %p1162
        $region98: #{tpu_custom_call.1} parent=71 // pred_check_branch
          %1165 = sbr.rel (%p1163) target = $region100
        $region99: #{tpu_custom_call.1} parent=71 // pred_region
          %1166 = vst [vmem:[#allocation4] sm:$0xff] 0
          %1167 = vst [vmem:[#allocation4 + $0x8] sm:$0x11] 0
          %1168 = vst [vmem:[#allocation4 + $0x10] sm:$0xff] 0
          %1169 = vst [vmem:[#allocation4 + $0x18] sm:$0x11] 0
          %s1170 = scalar_lea.vmem [#allocation4], 160
          %1171 = vst [vmem:[%s1170] sm:$0xff] 0
          %1172 = vst [vmem:[%s1170 + $0x8] sm:$0x11] 0
          %1173 = vst [vmem:[%s1170 + $0x10] sm:$0xff] 0
          %1174 = vst [vmem:[%s1170 + $0x18] sm:$0x11] 0
        $region100: #{tpu_custom_call.1} parent=71 // pred_fallthru
          _
        %v1175 = vld [vmem:[#allocation4] sm:$0xff]
        %v1176 = vld [vmem:[#allocation4 + $0x10] sm:$0xff]
        %v1177 = vld [vmem:[#allocation4 + $0x20] sm:$0xff]
        %v1178 = vld [vmem:[#allocation4 + $0x30] sm:$0xff]
        %v1179 = vld [vmem:[#allocation4 + $0x40] sm:$0xff]
        %v1180 = vld [vmem:[#allocation4 + $0x50] sm:$0xff]
        %v1181 = vld [vmem:[#allocation4 + $0x60] sm:$0xff]
        %v1182 = vld [vmem:[#allocation4 + $0x70] sm:$0xff]
        %v1183 = vld [vmem:[#allocation4 + $0x80] sm:$0xff]
        %v1184 = vld [vmem:[#allocation4 + $0x90] sm:$0xff]
        %v1185 = vld [vmem:[#allocation7] sm:$0xf]
        %v1186 = vld [vmem:[#allocation7 + $0x4] sm:$0xf]
        %v1187 = vld [vmem:[#allocation7 + $0x8] sm:$0xf]
        %v1188 = vld [vmem:[#allocation7 + $0xc] sm:$0xf]
        %v1189 = vld [vmem:[#allocation7 + $0x10] sm:$0xf]
        %v1190 = vld [vmem:[#allocation7 + $0x14] sm:$0xf]
        %v1191 = vld [vmem:[#allocation7 + $0x18] sm:$0xf]
        %v1192 = vld [vmem:[#allocation7 + $0x1c] sm:$0xf]
        %v1193 = vld [vmem:[#allocation7 + $0x20] sm:$0xf]
        %v1194 = vld [vmem:[#allocation7 + $0x24] sm:$0xf]
        %v1195 = vld [vmem:[#allocation7 + $0x28] sm:$0xf]
        %v1196 = vld [vmem:[#allocation7 + $0x2c] sm:$0xf]
        %v1197 = vld [vmem:[#allocation7 + $0x30] sm:$0xf]
        %v1198 = vld [vmem:[#allocation7 + $0x34] sm:$0xf]
        %v1199 = vld [vmem:[#allocation7 + $0x38] sm:$0xf]
        %v1200 = vld [vmem:[#allocation7 + $0x3c] sm:$0xf]
        %v1201 = vld [vmem:[#allocation7 + $0x40] sm:$0xf]
        %v1202 = vld [vmem:[#allocation7 + $0x44] sm:$0xf]
        %v1203 = vld [vmem:[#allocation7 + $0x48] sm:$0xf]
        %v1204 = vld [vmem:[#allocation7 + $0x4c] sm:$0xf]
        %v1205 = vld [vmem:[#allocation7 + $0x50] sm:$0xf]
        %v1206 = vld [vmem:[#allocation7 + $0x54] sm:$0xf]
        %v1207 = vld [vmem:[#allocation7 + $0x58] sm:$0xf]
        %v1208 = vld [vmem:[#allocation7 + $0x5c] sm:$0xf]
        %v1209 = vld [vmem:[#allocation7 + $0x60] sm:$0xf]
        %v1210 = vld [vmem:[#allocation7 + $0x64] sm:$0xf]
        %v1211 = vld [vmem:[#allocation7 + $0x68] sm:$0xf]
        %v1212 = vld [vmem:[#allocation7 + $0x6c] sm:$0xf]
        %v1213 = vld [vmem:[#allocation7 + $0x70] sm:$0xf]
        %v1214 = vld [vmem:[#allocation7 + $0x74] sm:$0xf]
        %v1215 = vld [vmem:[#allocation7 + $0x78] sm:$0xf]
        %v1216 = vld [vmem:[#allocation7 + $0x7c] sm:$0xf]
        %v1217 = vld [vmem:[#allocation4 + $0x8] sm:$0x11]
        %v1218 = vld [vmem:[#allocation4 + $0x18] sm:$0x11]
        %v1219 = vld [vmem:[#allocation4 + $0x28] sm:$0x11]
        %v1220 = vld [vmem:[#allocation4 + $0x38] sm:$0x11]
        %v1221 = vld [vmem:[#allocation4 + $0x48] sm:$0x11]
        %v1222 = vld [vmem:[#allocation4 + $0x58] sm:$0x11]
        %v1223 = vld [vmem:[#allocation4 + $0x68] sm:$0x11]
        %v1224 = vld [vmem:[#allocation4 + $0x78] sm:$0x11]
        %v1225 = vld [vmem:[#allocation4 + $0x88] sm:$0x11]
        %v1226 = vld [vmem:[#allocation4 + $0x98] sm:$0x11]
        %vm1227 = vsmask.f32 3328
        %vm1228 = vsmask.f32 7440
        %vm1229 = vmor %vm1227, %vm1228
        %v1231 = vshrl.u32 %v1175, 16
        %v1233 = vrot.slane %v1231, 4
        %v1234 = vshll.u32 %v1175, 16
        %v1236 = vrot.slane %v1234, 5
        %v1237 = vor.u32 %v1233, %v1236
        %v1238 = vrot.slane %v1237, 4
        %v1240 = vshll.u32 %v1217, 16
        %v1242 = vrot.slane %v1240, 5
        %v1243 = vsel %vm1229, %v1238, %v1242
        %v1245 = vshrl.u32 %v1176, 16
        %v1247 = vrot.slane %v1245, 4
        %v1248 = vshll.u32 %v1176, 16
        %v1250 = vrot.slane %v1248, 5
        %v1251 = vor.u32 %v1247, %v1250
        %v1252 = vrot.slane %v1251, 4
        %v1254 = vshll.u32 %v1218, 16
        %v1256 = vrot.slane %v1254, 5
        %v1257 = vsel %vm1229, %v1252, %v1256
        %v1259 = vshrl.u32 %v1177, 16
        %v1261 = vrot.slane %v1259, 4
        %v1262 = vshll.u32 %v1177, 16
        %v1264 = vrot.slane %v1262, 5
        %v1265 = vor.u32 %v1261, %v1264
        %v1266 = vrot.slane %v1265, 4
        %v1268 = vshll.u32 %v1219, 16
        %v1270 = vrot.slane %v1268, 5
        %v1271 = vsel %vm1229, %v1266, %v1270
        %v1273 = vshrl.u32 %v1178, 16
        %v1275 = vrot.slane %v1273, 4
        %v1276 = vshll.u32 %v1178, 16
        %v1278 = vrot.slane %v1276, 5
        %v1279 = vor.u32 %v1275, %v1278
        %v1280 = vrot.slane %v1279, 4
        %v1282 = vshll.u32 %v1220, 16
        %v1284 = vrot.slane %v1282, 5
        %v1285 = vsel %vm1229, %v1280, %v1284
        %v1287 = vshrl.u32 %v1179, 16
        %v1289 = vrot.slane %v1287, 4
        %v1290 = vshll.u32 %v1179, 16
        %v1292 = vrot.slane %v1290, 5
        %v1293 = vor.u32 %v1289, %v1292
        %v1294 = vrot.slane %v1293, 4
        %v1296 = vshll.u32 %v1221, 16
        %v1298 = vrot.slane %v1296, 5
        %v1299 = vsel %vm1229, %v1294, %v1298
        %v1301 = vshrl.u32 %v1180, 16
        %v1303 = vrot.slane %v1301, 4
        %v1304 = vshll.u32 %v1180, 16
        %v1306 = vrot.slane %v1304, 5
        %v1307 = vor.u32 %v1303, %v1306
        %v1308 = vrot.slane %v1307, 4
        %v1310 = vshll.u32 %v1222, 16
        %v1312 = vrot.slane %v1310, 5
        %v1313 = vsel %vm1229, %v1308, %v1312
        %v1315 = vshrl.u32 %v1181, 16
        %v1317 = vrot.slane %v1315, 4
        %v1318 = vshll.u32 %v1181, 16
        %v1320 = vrot.slane %v1318, 5
        %v1321 = vor.u32 %v1317, %v1320
        %v1322 = vrot.slane %v1321, 4
        %v1324 = vshll.u32 %v1223, 16
        %v1326 = vrot.slane %v1324, 5
        %v1327 = vsel %vm1229, %v1322, %v1326
        %v1329 = vshrl.u32 %v1182, 16
        %v1331 = vrot.slane %v1329, 4
        %v1332 = vshll.u32 %v1182, 16
        %v1334 = vrot.slane %v1332, 5
        %v1335 = vor.u32 %v1331, %v1334
        %v1336 = vrot.slane %v1335, 4
        %v1338 = vshll.u32 %v1224, 16
        %v1340 = vrot.slane %v1338, 5
        %v1341 = vsel %vm1229, %v1336, %v1340
        %v1343 = vshrl.u32 %v1183, 16
        %v1345 = vrot.slane %v1343, 4
        %v1346 = vshll.u32 %v1183, 16
        %v1348 = vrot.slane %v1346, 5
        %v1349 = vor.u32 %v1345, %v1348
        %v1350 = vrot.slane %v1349, 4
        %v1352 = vshll.u32 %v1225, 16
        %v1354 = vrot.slane %v1352, 5
        %v1355 = vsel %vm1229, %v1350, %v1354
        %v1357 = vshrl.u32 %v1184, 16
        %v1359 = vrot.slane %v1357, 4
        %v1360 = vshll.u32 %v1184, 16
        %v1362 = vrot.slane %v1360, 5
        %v1363 = vor.u32 %v1359, %v1362
        %v1364 = vrot.slane %v1363, 4
        %v1366 = vshll.u32 %v1226, 16
        %v1368 = vrot.slane %v1366, 5
        %v1369 = vsel %vm1229, %v1364, %v1368
        %s1370 = scalar_lea.vmem [#allocation7], 128
        %v1371 = vld [vmem:[%s1370] sm:$0xf]
        %v1372 = vld [vmem:[%s1370 + $0x4] sm:$0xf]
        %v1373 = vld [vmem:[%s1370 + $0x8] sm:$0xf]
        %v1374 = vld [vmem:[%s1370 + $0xc] sm:$0xf]
        %v1375 = vld [vmem:[%s1370 + $0x10] sm:$0xf]
        %v1376 = vld [vmem:[%s1370 + $0x14] sm:$0xf]
        %v1377 = vld [vmem:[%s1370 + $0x18] sm:$0xf]
        %v1378 = vld [vmem:[%s1370 + $0x1c] sm:$0xf]
        %v1379 = vld [vmem:[%s1370 + $0x20] sm:$0xf]
        %v1380 = vld [vmem:[%s1370 + $0x24] sm:$0xf]
        %v1381 = vld [vmem:[%s1370 + $0x28] sm:$0xf]
        %v1382 = vld [vmem:[%s1370 + $0x2c] sm:$0xf]
        %v1383 = vld [vmem:[%s1370 + $0x30] sm:$0xf]
        %v1384 = vld [vmem:[%s1370 + $0x34] sm:$0xf]
        %v1385 = vld [vmem:[%s1370 + $0x38] sm:$0xf]
        %v1386 = vld [vmem:[%s1370 + $0x3c] sm:$0xf]
        %v1387 = vld [vmem:[%s1370 + $0x40] sm:$0xf]
        %v1388 = vld [vmem:[%s1370 + $0x44] sm:$0xf]
        %v1389 = vld [vmem:[%s1370 + $0x48] sm:$0xf]
        %v1390 = vld [vmem:[%s1370 + $0x4c] sm:$0xf]
        %v1391 = vld [vmem:[%s1370 + $0x50] sm:$0xf]
        %v1392 = vld [vmem:[%s1370 + $0x54] sm:$0xf]
        %v1393 = vld [vmem:[%s1370 + $0x58] sm:$0xf]
        %v1394 = vld [vmem:[%s1370 + $0x5c] sm:$0xf]
        %v1395 = vld [vmem:[%s1370 + $0x60] sm:$0xf]
        %v1396 = vld [vmem:[%s1370 + $0x64] sm:$0xf]
        %v1397 = vld [vmem:[%s1370 + $0x68] sm:$0xf]
        %v1398 = vld [vmem:[%s1370 + $0x6c] sm:$0xf]
        %v1399 = vld [vmem:[%s1370 + $0x70] sm:$0xf]
        %v1400 = vld [vmem:[%s1370 + $0x74] sm:$0xf]
        %v1401 = vld [vmem:[%s1370 + $0x78] sm:$0xf]
        %v1402 = vld [vmem:[%s1370 + $0x7c] sm:$0xf]
        %v1403 = vunpack.c.l.b16 %v1243
        %v1404 = vunpack.c.h.b16 %v1243
        %v1405 = vunpack.c.l.b16 %v1257
        %v1406 = vunpack.c.h.b16 %v1257
        %v1407 = vunpack.c.l.b16 %v1271
        %v1408 = vunpack.c.h.b16 %v1271
        %v1409 = vunpack.c.l.b16 %v1285
        %v1410 = vunpack.c.h.b16 %v1285
        %v1411 = vunpack.c.l.b16 %v1299
        %v1412 = vunpack.c.h.b16 %v1299
        %v1413 = vunpack.c.l.b16 %v1313
        %v1414 = vunpack.c.h.b16 %v1313
        %v1415 = vunpack.c.l.b16 %v1327
        %v1416 = vunpack.c.h.b16 %v1327
        %v1417 = vunpack.c.l.b16 %v1341
        %v1418 = vunpack.c.h.b16 %v1341
        %v1419 = vunpack.c.l.b16 %v1355
        %v1420 = vunpack.c.h.b16 %v1355
        %v1421 = vunpack.c.l.b16 %v1369
        %v1422 = vunpack.c.h.b16 %v1369
        %v1423 = vpack.c.b16 %v1405, %v1403
        %v1424 = vpack.c.b16 %v1406, %v1404
        %v1425 = vpack.c.b16 %v1409, %v1407
        %v1426 = vpack.c.b16 %v1410, %v1408
        %v1427 = vpack.c.b16 %v1413, %v1411
        %v1428 = vpack.c.b16 %v1414, %v1412
        %v1429 = vpack.c.b16 %v1417, %v1415
        %v1430 = vpack.c.b16 %v1418, %v1416
        %v1431 = vpack.c.b16 %v1421, %v1419
        %v1432 = vpack.c.b16 %v1422, %v1420
        %v1475 = vunpack.c.l.b16 %v1371
        %v1476 = vunpack.c.l.b16 %v1372
        %v1477 = vunpack.c.l.b16 %v1373
        %v1478 = vunpack.c.l.b16 %v1374
        %v1479 = vunpack.c.l.b16 %v1375
        %v1480 = vunpack.c.l.b16 %v1376
        %v1481 = vunpack.c.l.b16 %v1377
        %v1482 = vunpack.c.l.b16 %v1378
        %v1483 = vunpack.c.l.b16 %v1379
        %v1484 = vunpack.c.l.b16 %v1380
        %v1485 = vunpack.c.l.b16 %v1381
        %v1486 = vunpack.c.l.b16 %v1382
        %v1487 = vunpack.c.l.b16 %v1383
        %v1488 = vunpack.c.l.b16 %v1384
        %v1489 = vunpack.c.l.b16 %v1385
        %v1490 = vunpack.c.l.b16 %v1386
        %v1491 = vunpack.c.l.b16 %v1387
        %v1492 = vunpack.c.l.b16 %v1388
        %v1493 = vunpack.c.l.b16 %v1389
        %v1494 = vunpack.c.l.b16 %v1390
        %v1495 = vunpack.c.l.b16 %v1391
        %v1496 = vunpack.c.l.b16 %v1392
        %v1497 = vunpack.c.l.b16 %v1393
        %v1498 = vunpack.c.l.b16 %v1394
        %v1499 = vunpack.c.l.b16 %v1395
        %v1500 = vunpack.c.l.b16 %v1396
        %v1501 = vunpack.c.l.b16 %v1397
        %v1502 = vunpack.c.l.b16 %v1398
        %v1503 = vunpack.c.l.b16 %v1399
        %v1504 = vunpack.c.l.b16 %v1400
        %v1505 = vunpack.c.l.b16 %v1401
        %v1506 = vunpack.c.l.b16 %v1402
        %v1507 = vpack.c.b16 %v1476, %v1475
        %v1508 = vpack.c.b16 %v1478, %v1477
        %v1509 = vpack.c.b16 %v1480, %v1479
        %v1510 = vpack.c.b16 %v1482, %v1481
        %v1511 = vpack.c.b16 %v1484, %v1483
        %v1512 = vpack.c.b16 %v1486, %v1485
        %v1513 = vpack.c.b16 %v1488, %v1487
        %v1514 = vpack.c.b16 %v1490, %v1489
        %v1515 = vpack.c.b16 %v1492, %v1491
        %v1516 = vpack.c.b16 %v1494, %v1493
        %v1517 = vpack.c.b16 %v1496, %v1495
        %v1518 = vpack.c.b16 %v1498, %v1497
        %v1519 = vpack.c.b16 %v1500, %v1499
        %v1520 = vpack.c.b16 %v1502, %v1501
        %v1521 = vpack.c.b16 %v1504, %v1503
        %v1522 = vpack.c.b16 %v1506, %v1505
        %1539 = vmatprep.subr.bf16.mxu0 0
        %1540 = vmatpush1.bf16.msra.mxu0 %v1514
        %1541 = vmatprep.subr.bf16.mxu0 0
        %1542 = vmatpush1.bf16.msra.mxu0 %v1513
        %1543 = vmatprep.subr.bf16.mxu0 0
        %1544 = vmatpush1.bf16.msra.mxu0 %v1512
        %1545 = vmatprep.subr.bf16.mxu0 0
        %1546 = vmatpush1.bf16.msra.mxu0 %v1511
        %1547 = vmatprep.subr.bf16.mxu0 0
        %1548 = vmatpush1.bf16.msra.mxu0 %v1510
        %1549 = vmatprep.subr.bf16.mxu0 0
        %1550 = vmatpush1.bf16.msra.mxu0 %v1509
        %1551 = vmatprep.subr.bf16.mxu0 0
        %1552 = vmatpush1.bf16.msra.mxu0 %v1508
        %1553 = vmatprep.subr.bf16.mxu0 0
        %1554 = vmatpush1.bf16.msra.mxu0 %v1507
        %1555 = vmatprep.subr.bf16.mxu0 0
        %1556 = vmatpush2.bf16.msra.mxu0 %v1522
        %1557 = vmatprep.subr.bf16.mxu0 0
        %1558 = vmatpush2.bf16.msra.mxu0 %v1521
        %1559 = vmatprep.subr.bf16.mxu0 0
        %1560 = vmatpush2.bf16.msra.mxu0 %v1520
        %1561 = vmatprep.subr.bf16.mxu0 0
        %1562 = vmatpush2.bf16.msra.mxu0 %v1519
        %1563 = vmatprep.subr.bf16.mxu0 0
        %1564 = vmatpush2.bf16.msra.mxu0 %v1518
        %1565 = vmatprep.subr.bf16.mxu0 0
        %1566 = vmatpush2.bf16.msra.mxu0 %v1517
        %1567 = vmatprep.subr.bf16.mxu0 0
        %1568 = vmatpush2.bf16.msra.mxu0 %v1516
        %1569 = vmatprep.subr.bf16.mxu0 0
        %1570 = vmatpush2.bf16.msra.mxu0 %v1515
        %1571 = vmatprep.mubr.bf16.mxu0 %v1424
        %1572 = vmatmul.mubr.bf16.gmra.mxu0 %v1423
        %v1573 = vpop.f32.mrf.mxu0
        %v1574 = vadd.f32 0.0, %v1573
        %v1575 = vpop.f32.mrf.mxu0
        %v1576 = vpop.f32.mrf.mxu0
        %v1577 = vadd.f32 0.0, %v1576
        %v1578 = vpop.f32.mrf.mxu0
        %1579 = vmatprep.mubr.bf16.mxu0 %v1426
        %1580 = vmatmul.mubr.bf16.gmra.mxu0 %v1425
        %v1581 = vpop.f32.mrf.mxu0
        %v1582 = vadd.f32 0.0, %v1581
        %v1583 = vpop.f32.mrf.mxu0
        %v1584 = vpop.f32.mrf.mxu0
        %v1585 = vadd.f32 0.0, %v1584
        %v1586 = vpop.f32.mrf.mxu0
        %1587 = vmatprep.mubr.bf16.mxu0 %v1428
        %1588 = vmatmul.mubr.bf16.gmra.mxu0 %v1427
        %v1589 = vpop.f32.mrf.mxu0
        %v1590 = vadd.f32 0.0, %v1589
        %v1591 = vpop.f32.mrf.mxu0
        %v1592 = vpop.f32.mrf.mxu0
        %v1593 = vadd.f32 0.0, %v1592
        %v1594 = vpop.f32.mrf.mxu0
        %1595 = vmatprep.mubr.bf16.mxu0 %v1430
        %1596 = vmatmul.mubr.bf16.gmra.mxu0 %v1429
        %v1597 = vpop.f32.mrf.mxu0
        %v1598 = vadd.f32 0.0, %v1597
        %v1599 = vpop.f32.mrf.mxu0
        %v1600 = vpop.f32.mrf.mxu0
        %v1601 = vadd.f32 0.0, %v1600
        %v1602 = vpop.f32.mrf.mxu0
        %1603 = vmatprep.mubr.bf16.mxu0 %v1432
        %1604 = vmatmul.mubr.bf16.gmra.mxu0 %v1431
        %v1605 = vpop.f32.mrf.mxu0
        %v1606 = vadd.f32 0.0, %v1605
        %v1607 = vpop.f32.mrf.mxu0
        %v1608 = vpop.f32.mrf.mxu0
        %v1609 = vadd.f32 0.0, %v1608
        %v1610 = vpop.f32.mrf.mxu0
        %1611 = vdwg.mxu0
        %v1622 = vunpack.c.l.b16 %v1175
        %v1623 = vunpack.c.h.b16 %v1175
        %v1624 = vunpack.c.l.b16 %v1176
        %v1625 = vunpack.c.h.b16 %v1176
        %v1626 = vunpack.c.l.b16 %v1177
        %v1627 = vunpack.c.h.b16 %v1177
        %v1628 = vunpack.c.l.b16 %v1178
        %v1629 = vunpack.c.h.b16 %v1178
        %v1630 = vunpack.c.l.b16 %v1179
        %v1631 = vunpack.c.h.b16 %v1179
        %v1632 = vunpack.c.l.b16 %v1180
        %v1633 = vunpack.c.h.b16 %v1180
        %v1634 = vunpack.c.l.b16 %v1181
        %v1635 = vunpack.c.h.b16 %v1181
        %v1636 = vunpack.c.l.b16 %v1182
        %v1637 = vunpack.c.h.b16 %v1182
        %v1638 = vunpack.c.l.b16 %v1183
        %v1639 = vunpack.c.h.b16 %v1183
        %v1640 = vunpack.c.l.b16 %v1184
        %v1641 = vunpack.c.h.b16 %v1184
        %v1642 = vpack.c.b16 %v1624, %v1622
        %v1643 = vpack.c.b16 %v1625, %v1623
        %v1644 = vpack.c.b16 %v1628, %v1626
        %v1645 = vpack.c.b16 %v1629, %v1627
        %v1646 = vpack.c.b16 %v1632, %v1630
        %v1647 = vpack.c.b16 %v1633, %v1631
        %v1648 = vpack.c.b16 %v1636, %v1634
        %v1649 = vpack.c.b16 %v1637, %v1635
        %v1650 = vpack.c.b16 %v1640, %v1638
        %v1651 = vpack.c.b16 %v1641, %v1639
        %v1694 = vunpack.c.l.b16 %v1185
        %v1695 = vunpack.c.l.b16 %v1186
        %v1696 = vunpack.c.l.b16 %v1187
        %v1697 = vunpack.c.l.b16 %v1188
        %v1698 = vunpack.c.l.b16 %v1189
        %v1699 = vunpack.c.l.b16 %v1190
        %v1700 = vunpack.c.l.b16 %v1191
        %v1701 = vunpack.c.l.b16 %v1192
        %v1702 = vunpack.c.l.b16 %v1193
        %v1703 = vunpack.c.l.b16 %v1194
        %v1704 = vunpack.c.l.b16 %v1195
        %v1705 = vunpack.c.l.b16 %v1196
        %v1706 = vunpack.c.l.b16 %v1197
        %v1707 = vunpack.c.l.b16 %v1198
        %v1708 = vunpack.c.l.b16 %v1199
        %v1709 = vunpack.c.l.b16 %v1200
        %v1710 = vunpack.c.l.b16 %v1201
        %v1711 = vunpack.c.l.b16 %v1202
        %v1712 = vunpack.c.l.b16 %v1203
        %v1713 = vunpack.c.l.b16 %v1204
        %v1714 = vunpack.c.l.b16 %v1205
        %v1715 = vunpack.c.l.b16 %v1206
        %v1716 = vunpack.c.l.b16 %v1207
        %v1717 = vunpack.c.l.b16 %v1208
        %v1718 = vunpack.c.l.b16 %v1209
        %v1719 = vunpack.c.l.b16 %v1210
        %v1720 = vunpack.c.l.b16 %v1211
        %v1721 = vunpack.c.l.b16 %v1212
        %v1722 = vunpack.c.l.b16 %v1213
        %v1723 = vunpack.c.l.b16 %v1214
        %v1724 = vunpack.c.l.b16 %v1215
        %v1725 = vunpack.c.l.b16 %v1216
        %v1726 = vpack.c.b16 %v1695, %v1694
        %v1727 = vpack.c.b16 %v1697, %v1696
        %v1728 = vpack.c.b16 %v1699, %v1698
        %v1729 = vpack.c.b16 %v1701, %v1700
        %v1730 = vpack.c.b16 %v1703, %v1702
        %v1731 = vpack.c.b16 %v1705, %v1704
        %v1732 = vpack.c.b16 %v1707, %v1706
        %v1733 = vpack.c.b16 %v1709, %v1708
        %v1734 = vpack.c.b16 %v1711, %v1710
        %v1735 = vpack.c.b16 %v1713, %v1712
        %v1736 = vpack.c.b16 %v1715, %v1714
        %v1737 = vpack.c.b16 %v1717, %v1716
        %v1738 = vpack.c.b16 %v1719, %v1718
        %v1739 = vpack.c.b16 %v1721, %v1720
        %v1740 = vpack.c.b16 %v1723, %v1722
        %v1741 = vpack.c.b16 %v1725, %v1724
        %1758 = vmatprep.subr.bf16.mxu0 0
        %1759 = vmatpush1.bf16.msra.mxu0 %v1733
        %1760 = vmatprep.subr.bf16.mxu0 0
        %1761 = vmatpush1.bf16.msra.mxu0 %v1732
        %1762 = vmatprep.subr.bf16.mxu0 0
        %1763 = vmatpush1.bf16.msra.mxu0 %v1731
        %1764 = vmatprep.subr.bf16.mxu0 0
        %1765 = vmatpush1.bf16.msra.mxu0 %v1730
        %1766 = vmatprep.subr.bf16.mxu0 0
        %1767 = vmatpush1.bf16.msra.mxu0 %v1729
        %1768 = vmatprep.subr.bf16.mxu0 0
        %1769 = vmatpush1.bf16.msra.mxu0 %v1728
        %1770 = vmatprep.subr.bf16.mxu0 0
        %1771 = vmatpush1.bf16.msra.mxu0 %v1727
        %1772 = vmatprep.subr.bf16.mxu0 0
        %1773 = vmatpush1.bf16.msra.mxu0 %v1726
        %1774 = vmatprep.subr.bf16.mxu0 0
        %1775 = vmatpush2.bf16.msra.mxu0 %v1741
        %1776 = vmatprep.subr.bf16.mxu0 0
        %1777 = vmatpush2.bf16.msra.mxu0 %v1740
        %1778 = vmatprep.subr.bf16.mxu0 0
        %1779 = vmatpush2.bf16.msra.mxu0 %v1739
        %1780 = vmatprep.subr.bf16.mxu0 0
        %1781 = vmatpush2.bf16.msra.mxu0 %v1738
        %1782 = vmatprep.subr.bf16.mxu0 0
        %1783 = vmatpush2.bf16.msra.mxu0 %v1737
        %1784 = vmatprep.subr.bf16.mxu0 0
        %1785 = vmatpush2.bf16.msra.mxu0 %v1736
        %1786 = vmatprep.subr.bf16.mxu0 0
        %1787 = vmatpush2.bf16.msra.mxu0 %v1735
        %1788 = vmatprep.subr.bf16.mxu0 0
        %1789 = vmatpush2.bf16.msra.mxu0 %v1734
        %1790 = vmatprep.mubr.bf16.mxu0 %v1643
        %1791 = vmatmul.mubr.bf16.gmra.mxu0 %v1642
        %v1792 = vpop.f32.mrf.mxu0
        %v1793 = vadd.f32 %v1574, %v1792
        %v1794 = vpop.f32.mrf.mxu0
        %v1795 = vpop.f32.mrf.mxu0
        %v1796 = vadd.f32 %v1577, %v1795
        %v1797 = vpop.f32.mrf.mxu0
        %1798 = vmatprep.mubr.bf16.mxu0 %v1645
        %1799 = vmatmul.mubr.bf16.gmra.mxu0 %v1644
        %v1800 = vpop.f32.mrf.mxu0
        %v1801 = vadd.f32 %v1582, %v1800
        %v1802 = vpop.f32.mrf.mxu0
        %v1803 = vpop.f32.mrf.mxu0
        %v1804 = vadd.f32 %v1585, %v1803
        %v1805 = vpop.f32.mrf.mxu0
        %1806 = vmatprep.mubr.bf16.mxu0 %v1647
        %1807 = vmatmul.mubr.bf16.gmra.mxu0 %v1646
        %v1808 = vpop.f32.mrf.mxu0
        %v1809 = vadd.f32 %v1590, %v1808
        %v1810 = vpop.f32.mrf.mxu0
        %v1811 = vpop.f32.mrf.mxu0
        %v1812 = vadd.f32 %v1593, %v1811
        %v1813 = vpop.f32.mrf.mxu0
        %1814 = vmatprep.mubr.bf16.mxu0 %v1649
        %1815 = vmatmul.mubr.bf16.gmra.mxu0 %v1648
        %v1816 = vpop.f32.mrf.mxu0
        %v1817 = vadd.f32 %v1598, %v1816
        %v1818 = vpop.f32.mrf.mxu0
        %v1819 = vpop.f32.mrf.mxu0
        %v1820 = vadd.f32 %v1601, %v1819
        %v1821 = vpop.f32.mrf.mxu0
        %1822 = vmatprep.mubr.bf16.mxu0 %v1651
        %1823 = vmatmul.mubr.bf16.gmra.mxu0 %v1650
        %v1824 = vpop.f32.mrf.mxu0
        %v1825 = vadd.f32 %v1606, %v1824
        %v1826 = vpop.f32.mrf.mxu0
        %v1827 = vpop.f32.mrf.mxu0
        %v1828 = vadd.f32 %v1609, %v1827
        %v1829 = vpop.f32.mrf.mxu0
        %1830 = vdwg.mxu0
        %v1831 = vld [vmem:[#allocation4] sm:$0xee]
        %v1832 = vld [vmem:[#allocation4 + $0x10] sm:$0xee]
        %v1833 = vld [vmem:[#allocation4 + $0x20] sm:$0xee]
        %v1834 = vld [vmem:[#allocation4 + $0x30] sm:$0xee]
        %v1835 = vld [vmem:[#allocation4 + $0x40] sm:$0xee]
        %v1836 = vld [vmem:[#allocation4 + $0x50] sm:$0xee]
        %v1837 = vld [vmem:[#allocation4 + $0x60] sm:$0xee]
        %v1838 = vld [vmem:[#allocation4 + $0x70] sm:$0xee]
        %v1839 = vld [vmem:[#allocation4 + $0x80] sm:$0xee]
        %v1840 = vld [vmem:[#allocation4 + $0x90] sm:$0xee]
        %vm1861 = vcmask 1042432
        %vm1862 = vcmask 1046532
        %vm1863 = vmor %vm1861, %vm1862
        %v1864 = vrot.slane %v1831, 5
        %v1865 = vrot.slane %v1864, 4
        %v1866 = vrot.slane %v1217, 5
        %v1867 = vsel %vm1863, %v1865, %v1866
        %v1868 = vrot.slane %v1832, 5
        %v1869 = vrot.slane %v1868, 4
        %v1870 = vrot.slane %v1218, 5
        %v1871 = vsel %vm1863, %v1869, %v1870
        %v1872 = vrot.slane %v1833, 5
        %v1873 = vrot.slane %v1872, 4
        %v1874 = vrot.slane %v1219, 5
        %v1875 = vsel %vm1863, %v1873, %v1874
        %v1876 = vrot.slane %v1834, 5
        %v1877 = vrot.slane %v1876, 4
        %v1878 = vrot.slane %v1220, 5
        %v1879 = vsel %vm1863, %v1877, %v1878
        %v1880 = vrot.slane %v1835, 5
        %v1881 = vrot.slane %v1880, 4
        %v1882 = vrot.slane %v1221, 5
        %v1883 = vsel %vm1863, %v1881, %v1882
        %v1884 = vrot.slane %v1836, 5
        %v1885 = vrot.slane %v1884, 4
        %v1886 = vrot.slane %v1222, 5
        %v1887 = vsel %vm1863, %v1885, %v1886
        %v1888 = vrot.slane %v1837, 5
        %v1889 = vrot.slane %v1888, 4
        %v1890 = vrot.slane %v1223, 5
        %v1891 = vsel %vm1863, %v1889, %v1890
        %v1892 = vrot.slane %v1838, 5
        %v1893 = vrot.slane %v1892, 4
        %v1894 = vrot.slane %v1224, 5
        %v1895 = vsel %vm1863, %v1893, %v1894
        %v1896 = vrot.slane %v1839, 5
        %v1897 = vrot.slane %v1896, 4
        %v1898 = vrot.slane %v1225, 5
        %v1899 = vsel %vm1863, %v1897, %v1898
        %v1900 = vrot.slane %v1840, 5
        %v1901 = vrot.slane %v1900, 4
        %v1902 = vrot.slane %v1226, 5
        %v1903 = vsel %vm1863, %v1901, %v1902
        %s1904 = scalar_lea.vmem [#allocation7], 256
        %v1905 = vld [vmem:[%s1904] sm:$0xf]
        %v1906 = vld [vmem:[%s1904 + $0x4] sm:$0xf]
        %v1907 = vld [vmem:[%s1904 + $0x8] sm:$0xf]
        %v1908 = vld [vmem:[%s1904 + $0xc] sm:$0xf]
        %v1909 = vld [vmem:[%s1904 + $0x10] sm:$0xf]
        %v1910 = vld [vmem:[%s1904 + $0x14] sm:$0xf]
        %v1911 = vld [vmem:[%s1904 + $0x18] sm:$0xf]
        %v1912 = vld [vmem:[%s1904 + $0x1c] sm:$0xf]
        %v1913 = vld [vmem:[%s1904 + $0x20] sm:$0xf]
        %v1914 = vld [vmem:[%s1904 + $0x24] sm:$0xf]
        %v1915 = vld [vmem:[%s1904 + $0x28] sm:$0xf]
        %v1916 = vld [vmem:[%s1904 + $0x2c] sm:$0xf]
        %v1917 = vld [vmem:[%s1904 + $0x30] sm:$0xf]
        %v1918 = vld [vmem:[%s1904 + $0x34] sm:$0xf]
        %v1919 = vld [vmem:[%s1904 + $0x38] sm:$0xf]
        %v1920 = vld [vmem:[%s1904 + $0x3c] sm:$0xf]
        %v1921 = vld [vmem:[%s1904 + $0x40] sm:$0xf]
        %v1922 = vld [vmem:[%s1904 + $0x44] sm:$0xf]
        %v1923 = vld [vmem:[%s1904 + $0x48] sm:$0xf]
        %v1924 = vld [vmem:[%s1904 + $0x4c] sm:$0xf]
        %v1925 = vld [vmem:[%s1904 + $0x50] sm:$0xf]
        %v1926 = vld [vmem:[%s1904 + $0x54] sm:$0xf]
        %v1927 = vld [vmem:[%s1904 + $0x58] sm:$0xf]
        %v1928 = vld [vmem:[%s1904 + $0x5c] sm:$0xf]
        %v1929 = vld [vmem:[%s1904 + $0x60] sm:$0xf]
        %v1930 = vld [vmem:[%s1904 + $0x64] sm:$0xf]
        %v1931 = vld [vmem:[%s1904 + $0x68] sm:$0xf]
        %v1932 = vld [vmem:[%s1904 + $0x6c] sm:$0xf]
        %v1933 = vld [vmem:[%s1904 + $0x70] sm:$0xf]
        %v1934 = vld [vmem:[%s1904 + $0x74] sm:$0xf]
        %v1935 = vld [vmem:[%s1904 + $0x78] sm:$0xf]
        %v1936 = vld [vmem:[%s1904 + $0x7c] sm:$0xf]
        %v1937 = vunpack.c.l.b16 %v1867
        %v1938 = vunpack.c.h.b16 %v1867
        %v1939 = vunpack.c.l.b16 %v1871
        %v1940 = vunpack.c.h.b16 %v1871
        %v1941 = vunpack.c.l.b16 %v1875
        %v1942 = vunpack.c.h.b16 %v1875
        %v1943 = vunpack.c.l.b16 %v1879
        %v1944 = vunpack.c.h.b16 %v1879
        %v1945 = vunpack.c.l.b16 %v1883
        %v1946 = vunpack.c.h.b16 %v1883
        %v1947 = vunpack.c.l.b16 %v1887
        %v1948 = vunpack.c.h.b16 %v1887
        %v1949 = vunpack.c.l.b16 %v1891
        %v1950 = vunpack.c.h.b16 %v1891
        %v1951 = vunpack.c.l.b16 %v1895
        %v1952 = vunpack.c.h.b16 %v1895
        %v1953 = vunpack.c.l.b16 %v1899
        %v1954 = vunpack.c.h.b16 %v1899
        %v1955 = vunpack.c.l.b16 %v1903
        %v1956 = vunpack.c.h.b16 %v1903
        %v1957 = vpack.c.b16 %v1939, %v1937
        %v1958 = vpack.c.b16 %v1940, %v1938
        %v1959 = vpack.c.b16 %v1943, %v1941
        %v1960 = vpack.c.b16 %v1944, %v1942
        %v1961 = vpack.c.b16 %v1947, %v1945
        %v1962 = vpack.c.b16 %v1948, %v1946
        %v1963 = vpack.c.b16 %v1951, %v1949
        %v1964 = vpack.c.b16 %v1952, %v1950
        %v1965 = vpack.c.b16 %v1955, %v1953
        %v1966 = vpack.c.b16 %v1956, %v1954
        %v2009 = vunpack.c.l.b16 %v1905
        %v2010 = vunpack.c.l.b16 %v1906
        %v2011 = vunpack.c.l.b16 %v1907
        %v2012 = vunpack.c.l.b16 %v1908
        %v2013 = vunpack.c.l.b16 %v1909
        %v2014 = vunpack.c.l.b16 %v1910
        %v2015 = vunpack.c.l.b16 %v1911
        %v2016 = vunpack.c.l.b16 %v1912
        %v2017 = vunpack.c.l.b16 %v1913
        %v2018 = vunpack.c.l.b16 %v1914
        %v2019 = vunpack.c.l.b16 %v1915
        %v2020 = vunpack.c.l.b16 %v1916
        %v2021 = vunpack.c.l.b16 %v1917
        %v2022 = vunpack.c.l.b16 %v1918
        %v2023 = vunpack.c.l.b16 %v1919
        %v2024 = vunpack.c.l.b16 %v1920
        %v2025 = vunpack.c.l.b16 %v1921
        %v2026 = vunpack.c.l.b16 %v1922
        %v2027 = vunpack.c.l.b16 %v1923
        %v2028 = vunpack.c.l.b16 %v1924
        %v2029 = vunpack.c.l.b16 %v1925
        %v2030 = vunpack.c.l.b16 %v1926
        %v2031 = vunpack.c.l.b16 %v1927
        %v2032 = vunpack.c.l.b16 %v1928
        %v2033 = vunpack.c.l.b16 %v1929
        %v2034 = vunpack.c.l.b16 %v1930
        %v2035 = vunpack.c.l.b16 %v1931
        %v2036 = vunpack.c.l.b16 %v1932
        %v2037 = vunpack.c.l.b16 %v1933
        %v2038 = vunpack.c.l.b16 %v1934
        %v2039 = vunpack.c.l.b16 %v1935
        %v2040 = vunpack.c.l.b16 %v1936
        %v2041 = vpack.c.b16 %v2010, %v2009
        %v2042 = vpack.c.b16 %v2012, %v2011
        %v2043 = vpack.c.b16 %v2014, %v2013
        %v2044 = vpack.c.b16 %v2016, %v2015
        %v2045 = vpack.c.b16 %v2018, %v2017
        %v2046 = vpack.c.b16 %v2020, %v2019
        %v2047 = vpack.c.b16 %v2022, %v2021
        %v2048 = vpack.c.b16 %v2024, %v2023
        %v2049 = vpack.c.b16 %v2026, %v2025
        %v2050 = vpack.c.b16 %v2028, %v2027
        %v2051 = vpack.c.b16 %v2030, %v2029
        %v2052 = vpack.c.b16 %v2032, %v2031
        %v2053 = vpack.c.b16 %v2034, %v2033
        %v2054 = vpack.c.b16 %v2036, %v2035
        %v2055 = vpack.c.b16 %v2038, %v2037
        %v2056 = vpack.c.b16 %v2040, %v2039
        %2073 = vmatprep.subr.bf16.mxu0 0
        %2074 = vmatpush1.bf16.msra.mxu0 %v2048
        %2075 = vmatprep.subr.bf16.mxu0 0
        %2076 = vmatpush1.bf16.msra.mxu0 %v2047
        %2077 = vmatprep.subr.bf16.mxu0 0
        %2078 = vmatpush1.bf16.msra.mxu0 %v2046
        %2079 = vmatprep.subr.bf16.mxu0 0
        %2080 = vmatpush1.bf16.msra.mxu0 %v2045
        %2081 = vmatprep.subr.bf16.mxu0 0
        %2082 = vmatpush1.bf16.msra.mxu0 %v2044
        %2083 = vmatprep.subr.bf16.mxu0 0
        %2084 = vmatpush1.bf16.msra.mxu0 %v2043
        %2085 = vmatprep.subr.bf16.mxu0 0
        %2086 = vmatpush1.bf16.msra.mxu0 %v2042
        %2087 = vmatprep.subr.bf16.mxu0 0
        %2088 = vmatpush1.bf16.msra.mxu0 %v2041
        %2089 = vmatprep.subr.bf16.mxu0 0
        %2090 = vmatpush2.bf16.msra.mxu0 %v2056
        %2091 = vmatprep.subr.bf16.mxu0 0
        %2092 = vmatpush2.bf16.msra.mxu0 %v2055
        %2093 = vmatprep.subr.bf16.mxu0 0
        %2094 = vmatpush2.bf16.msra.mxu0 %v2054
        %2095 = vmatprep.subr.bf16.mxu0 0
        %2096 = vmatpush2.bf16.msra.mxu0 %v2053
        %2097 = vmatprep.subr.bf16.mxu0 0
        %2098 = vmatpush2.bf16.msra.mxu0 %v2052
        %2099 = vmatprep.subr.bf16.mxu0 0
        %2100 = vmatpush2.bf16.msra.mxu0 %v2051
        %2101 = vmatprep.subr.bf16.mxu0 0
        %2102 = vmatpush2.bf16.msra.mxu0 %v2050
        %2103 = vmatprep.subr.bf16.mxu0 0
        %2104 = vmatpush2.bf16.msra.mxu0 %v2049
        %2105 = vmatprep.mubr.bf16.mxu0 %v1958
        %2106 = vmatmul.mubr.bf16.gmra.mxu0 %v1957
        %v2107 = vpop.f32.mrf.mxu0
        %v2108 = vadd.f32 0.0, %v2107
        %v2109 = vpop.f32.mrf.mxu0
        %v2110 = vpop.f32.mrf.mxu0
        %v2111 = vadd.f32 0.0, %v2110
        %v2112 = vpop.f32.mrf.mxu0
        %2113 = vmatprep.mubr.bf16.mxu0 %v1960
        %2114 = vmatmul.mubr.bf16.gmra.mxu0 %v1959
        %v2115 = vpop.f32.mrf.mxu0
        %v2116 = vadd.f32 0.0, %v2115
        %v2117 = vpop.f32.mrf.mxu0
        %v2118 = vpop.f32.mrf.mxu0
        %v2119 = vadd.f32 0.0, %v2118
        %v2120 = vpop.f32.mrf.mxu0
        %2121 = vmatprep.mubr.bf16.mxu0 %v1962
        %2122 = vmatmul.mubr.bf16.gmra.mxu0 %v1961
        %v2123 = vpop.f32.mrf.mxu0
        %v2124 = vadd.f32 0.0, %v2123
        %v2125 = vpop.f32.mrf.mxu0
        %v2126 = vpop.f32.mrf.mxu0
        %v2127 = vadd.f32 0.0, %v2126
        %v2128 = vpop.f32.mrf.mxu0
        %2129 = vmatprep.mubr.bf16.mxu0 %v1964
        %2130 = vmatmul.mubr.bf16.gmra.mxu0 %v1963
        %v2131 = vpop.f32.mrf.mxu0
        %v2132 = vadd.f32 0.0, %v2131
        %v2133 = vpop.f32.mrf.mxu0
        %v2134 = vpop.f32.mrf.mxu0
        %v2135 = vadd.f32 0.0, %v2134
        %v2136 = vpop.f32.mrf.mxu0
        %2137 = vmatprep.mubr.bf16.mxu0 %v1966
        %2138 = vmatmul.mubr.bf16.gmra.mxu0 %v1965
        %v2139 = vpop.f32.mrf.mxu0
        %v2140 = vadd.f32 0.0, %v2139
        %v2141 = vpop.f32.mrf.mxu0
        %v2142 = vpop.f32.mrf.mxu0
        %v2143 = vadd.f32 0.0, %v2142
        %v2144 = vpop.f32.mrf.mxu0
        %2145 = vdwg.mxu0
        %v2146 = vadd.f32 %v1793, %v2108
        %v2147 = vadd.f32 %v1796, %v2111
        %v2148 = vadd.f32 %v1801, %v2116
        %v2149 = vadd.f32 %v1804, %v2119
        %v2150 = vadd.f32 %v1809, %v2124
        %v2151 = vadd.f32 %v1812, %v2127
        %v2152 = vadd.f32 %v1817, %v2132
        %v2153 = vadd.f32 %v1820, %v2135
        %v2154 = vadd.f32 %v1825, %v2140
        %v2155 = vadd.f32 %v1828, %v2143
        %s2156 = scalar_lea.vmem [#allocation4], 16
        %v2157 = vld [vmem:[%s2156] sm:$0xff]
        %v2158 = vld [vmem:[%s2156 + $0x10] sm:$0xff]
        %v2159 = vld [vmem:[%s2156 + $0x20] sm:$0xff]
        %v2160 = vld [vmem:[%s2156 + $0x30] sm:$0xff]
        %v2161 = vld [vmem:[%s2156 + $0x40] sm:$0xff]
        %v2162 = vld [vmem:[%s2156 + $0x50] sm:$0xff]
        %v2163 = vld [vmem:[%s2156 + $0x60] sm:$0xff]
        %v2164 = vld [vmem:[%s2156 + $0x70] sm:$0xff]
        %v2165 = vld [vmem:[%s2156 + $0x80] sm:$0xff]
        %v2166 = vld [vmem:[%s2156 + $0x90] sm:$0xff]
        %s2167 = scalar_lea.vmem [#allocation7], 384
        %v2168 = vld [vmem:[%s2167] sm:$0xf]
        %v2169 = vld [vmem:[%s2167 + $0x4] sm:$0xf]
        %v2170 = vld [vmem:[%s2167 + $0x8] sm:$0xf]
        %v2171 = vld [vmem:[%s2167 + $0xc] sm:$0xf]
        %v2172 = vld [vmem:[%s2167 + $0x10] sm:$0xf]
        %v2173 = vld [vmem:[%s2167 + $0x14] sm:$0xf]
        %v2174 = vld [vmem:[%s2167 + $0x18] sm:$0xf]
        %v2175 = vld [vmem:[%s2167 + $0x1c] sm:$0xf]
        %v2176 = vld [vmem:[%s2167 + $0x20] sm:$0xf]
        %v2177 = vld [vmem:[%s2167 + $0x24] sm:$0xf]
        %v2178 = vld [vmem:[%s2167 + $0x28] sm:$0xf]
        %v2179 = vld [vmem:[%s2167 + $0x2c] sm:$0xf]
        %v2180 = vld [vmem:[%s2167 + $0x30] sm:$0xf]
        %v2181 = vld [vmem:[%s2167 + $0x34] sm:$0xf]
        %v2182 = vld [vmem:[%s2167 + $0x38] sm:$0xf]
        %v2183 = vld [vmem:[%s2167 + $0x3c] sm:$0xf]
        %v2184 = vld [vmem:[%s2167 + $0x40] sm:$0xf]
        %v2185 = vld [vmem:[%s2167 + $0x44] sm:$0xf]
        %v2186 = vld [vmem:[%s2167 + $0x48] sm:$0xf]
        %v2187 = vld [vmem:[%s2167 + $0x4c] sm:$0xf]
        %v2188 = vld [vmem:[%s2167 + $0x50] sm:$0xf]
        %v2189 = vld [vmem:[%s2167 + $0x54] sm:$0xf]
        %v2190 = vld [vmem:[%s2167 + $0x58] sm:$0xf]
        %v2191 = vld [vmem:[%s2167 + $0x5c] sm:$0xf]
        %v2192 = vld [vmem:[%s2167 + $0x60] sm:$0xf]
        %v2193 = vld [vmem:[%s2167 + $0x64] sm:$0xf]
        %v2194 = vld [vmem:[%s2167 + $0x68] sm:$0xf]
        %v2195 = vld [vmem:[%s2167 + $0x6c] sm:$0xf]
        %v2196 = vld [vmem:[%s2167 + $0x70] sm:$0xf]
        %v2197 = vld [vmem:[%s2167 + $0x74] sm:$0xf]
        %v2198 = vld [vmem:[%s2167 + $0x78] sm:$0xf]
        %v2199 = vld [vmem:[%s2167 + $0x7c] sm:$0xf]
        %v2210 = vunpack.c.l.b16 %v2157
        %v2211 = vunpack.c.h.b16 %v2157
        %v2212 = vunpack.c.l.b16 %v2158
        %v2213 = vunpack.c.h.b16 %v2158
        %v2214 = vunpack.c.l.b16 %v2159
        %v2215 = vunpack.c.h.b16 %v2159
        %v2216 = vunpack.c.l.b16 %v2160
        %v2217 = vunpack.c.h.b16 %v2160
        %v2218 = vunpack.c.l.b16 %v2161
        %v2219 = vunpack.c.h.b16 %v2161
        %v2220 = vunpack.c.l.b16 %v2162
        %v2221 = vunpack.c.h.b16 %v2162
        %v2222 = vunpack.c.l.b16 %v2163
        %v2223 = vunpack.c.h.b16 %v2163
        %v2224 = vunpack.c.l.b16 %v2164
        %v2225 = vunpack.c.h.b16 %v2164
        %v2226 = vunpack.c.l.b16 %v2165
        %v2227 = vunpack.c.h.b16 %v2165
        %v2228 = vunpack.c.l.b16 %v2166
        %v2229 = vunpack.c.h.b16 %v2166
        %v2230 = vpack.c.b16 %v2212, %v2210
        %v2231 = vpack.c.b16 %v2213, %v2211
        %v2232 = vpack.c.b16 %v2216, %v2214
        %v2233 = vpack.c.b16 %v2217, %v2215
        %v2234 = vpack.c.b16 %v2220, %v2218
        %v2235 = vpack.c.b16 %v2221, %v2219
        %v2236 = vpack.c.b16 %v2224, %v2222
        %v2237 = vpack.c.b16 %v2225, %v2223
        %v2238 = vpack.c.b16 %v2228, %v2226
        %v2239 = vpack.c.b16 %v2229, %v2227
        %v2282 = vunpack.c.l.b16 %v2168
        %v2283 = vunpack.c.l.b16 %v2169
        %v2284 = vunpack.c.l.b16 %v2170
        %v2285 = vunpack.c.l.b16 %v2171
        %v2286 = vunpack.c.l.b16 %v2172
        %v2287 = vunpack.c.l.b16 %v2173
        %v2288 = vunpack.c.l.b16 %v2174
        %v2289 = vunpack.c.l.b16 %v2175
        %v2290 = vunpack.c.l.b16 %v2176
        %v2291 = vunpack.c.l.b16 %v2177
        %v2292 = vunpack.c.l.b16 %v2178
        %v2293 = vunpack.c.l.b16 %v2179
        %v2294 = vunpack.c.l.b16 %v2180
        %v2295 = vunpack.c.l.b16 %v2181
        %v2296 = vunpack.c.l.b16 %v2182
        %v2297 = vunpack.c.l.b16 %v2183
        %v2298 = vunpack.c.l.b16 %v2184
        %v2299 = vunpack.c.l.b16 %v2185
        %v2300 = vunpack.c.l.b16 %v2186
        %v2301 = vunpack.c.l.b16 %v2187
        %v2302 = vunpack.c.l.b16 %v2188
        %v2303 = vunpack.c.l.b16 %v2189
        %v2304 = vunpack.c.l.b16 %v2190
        %v2305 = vunpack.c.l.b16 %v2191
        %v2306 = vunpack.c.l.b16 %v2192
        %v2307 = vunpack.c.l.b16 %v2193
        %v2308 = vunpack.c.l.b16 %v2194
        %v2309 = vunpack.c.l.b16 %v2195
        %v2310 = vunpack.c.l.b16 %v2196
        %v2311 = vunpack.c.l.b16 %v2197
        %v2312 = vunpack.c.l.b16 %v2198
        %v2313 = vunpack.c.l.b16 %v2199
        %v2314 = vpack.c.b16 %v2283, %v2282
        %v2315 = vpack.c.b16 %v2285, %v2284
        %v2316 = vpack.c.b16 %v2287, %v2286
        %v2317 = vpack.c.b16 %v2289, %v2288
        %v2318 = vpack.c.b16 %v2291, %v2290
        %v2319 = vpack.c.b16 %v2293, %v2292
        %v2320 = vpack.c.b16 %v2295, %v2294
        %v2321 = vpack.c.b16 %v2297, %v2296
        %v2322 = vpack.c.b16 %v2299, %v2298
        %v2323 = vpack.c.b16 %v2301, %v2300
        %v2324 = vpack.c.b16 %v2303, %v2302
        %v2325 = vpack.c.b16 %v2305, %v2304
        %v2326 = vpack.c.b16 %v2307, %v2306
        %v2327 = vpack.c.b16 %v2309, %v2308
        %v2328 = vpack.c.b16 %v2311, %v2310
        %v2329 = vpack.c.b16 %v2313, %v2312
        %2346 = vmatprep.subr.bf16.mxu0 0
        %2347 = vmatpush1.bf16.msra.mxu0 %v2321
        %2348 = vmatprep.subr.bf16.mxu0 0
        %2349 = vmatpush1.bf16.msra.mxu0 %v2320
        %2350 = vmatprep.subr.bf16.mxu0 0
        %2351 = vmatpush1.bf16.msra.mxu0 %v2319
        %2352 = vmatprep.subr.bf16.mxu0 0
        %2353 = vmatpush1.bf16.msra.mxu0 %v2318
        %2354 = vmatprep.subr.bf16.mxu0 0
        %2355 = vmatpush1.bf16.msra.mxu0 %v2317
        %2356 = vmatprep.subr.bf16.mxu0 0
        %2357 = vmatpush1.bf16.msra.mxu0 %v2316
        %2358 = vmatprep.subr.bf16.mxu0 0
        %2359 = vmatpush1.bf16.msra.mxu0 %v2315
        %2360 = vmatprep.subr.bf16.mxu0 0
        %2361 = vmatpush1.bf16.msra.mxu0 %v2314
        %2362 = vmatprep.subr.bf16.mxu0 0
        %2363 = vmatpush2.bf16.msra.mxu0 %v2329
        %2364 = vmatprep.subr.bf16.mxu0 0
        %2365 = vmatpush2.bf16.msra.mxu0 %v2328
        %2366 = vmatprep.subr.bf16.mxu0 0
        %2367 = vmatpush2.bf16.msra.mxu0 %v2327
        %2368 = vmatprep.subr.bf16.mxu0 0
        %2369 = vmatpush2.bf16.msra.mxu0 %v2326
        %2370 = vmatprep.subr.bf16.mxu0 0
        %2371 = vmatpush2.bf16.msra.mxu0 %v2325
        %2372 = vmatprep.subr.bf16.mxu0 0
        %2373 = vmatpush2.bf16.msra.mxu0 %v2324
        %2374 = vmatprep.subr.bf16.mxu0 0
        %2375 = vmatpush2.bf16.msra.mxu0 %v2323
        %2376 = vmatprep.subr.bf16.mxu0 0
        %2377 = vmatpush2.bf16.msra.mxu0 %v2322
        %2378 = vmatprep.mubr.bf16.mxu0 %v2231
        %2379 = vmatmul.mubr.bf16.gmra.mxu0 %v2230
        %v2380 = vpop.f32.mrf.mxu0
        %v2381 = vadd.f32 0.0, %v2380
        %v2382 = vpop.f32.mrf.mxu0
        %v2383 = vpop.f32.mrf.mxu0
        %v2384 = vadd.f32 0.0, %v2383
        %v2385 = vpop.f32.mrf.mxu0
        %2386 = vmatprep.mubr.bf16.mxu0 %v2233
        %2387 = vmatmul.mubr.bf16.gmra.mxu0 %v2232
        %v2388 = vpop.f32.mrf.mxu0
        %v2389 = vadd.f32 0.0, %v2388
        %v2390 = vpop.f32.mrf.mxu0
        %v2391 = vpop.f32.mrf.mxu0
        %v2392 = vadd.f32 0.0, %v2391
        %v2393 = vpop.f32.mrf.mxu0
        %2394 = vmatprep.mubr.bf16.mxu0 %v2235
        %2395 = vmatmul.mubr.bf16.gmra.mxu0 %v2234
        %v2396 = vpop.f32.mrf.mxu0
        %v2397 = vadd.f32 0.0, %v2396
        %v2398 = vpop.f32.mrf.mxu0
        %v2399 = vpop.f32.mrf.mxu0
        %v2400 = vadd.f32 0.0, %v2399
        %v2401 = vpop.f32.mrf.mxu0
        %2402 = vmatprep.mubr.bf16.mxu0 %v2237
        %2403 = vmatmul.mubr.bf16.gmra.mxu0 %v2236
        %v2404 = vpop.f32.mrf.mxu0
        %v2405 = vadd.f32 0.0, %v2404
        %v2406 = vpop.f32.mrf.mxu0
        %v2407 = vpop.f32.mrf.mxu0
        %v2408 = vadd.f32 0.0, %v2407
        %v2409 = vpop.f32.mrf.mxu0
        %2410 = vmatprep.mubr.bf16.mxu0 %v2239
        %2411 = vmatmul.mubr.bf16.gmra.mxu0 %v2238
        %v2412 = vpop.f32.mrf.mxu0
        %v2413 = vadd.f32 0.0, %v2412
        %v2414 = vpop.f32.mrf.mxu0
        %v2415 = vpop.f32.mrf.mxu0
        %v2416 = vadd.f32 0.0, %v2415
        %v2417 = vpop.f32.mrf.mxu0
        %2418 = vdwg.mxu0
        %v2419 = vadd.f32 %v2146, %v2381
        %v2420 = vadd.f32 %v2147, %v2384
        %v2421 = vadd.f32 %v2148, %v2389
        %v2422 = vadd.f32 %v2149, %v2392
        %v2423 = vadd.f32 %v2150, %v2397
        %v2424 = vadd.f32 %v2151, %v2400
        %v2425 = vadd.f32 %v2152, %v2405
        %v2426 = vadd.f32 %v2153, %v2408
        %v2427 = vadd.f32 %v2154, %v2413
        %v2428 = vadd.f32 %v2155, %v2416
        %v2429 = vld [vmem:[%s2156] sm:$0xff]
        %v2430 = vld [vmem:[%s2156 + $0x8] sm:$0x11]
        %v2431 = vld [vmem:[%s2156 + $0x10] sm:$0xff]
        %v2432 = vld [vmem:[%s2156 + $0x18] sm:$0x11]
        %v2433 = vld [vmem:[%s2156 + $0x20] sm:$0xff]
        %v2434 = vld [vmem:[%s2156 + $0x28] sm:$0x11]
        %v2435 = vld [vmem:[%s2156 + $0x30] sm:$0xff]
        %v2436 = vld [vmem:[%s2156 + $0x38] sm:$0x11]
        %v2437 = vld [vmem:[%s2156 + $0x40] sm:$0xff]
        %v2438 = vld [vmem:[%s2156 + $0x48] sm:$0x11]
        %v2439 = vld [vmem:[%s2156 + $0x50] sm:$0xff]
        %v2440 = vld [vmem:[%s2156 + $0x58] sm:$0x11]
        %v2441 = vld [vmem:[%s2156 + $0x60] sm:$0xff]
        %v2442 = vld [vmem:[%s2156 + $0x68] sm:$0x11]
        %v2443 = vld [vmem:[%s2156 + $0x70] sm:$0xff]
        %v2444 = vld [vmem:[%s2156 + $0x78] sm:$0x11]
        %v2445 = vld [vmem:[%s2156 + $0x80] sm:$0xff]
        %v2446 = vld [vmem:[%s2156 + $0x88] sm:$0x11]
        %v2447 = vld [vmem:[%s2156 + $0x90] sm:$0xff]
        %v2448 = vld [vmem:[%s2156 + $0x98] sm:$0x11]
        %v2450 = vshrl.u32 %v2429, 16
        %v2452 = vrot.slane %v2450, 4
        %v2453 = vshll.u32 %v2429, 16
        %v2455 = vrot.slane %v2453, 5
        %v2456 = vor.u32 %v2452, %v2455
        %v2457 = vrot.slane %v2456, 4
        %v2459 = vshll.u32 %v2430, 16
        %v2461 = vrot.slane %v2459, 5
        %v2462 = vsel %vm1229, %v2457, %v2461
        %v2464 = vshrl.u32 %v2431, 16
        %v2466 = vrot.slane %v2464, 4
        %v2467 = vshll.u32 %v2431, 16
        %v2469 = vrot.slane %v2467, 5
        %v2470 = vor.u32 %v2466, %v2469
        %v2471 = vrot.slane %v2470, 4
        %v2473 = vshll.u32 %v2432, 16
        %v2475 = vrot.slane %v2473, 5
        %v2476 = vsel %vm1229, %v2471, %v2475
        %v2478 = vshrl.u32 %v2433, 16
        %v2480 = vrot.slane %v2478, 4
        %v2481 = vshll.u32 %v2433, 16
        %v2483 = vrot.slane %v2481, 5
        %v2484 = vor.u32 %v2480, %v2483
        %v2485 = vrot.slane %v2484, 4
        %v2487 = vshll.u32 %v2434, 16
        %v2489 = vrot.slane %v2487, 5
        %v2490 = vsel %vm1229, %v2485, %v2489
        %v2492 = vshrl.u32 %v2435, 16
        %v2494 = vrot.slane %v2492, 4
        %v2495 = vshll.u32 %v2435, 16
        %v2497 = vrot.slane %v2495, 5
        %v2498 = vor.u32 %v2494, %v2497
        %v2499 = vrot.slane %v2498, 4
        %v2501 = vshll.u32 %v2436, 16
        %v2503 = vrot.slane %v2501, 5
        %v2504 = vsel %vm1229, %v2499, %v2503
        %v2506 = vshrl.u32 %v2437, 16
        %v2508 = vrot.slane %v2506, 4
        %v2509 = vshll.u32 %v2437, 16
        %v2511 = vrot.slane %v2509, 5
        %v2512 = vor.u32 %v2508, %v2511
        %v2513 = vrot.slane %v2512, 4
        %v2515 = vshll.u32 %v2438, 16
        %v2517 = vrot.slane %v2515, 5
        %v2518 = vsel %vm1229, %v2513, %v2517
        %v2520 = vshrl.u32 %v2439, 16
        %v2522 = vrot.slane %v2520, 4
        %v2523 = vshll.u32 %v2439, 16
        %v2525 = vrot.slane %v2523, 5
        %v2526 = vor.u32 %v2522, %v2525
        %v2527 = vrot.slane %v2526, 4
        %v2529 = vshll.u32 %v2440, 16
        %v2531 = vrot.slane %v2529, 5
        %v2532 = vsel %vm1229, %v2527, %v2531
        %v2534 = vshrl.u32 %v2441, 16
        %v2536 = vrot.slane %v2534, 4
        %v2537 = vshll.u32 %v2441, 16
        %v2539 = vrot.slane %v2537, 5
        %v2540 = vor.u32 %v2536, %v2539
        %v2541 = vrot.slane %v2540, 4
        %v2543 = vshll.u32 %v2442, 16
        %v2545 = vrot.slane %v2543, 5
        %v2546 = vsel %vm1229, %v2541, %v2545
        %v2548 = vshrl.u32 %v2443, 16
        %v2550 = vrot.slane %v2548, 4
        %v2551 = vshll.u32 %v2443, 16
        %v2553 = vrot.slane %v2551, 5
        %v2554 = vor.u32 %v2550, %v2553
        %v2555 = vrot.slane %v2554, 4
        %v2557 = vshll.u32 %v2444, 16
        %v2559 = vrot.slane %v2557, 5
        %v2560 = vsel %vm1229, %v2555, %v2559
        %v2562 = vshrl.u32 %v2445, 16
        %v2564 = vrot.slane %v2562, 4
        %v2565 = vshll.u32 %v2445, 16
        %v2567 = vrot.slane %v2565, 5
        %v2568 = vor.u32 %v2564, %v2567
        %v2569 = vrot.slane %v2568, 4
        %v2571 = vshll.u32 %v2446, 16
        %v2573 = vrot.slane %v2571, 5
        %v2574 = vsel %vm1229, %v2569, %v2573
        %v2576 = vshrl.u32 %v2447, 16
        %v2578 = vrot.slane %v2576, 4
        %v2579 = vshll.u32 %v2447, 16
        %v2581 = vrot.slane %v2579, 5
        %v2582 = vor.u32 %v2578, %v2581
        %v2583 = vrot.slane %v2582, 4
        %v2585 = vshll.u32 %v2448, 16
        %v2587 = vrot.slane %v2585, 5
        %v2588 = vsel %vm1229, %v2583, %v2587
        %s2589 = scalar_lea.vmem [#allocation7], 512
        %v2590 = vld [vmem:[%s2589] sm:$0xf]
        %v2591 = vld [vmem:[%s2589 + $0x4] sm:$0xf]
        %v2592 = vld [vmem:[%s2589 + $0x8] sm:$0xf]
        %v2593 = vld [vmem:[%s2589 + $0xc] sm:$0xf]
        %v2594 = vld [vmem:[%s2589 + $0x10] sm:$0xf]
        %v2595 = vld [vmem:[%s2589 + $0x14] sm:$0xf]
        %v2596 = vld [vmem:[%s2589 + $0x18] sm:$0xf]
        %v2597 = vld [vmem:[%s2589 + $0x1c] sm:$0xf]
        %v2598 = vld [vmem:[%s2589 + $0x20] sm:$0xf]
        %v2599 = vld [vmem:[%s2589 + $0x24] sm:$0xf]
        %v2600 = vld [vmem:[%s2589 + $0x28] sm:$0xf]
        %v2601 = vld [vmem:[%s2589 + $0x2c] sm:$0xf]
        %v2602 = vld [vmem:[%s2589 + $0x30] sm:$0xf]
        %v2603 = vld [vmem:[%s2589 + $0x34] sm:$0xf]
        %v2604 = vld [vmem:[%s2589 + $0x38] sm:$0xf]
        %v2605 = vld [vmem:[%s2589 + $0x3c] sm:$0xf]
        %v2606 = vld [vmem:[%s2589 + $0x40] sm:$0xf]
        %v2607 = vld [vmem:[%s2589 + $0x44] sm:$0xf]
        %v2608 = vld [vmem:[%s2589 + $0x48] sm:$0xf]
        %v2609 = vld [vmem:[%s2589 + $0x4c] sm:$0xf]
        %v2610 = vld [vmem:[%s2589 + $0x50] sm:$0xf]
        %v2611 = vld [vmem:[%s2589 + $0x54] sm:$0xf]
        %v2612 = vld [vmem:[%s2589 + $0x58] sm:$0xf]
        %v2613 = vld [vmem:[%s2589 + $0x5c] sm:$0xf]
        %v2614 = vld [vmem:[%s2589 + $0x60] sm:$0xf]
        %v2615 = vld [vmem:[%s2589 + $0x64] sm:$0xf]
        %v2616 = vld [vmem:[%s2589 + $0x68] sm:$0xf]
        %v2617 = vld [vmem:[%s2589 + $0x6c] sm:$0xf]
        %v2618 = vld [vmem:[%s2589 + $0x70] sm:$0xf]
        %v2619 = vld [vmem:[%s2589 + $0x74] sm:$0xf]
        %v2620 = vld [vmem:[%s2589 + $0x78] sm:$0xf]
        %v2621 = vld [vmem:[%s2589 + $0x7c] sm:$0xf]
        %v2622 = vunpack.c.l.b16 %v2462
        %v2623 = vunpack.c.h.b16 %v2462
        %v2624 = vunpack.c.l.b16 %v2476
        %v2625 = vunpack.c.h.b16 %v2476
        %v2626 = vunpack.c.l.b16 %v2490
        %v2627 = vunpack.c.h.b16 %v2490
        %v2628 = vunpack.c.l.b16 %v2504
        %v2629 = vunpack.c.h.b16 %v2504
        %v2630 = vunpack.c.l.b16 %v2518
        %v2631 = vunpack.c.h.b16 %v2518
        %v2632 = vunpack.c.l.b16 %v2532
        %v2633 = vunpack.c.h.b16 %v2532
        %v2634 = vunpack.c.l.b16 %v2546
        %v2635 = vunpack.c.h.b16 %v2546
        %v2636 = vunpack.c.l.b16 %v2560
        %v2637 = vunpack.c.h.b16 %v2560
        %v2638 = vunpack.c.l.b16 %v2574
        %v2639 = vunpack.c.h.b16 %v2574
        %v2640 = vunpack.c.l.b16 %v2588
        %v2641 = vunpack.c.h.b16 %v2588
        %v2642 = vpack.c.b16 %v2624, %v2622
        %v2643 = vpack.c.b16 %v2625, %v2623
        %v2644 = vpack.c.b16 %v2628, %v2626
        %v2645 = vpack.c.b16 %v2629, %v2627
        %v2646 = vpack.c.b16 %v2632, %v2630
        %v2647 = vpack.c.b16 %v2633, %v2631
        %v2648 = vpack.c.b16 %v2636, %v2634
        %v2649 = vpack.c.b16 %v2637, %v2635
        %v2650 = vpack.c.b16 %v2640, %v2638
        %v2651 = vpack.c.b16 %v2641, %v2639
        %v2694 = vunpack.c.l.b16 %v2590
        %v2695 = vunpack.c.l.b16 %v2591
        %v2696 = vunpack.c.l.b16 %v2592
        %v2697 = vunpack.c.l.b16 %v2593
        %v2698 = vunpack.c.l.b16 %v2594
        %v2699 = vunpack.c.l.b16 %v2595
        %v2700 = vunpack.c.l.b16 %v2596
        %v2701 = vunpack.c.l.b16 %v2597
        %v2702 = vunpack.c.l.b16 %v2598
        %v2703 = vunpack.c.l.b16 %v2599
        %v2704 = vunpack.c.l.b16 %v2600
        %v2705 = vunpack.c.l.b16 %v2601
        %v2706 = vunpack.c.l.b16 %v2602
        %v2707 = vunpack.c.l.b16 %v2603
        %v2708 = vunpack.c.l.b16 %v2604
        %v2709 = vunpack.c.l.b16 %v2605
        %v2710 = vunpack.c.l.b16 %v2606
        %v2711 = vunpack.c.l.b16 %v2607
        %v2712 = vunpack.c.l.b16 %v2608
        %v2713 = vunpack.c.l.b16 %v2609
        %v2714 = vunpack.c.l.b16 %v2610
        %v2715 = vunpack.c.l.b16 %v2611
        %v2716 = vunpack.c.l.b16 %v2612
        %v2717 = vunpack.c.l.b16 %v2613
        %v2718 = vunpack.c.l.b16 %v2614
        %v2719 = vunpack.c.l.b16 %v2615
        %v2720 = vunpack.c.l.b16 %v2616
        %v2721 = vunpack.c.l.b16 %v2617
        %v2722 = vunpack.c.l.b16 %v2618
        %v2723 = vunpack.c.l.b16 %v2619
        %v2724 = vunpack.c.l.b16 %v2620
        %v2725 = vunpack.c.l.b16 %v2621
        %v2726 = vpack.c.b16 %v2695, %v2694
        %v2727 = vpack.c.b16 %v2697, %v2696
        %v2728 = vpack.c.b16 %v2699, %v2698
        %v2729 = vpack.c.b16 %v2701, %v2700
        %v2730 = vpack.c.b16 %v2703, %v2702
        %v2731 = vpack.c.b16 %v2705, %v2704
        %v2732 = vpack.c.b16 %v2707, %v2706
        %v2733 = vpack.c.b16 %v2709, %v2708
        %v2734 = vpack.c.b16 %v2711, %v2710
        %v2735 = vpack.c.b16 %v2713, %v2712
        %v2736 = vpack.c.b16 %v2715, %v2714
        %v2737 = vpack.c.b16 %v2717, %v2716
        %v2738 = vpack.c.b16 %v2719, %v2718
        %v2739 = vpack.c.b16 %v2721, %v2720
        %v2740 = vpack.c.b16 %v2723, %v2722
        %v2741 = vpack.c.b16 %v2725, %v2724
        %2758 = vmatprep.subr.bf16.mxu0 0
        %2759 = vmatpush1.bf16.msra.mxu0 %v2733
        %2760 = vmatprep.subr.bf16.mxu0 0
        %2761 = vmatpush1.bf16.msra.mxu0 %v2732
        %2762 = vmatprep.subr.bf16.mxu0 0
        %2763 = vmatpush1.bf16.msra.mxu0 %v2731
        %2764 = vmatprep.subr.bf16.mxu0 0
        %2765 = vmatpush1.bf16.msra.mxu0 %v2730
        %2766 = vmatprep.subr.bf16.mxu0 0
        %2767 = vmatpush1.bf16.msra.mxu0 %v2729
        %2768 = vmatprep.subr.bf16.mxu0 0
        %2769 = vmatpush1.bf16.msra.mxu0 %v2728
        %2770 = vmatprep.subr.bf16.mxu0 0
        %2771 = vmatpush1.bf16.msra.mxu0 %v2727
        %2772 = vmatprep.subr.bf16.mxu0 0
        %2773 = vmatpush1.bf16.msra.mxu0 %v2726
        %2774 = vmatprep.subr.bf16.mxu0 0
        %2775 = vmatpush2.bf16.msra.mxu0 %v2741
        %2776 = vmatprep.subr.bf16.mxu0 0
        %2777 = vmatpush2.bf16.msra.mxu0 %v2740
        %2778 = vmatprep.subr.bf16.mxu0 0
        %2779 = vmatpush2.bf16.msra.mxu0 %v2739
        %2780 = vmatprep.subr.bf16.mxu0 0
        %2781 = vmatpush2.bf16.msra.mxu0 %v2738
        %2782 = vmatprep.subr.bf16.mxu0 0
        %2783 = vmatpush2.bf16.msra.mxu0 %v2737
        %2784 = vmatprep.subr.bf16.mxu0 0
        %2785 = vmatpush2.bf16.msra.mxu0 %v2736
        %2786 = vmatprep.subr.bf16.mxu0 0
        %2787 = vmatpush2.bf16.msra.mxu0 %v2735
        %2788 = vmatprep.subr.bf16.mxu0 0
        %2789 = vmatpush2.bf16.msra.mxu0 %v2734
        %2790 = vmatprep.mubr.bf16.mxu0 %v2643
        %2791 = vmatmul.mubr.bf16.gmra.mxu0 %v2642
        %v2792 = vpop.f32.mrf.mxu0
        %v2793 = vadd.f32 0.0, %v2792
        %v2794 = vpop.f32.mrf.mxu0
        %v2795 = vpop.f32.mrf.mxu0
        %v2796 = vadd.f32 0.0, %v2795
        %v2797 = vpop.f32.mrf.mxu0
        %2798 = vmatprep.mubr.bf16.mxu0 %v2645
        %2799 = vmatmul.mubr.bf16.gmra.mxu0 %v2644
        %v2800 = vpop.f32.mrf.mxu0
        %v2801 = vadd.f32 0.0, %v2800
        %v2802 = vpop.f32.mrf.mxu0
        %v2803 = vpop.f32.mrf.mxu0
        %v2804 = vadd.f32 0.0, %v2803
        %v2805 = vpop.f32.mrf.mxu0
        %2806 = vmatprep.mubr.bf16.mxu0 %v2647
        %2807 = vmatmul.mubr.bf16.gmra.mxu0 %v2646
        %v2808 = vpop.f32.mrf.mxu0
        %v2809 = vadd.f32 0.0, %v2808
        %v2810 = vpop.f32.mrf.mxu0
        %v2811 = vpop.f32.mrf.mxu0
        %v2812 = vadd.f32 0.0, %v2811
        %v2813 = vpop.f32.mrf.mxu0
        %2814 = vmatprep.mubr.bf16.mxu0 %v2649
        %2815 = vmatmul.mubr.bf16.gmra.mxu0 %v2648
        %v2816 = vpop.f32.mrf.mxu0
        %v2817 = vadd.f32 0.0, %v2816
        %v2818 = vpop.f32.mrf.mxu0
        %v2819 = vpop.f32.mrf.mxu0
        %v2820 = vadd.f32 0.0, %v2819
        %v2821 = vpop.f32.mrf.mxu0
        %2822 = vmatprep.mubr.bf16.mxu0 %v2651
        %2823 = vmatmul.mubr.bf16.gmra.mxu0 %v2650
        %v2824 = vpop.f32.mrf.mxu0
        %v2825 = vadd.f32 0.0, %v2824
        %v2826 = vpop.f32.mrf.mxu0
        %v2827 = vpop.f32.mrf.mxu0
        %v2828 = vadd.f32 0.0, %v2827
        %v2829 = vpop.f32.mrf.mxu0
        %2830 = vdwg.mxu0
        %v2831 = vadd.f32 %v2419, %v2793
        %v2832 = vadd.f32 %v2420, %v2796
        %v2833 = vadd.f32 %v2421, %v2801
        %v2834 = vadd.f32 %v2422, %v2804
        %v2835 = vadd.f32 %v2423, %v2809
        %v2836 = vadd.f32 %v2424, %v2812
        %v2837 = vadd.f32 %v2425, %v2817
        %v2838 = vadd.f32 %v2426, %v2820
        %v2839 = vadd.f32 %v2427, %v2825
        %v2840 = vadd.f32 %v2428, %v2828
        %v2841 = vld [vmem:[%s2156] sm:$0xee]
        %v2842 = vld [vmem:[%s2156 + $0x10] sm:$0xee]
        %v2843 = vld [vmem:[%s2156 + $0x20] sm:$0xee]
        %v2844 = vld [vmem:[%s2156 + $0x30] sm:$0xee]
        %v2845 = vld [vmem:[%s2156 + $0x40] sm:$0xee]
        %v2846 = vld [vmem:[%s2156 + $0x50] sm:$0xee]
        %v2847 = vld [vmem:[%s2156 + $0x60] sm:$0xee]
        %v2848 = vld [vmem:[%s2156 + $0x70] sm:$0xee]
        %v2849 = vld [vmem:[%s2156 + $0x80] sm:$0xee]
        %v2850 = vld [vmem:[%s2156 + $0x90] sm:$0xee]
        %v2871 = vrot.slane %v2841, 5
        %v2872 = vrot.slane %v2871, 4
        %v2873 = vrot.slane %v2430, 5
        %v2874 = vsel %vm1863, %v2872, %v2873
        %v2875 = vrot.slane %v2842, 5
        %v2876 = vrot.slane %v2875, 4
        %v2877 = vrot.slane %v2432, 5
        %v2878 = vsel %vm1863, %v2876, %v2877
        %v2879 = vrot.slane %v2843, 5
        %v2880 = vrot.slane %v2879, 4
        %v2881 = vrot.slane %v2434, 5
        %v2882 = vsel %vm1863, %v2880, %v2881
        %v2883 = vrot.slane %v2844, 5
        %v2884 = vrot.slane %v2883, 4
        %v2885 = vrot.slane %v2436, 5
        %v2886 = vsel %vm1863, %v2884, %v2885
        %v2887 = vrot.slane %v2845, 5
        %v2888 = vrot.slane %v2887, 4
        %v2889 = vrot.slane %v2438, 5
        %v2890 = vsel %vm1863, %v2888, %v2889
        %v2891 = vrot.slane %v2846, 5
        %v2892 = vrot.slane %v2891, 4
        %v2893 = vrot.slane %v2440, 5
        %v2894 = vsel %vm1863, %v2892, %v2893
        %v2895 = vrot.slane %v2847, 5
        %v2896 = vrot.slane %v2895, 4
        %v2897 = vrot.slane %v2442, 5
        %v2898 = vsel %vm1863, %v2896, %v2897
        %v2899 = vrot.slane %v2848, 5
        %v2900 = vrot.slane %v2899, 4
        %v2901 = vrot.slane %v2444, 5
        %v2902 = vsel %vm1863, %v2900, %v2901
        %v2903 = vrot.slane %v2849, 5
        %v2904 = vrot.slane %v2903, 4
        %v2905 = vrot.slane %v2446, 5
        %v2906 = vsel %vm1863, %v2904, %v2905
        %v2907 = vrot.slane %v2850, 5
        %v2908 = vrot.slane %v2907, 4
        %v2909 = vrot.slane %v2448, 5
        %v2910 = vsel %vm1863, %v2908, %v2909
        %s2911 = scalar_lea.vmem [#allocation7], 640
        %v2912 = vld [vmem:[%s2911] sm:$0xf]
        %v2913 = vld [vmem:[%s2911 + $0x4] sm:$0xf]
        %v2914 = vld [vmem:[%s2911 + $0x8] sm:$0xf]
        %v2915 = vld [vmem:[%s2911 + $0xc] sm:$0xf]
        %v2916 = vld [vmem:[%s2911 + $0x10] sm:$0xf]
        %v2917 = vld [vmem:[%s2911 + $0x14] sm:$0xf]
        %v2918 = vld [vmem:[%s2911 + $0x18] sm:$0xf]
        %v2919 = vld [vmem:[%s2911 + $0x1c] sm:$0xf]
        %v2920 = vld [vmem:[%s2911 + $0x20] sm:$0xf]
        %v2921 = vld [vmem:[%s2911 + $0x24] sm:$0xf]
        %v2922 = vld [vmem:[%s2911 + $0x28] sm:$0xf]
        %v2923 = vld [vmem:[%s2911 + $0x2c] sm:$0xf]
        %v2924 = vld [vmem:[%s2911 + $0x30] sm:$0xf]
        %v2925 = vld [vmem:[%s2911 + $0x34] sm:$0xf]
        %v2926 = vld [vmem:[%s2911 + $0x38] sm:$0xf]
        %v2927 = vld [vmem:[%s2911 + $0x3c] sm:$0xf]
        %v2928 = vld [vmem:[%s2911 + $0x40] sm:$0xf]
        %v2929 = vld [vmem:[%s2911 + $0x44] sm:$0xf]
        %v2930 = vld [vmem:[%s2911 + $0x48] sm:$0xf]
        %v2931 = vld [vmem:[%s2911 + $0x4c] sm:$0xf]
        %v2932 = vld [vmem:[%s2911 + $0x50] sm:$0xf]
        %v2933 = vld [vmem:[%s2911 + $0x54] sm:$0xf]
        %v2934 = vld [vmem:[%s2911 + $0x58] sm:$0xf]
        %v2935 = vld [vmem:[%s2911 + $0x5c] sm:$0xf]
        %v2936 = vld [vmem:[%s2911 + $0x60] sm:$0xf]
        %v2937 = vld [vmem:[%s2911 + $0x64] sm:$0xf]
        %v2938 = vld [vmem:[%s2911 + $0x68] sm:$0xf]
        %v2939 = vld [vmem:[%s2911 + $0x6c] sm:$0xf]
        %v2940 = vld [vmem:[%s2911 + $0x70] sm:$0xf]
        %v2941 = vld [vmem:[%s2911 + $0x74] sm:$0xf]
        %v2942 = vld [vmem:[%s2911 + $0x78] sm:$0xf]
        %v2943 = vld [vmem:[%s2911 + $0x7c] sm:$0xf]
        %v2944 = vunpack.c.l.b16 %v2874
        %v2945 = vunpack.c.h.b16 %v2874
        %v2946 = vunpack.c.l.b16 %v2878
        %v2947 = vunpack.c.h.b16 %v2878
        %v2948 = vunpack.c.l.b16 %v2882
        %v2949 = vunpack.c.h.b16 %v2882
        %v2950 = vunpack.c.l.b16 %v2886
        %v2951 = vunpack.c.h.b16 %v2886
        %v2952 = vunpack.c.l.b16 %v2890
        %v2953 = vunpack.c.h.b16 %v2890
        %v2954 = vunpack.c.l.b16 %v2894
        %v2955 = vunpack.c.h.b16 %v2894
        %v2956 = vunpack.c.l.b16 %v2898
        %v2957 = vunpack.c.h.b16 %v2898
        %v2958 = vunpack.c.l.b16 %v2902
        %v2959 = vunpack.c.h.b16 %v2902
        %v2960 = vunpack.c.l.b16 %v2906
        %v2961 = vunpack.c.h.b16 %v2906
        %v2962 = vunpack.c.l.b16 %v2910
        %v2963 = vunpack.c.h.b16 %v2910
        %v2964 = vpack.c.b16 %v2946, %v2944
        %v2965 = vpack.c.b16 %v2947, %v2945
        %v2966 = vpack.c.b16 %v2950, %v2948
        %v2967 = vpack.c.b16 %v2951, %v2949
        %v2968 = vpack.c.b16 %v2954, %v2952
        %v2969 = vpack.c.b16 %v2955, %v2953
        %v2970 = vpack.c.b16 %v2958, %v2956
        %v2971 = vpack.c.b16 %v2959, %v2957
        %v2972 = vpack.c.b16 %v2962, %v2960
        %v2973 = vpack.c.b16 %v2963, %v2961
        %v3016 = vunpack.c.l.b16 %v2912
        %v3017 = vunpack.c.l.b16 %v2913
        %v3018 = vunpack.c.l.b16 %v2914
        %v3019 = vunpack.c.l.b16 %v2915
        %v3020 = vunpack.c.l.b16 %v2916
        %v3021 = vunpack.c.l.b16 %v2917
        %v3022 = vunpack.c.l.b16 %v2918
        %v3023 = vunpack.c.l.b16 %v2919
        %v3024 = vunpack.c.l.b16 %v2920
        %v3025 = vunpack.c.l.b16 %v2921
        %v3026 = vunpack.c.l.b16 %v2922
        %v3027 = vunpack.c.l.b16 %v2923
        %v3028 = vunpack.c.l.b16 %v2924
        %v3029 = vunpack.c.l.b16 %v2925
        %v3030 = vunpack.c.l.b16 %v2926
        %v3031 = vunpack.c.l.b16 %v2927
        %v3032 = vunpack.c.l.b16 %v2928
        %v3033 = vunpack.c.l.b16 %v2929
        %v3034 = vunpack.c.l.b16 %v2930
        %v3035 = vunpack.c.l.b16 %v2931
        %v3036 = vunpack.c.l.b16 %v2932
        %v3037 = vunpack.c.l.b16 %v2933
        %v3038 = vunpack.c.l.b16 %v2934
        %v3039 = vunpack.c.l.b16 %v2935
        %v3040 = vunpack.c.l.b16 %v2936
        %v3041 = vunpack.c.l.b16 %v2937
        %v3042 = vunpack.c.l.b16 %v2938
        %v3043 = vunpack.c.l.b16 %v2939
        %v3044 = vunpack.c.l.b16 %v2940
        %v3045 = vunpack.c.l.b16 %v2941
        %v3046 = vunpack.c.l.b16 %v2942
        %v3047 = vunpack.c.l.b16 %v2943
        %v3048 = vpack.c.b16 %v3017, %v3016
        %v3049 = vpack.c.b16 %v3019, %v3018
        %v3050 = vpack.c.b16 %v3021, %v3020
        %v3051 = vpack.c.b16 %v3023, %v3022
        %v3052 = vpack.c.b16 %v3025, %v3024
        %v3053 = vpack.c.b16 %v3027, %v3026
        %v3054 = vpack.c.b16 %v3029, %v3028
        %v3055 = vpack.c.b16 %v3031, %v3030
        %v3056 = vpack.c.b16 %v3033, %v3032
        %v3057 = vpack.c.b16 %v3035, %v3034
        %v3058 = vpack.c.b16 %v3037, %v3036
        %v3059 = vpack.c.b16 %v3039, %v3038
        %v3060 = vpack.c.b16 %v3041, %v3040
        %v3061 = vpack.c.b16 %v3043, %v3042
        %v3062 = vpack.c.b16 %v3045, %v3044
        %v3063 = vpack.c.b16 %v3047, %v3046
        %3080 = vmatprep.subr.bf16.mxu0 0
        %3081 = vmatpush1.bf16.msra.mxu0 %v3055
        %3082 = vmatprep.subr.bf16.mxu0 0
        %3083 = vmatpush1.bf16.msra.mxu0 %v3054
        %3084 = vmatprep.subr.bf16.mxu0 0
        %3085 = vmatpush1.bf16.msra.mxu0 %v3053
        %3086 = vmatprep.subr.bf16.mxu0 0
        %3087 = vmatpush1.bf16.msra.mxu0 %v3052
        %3088 = vmatprep.subr.bf16.mxu0 0
        %3089 = vmatpush1.bf16.msra.mxu0 %v3051
        %3090 = vmatprep.subr.bf16.mxu0 0
        %3091 = vmatpush1.bf16.msra.mxu0 %v3050
        %3092 = vmatprep.subr.bf16.mxu0 0
        %3093 = vmatpush1.bf16.msra.mxu0 %v3049
        %3094 = vmatprep.subr.bf16.mxu0 0
        %3095 = vmatpush1.bf16.msra.mxu0 %v3048
        %3096 = vmatprep.subr.bf16.mxu0 0
        %3097 = vmatpush2.bf16.msra.mxu0 %v3063
        %3098 = vmatprep.subr.bf16.mxu0 0
        %3099 = vmatpush2.bf16.msra.mxu0 %v3062
        %3100 = vmatprep.subr.bf16.mxu0 0
        %3101 = vmatpush2.bf16.msra.mxu0 %v3061
        %3102 = vmatprep.subr.bf16.mxu0 0
        %3103 = vmatpush2.bf16.msra.mxu0 %v3060
        %3104 = vmatprep.subr.bf16.mxu0 0
        %3105 = vmatpush2.bf16.msra.mxu0 %v3059
        %3106 = vmatprep.subr.bf16.mxu0 0
        %3107 = vmatpush2.bf16.msra.mxu0 %v3058
        %3108 = vmatprep.subr.bf16.mxu0 0
        %3109 = vmatpush2.bf16.msra.mxu0 %v3057
        %3110 = vmatprep.subr.bf16.mxu0 0
        %3111 = vmatpush2.bf16.msra.mxu0 %v3056
        %3112 = vmatprep.mubr.bf16.mxu0 %v2965
        %3113 = vmatmul.mubr.bf16.gmra.mxu0 %v2964
        %v3114 = vpop.f32.mrf.mxu0
        %v3115 = vadd.f32 0.0, %v3114
        %v3116 = vpop.f32.mrf.mxu0
        %v3117 = vpop.f32.mrf.mxu0
        %v3118 = vadd.f32 0.0, %v3117
        %v3119 = vpop.f32.mrf.mxu0
        %3120 = vmatprep.mubr.bf16.mxu0 %v2967
        %3121 = vmatmul.mubr.bf16.gmra.mxu0 %v2966
        %v3122 = vpop.f32.mrf.mxu0
        %v3123 = vadd.f32 0.0, %v3122
        %v3124 = vpop.f32.mrf.mxu0
        %v3125 = vpop.f32.mrf.mxu0
        %v3126 = vadd.f32 0.0, %v3125
        %v3127 = vpop.f32.mrf.mxu0
        %3128 = vmatprep.mubr.bf16.mxu0 %v2969
        %3129 = vmatmul.mubr.bf16.gmra.mxu0 %v2968
        %v3130 = vpop.f32.mrf.mxu0
        %v3131 = vadd.f32 0.0, %v3130
        %v3132 = vpop.f32.mrf.mxu0
        %v3133 = vpop.f32.mrf.mxu0
        %v3134 = vadd.f32 0.0, %v3133
        %v3135 = vpop.f32.mrf.mxu0
        %3136 = vmatprep.mubr.bf16.mxu0 %v2971
        %3137 = vmatmul.mubr.bf16.gmra.mxu0 %v2970
        %v3138 = vpop.f32.mrf.mxu0
        %v3139 = vadd.f32 0.0, %v3138
        %v3140 = vpop.f32.mrf.mxu0
        %v3141 = vpop.f32.mrf.mxu0
        %v3142 = vadd.f32 0.0, %v3141
        %v3143 = vpop.f32.mrf.mxu0
        %3144 = vmatprep.mubr.bf16.mxu0 %v2973
        %3145 = vmatmul.mubr.bf16.gmra.mxu0 %v2972
        %v3146 = vpop.f32.mrf.mxu0
        %v3147 = vadd.f32 0.0, %v3146
        %v3148 = vpop.f32.mrf.mxu0
        %v3149 = vpop.f32.mrf.mxu0
        %v3150 = vadd.f32 0.0, %v3149
        %v3151 = vpop.f32.mrf.mxu0
        %3152 = vdwg.mxu0
        %v3153 = vadd.f32 %v2831, %v3115
        %v3154 = vadd.f32 %v2832, %v3118
        %v3155 = vadd.f32 %v2833, %v3123
        %v3156 = vadd.f32 %v2834, %v3126
        %v3157 = vadd.f32 %v2835, %v3131
        %v3158 = vadd.f32 %v2836, %v3134
        %v3159 = vadd.f32 %v2837, %v3139
        %v3160 = vadd.f32 %v2838, %v3142
        %v3161 = vadd.f32 %v2839, %v3147
        %v3162 = vadd.f32 %v2840, %v3150
        %s3163 = scalar_lea.vmem [#allocation4], 32
        %v3164 = vld [vmem:[%s3163] sm:$0xff]
        %v3165 = vld [vmem:[%s3163 + $0x10] sm:$0xff]
        %v3166 = vld [vmem:[%s3163 + $0x20] sm:$0xff]
        %v3167 = vld [vmem:[%s3163 + $0x30] sm:$0xff]
        %v3168 = vld [vmem:[%s3163 + $0x40] sm:$0xff]
        %v3169 = vld [vmem:[%s3163 + $0x50] sm:$0xff]
        %v3170 = vld [vmem:[%s3163 + $0x60] sm:$0xff]
        %v3171 = vld [vmem:[%s3163 + $0x70] sm:$0xff]
        %v3172 = vld [vmem:[%s3163 + $0x80] sm:$0xff]
        %v3173 = vld [vmem:[%s3163 + $0x90] sm:$0xff]
        %s3174 = scalar_lea.vmem [#allocation7], 768
        %v3175 = vld [vmem:[%s3174] sm:$0xf]
        %v3176 = vld [vmem:[%s3174 + $0x4] sm:$0xf]
        %v3177 = vld [vmem:[%s3174 + $0x8] sm:$0xf]
        %v3178 = vld [vmem:[%s3174 + $0xc] sm:$0xf]
        %v3179 = vld [vmem:[%s3174 + $0x10] sm:$0xf]
        %v3180 = vld [vmem:[%s3174 + $0x14] sm:$0xf]
        %v3181 = vld [vmem:[%s3174 + $0x18] sm:$0xf]
        %v3182 = vld [vmem:[%s3174 + $0x1c] sm:$0xf]
        %v3183 = vld [vmem:[%s3174 + $0x20] sm:$0xf]
        %v3184 = vld [vmem:[%s3174 + $0x24] sm:$0xf]
        %v3185 = vld [vmem:[%s3174 + $0x28] sm:$0xf]
        %v3186 = vld [vmem:[%s3174 + $0x2c] sm:$0xf]
        %v3187 = vld [vmem:[%s3174 + $0x30] sm:$0xf]
        %v3188 = vld [vmem:[%s3174 + $0x34] sm:$0xf]
        %v3189 = vld [vmem:[%s3174 + $0x38] sm:$0xf]
        %v3190 = vld [vmem:[%s3174 + $0x3c] sm:$0xf]
        %v3191 = vld [vmem:[%s3174 + $0x40] sm:$0xf]
        %v3192 = vld [vmem:[%s3174 + $0x44] sm:$0xf]
        %v3193 = vld [vmem:[%s3174 + $0x48] sm:$0xf]
        %v3194 = vld [vmem:[%s3174 + $0x4c] sm:$0xf]
        %v3195 = vld [vmem:[%s3174 + $0x50] sm:$0xf]
        %v3196 = vld [vmem:[%s3174 + $0x54] sm:$0xf]
        %v3197 = vld [vmem:[%s3174 + $0x58] sm:$0xf]
        %v3198 = vld [vmem:[%s3174 + $0x5c] sm:$0xf]
        %v3199 = vld [vmem:[%s3174 + $0x60] sm:$0xf]
        %v3200 = vld [vmem:[%s3174 + $0x64] sm:$0xf]
        %v3201 = vld [vmem:[%s3174 + $0x68] sm:$0xf]
        %v3202 = vld [vmem:[%s3174 + $0x6c] sm:$0xf]
        %v3203 = vld [vmem:[%s3174 + $0x70] sm:$0xf]
        %v3204 = vld [vmem:[%s3174 + $0x74] sm:$0xf]
        %v3205 = vld [vmem:[%s3174 + $0x78] sm:$0xf]
        %v3206 = vld [vmem:[%s3174 + $0x7c] sm:$0xf]
        %v3217 = vunpack.c.l.b16 %v3164
        %v3218 = vunpack.c.h.b16 %v3164
        %v3219 = vunpack.c.l.b16 %v3165
        %v3220 = vunpack.c.h.b16 %v3165
        %v3221 = vunpack.c.l.b16 %v3166
        %v3222 = vunpack.c.h.b16 %v3166
        %v3223 = vunpack.c.l.b16 %v3167
        %v3224 = vunpack.c.h.b16 %v3167
        %v3225 = vunpack.c.l.b16 %v3168
        %v3226 = vunpack.c.h.b16 %v3168
        %v3227 = vunpack.c.l.b16 %v3169
        %v3228 = vunpack.c.h.b16 %v3169
        %v3229 = vunpack.c.l.b16 %v3170
        %v3230 = vunpack.c.h.b16 %v3170
        %v3231 = vunpack.c.l.b16 %v3171
        %v3232 = vunpack.c.h.b16 %v3171
        %v3233 = vunpack.c.l.b16 %v3172
        %v3234 = vunpack.c.h.b16 %v3172
        %v3235 = vunpack.c.l.b16 %v3173
        %v3236 = vunpack.c.h.b16 %v3173
        %v3237 = vpack.c.b16 %v3219, %v3217
        %v3238 = vpack.c.b16 %v3220, %v3218
        %v3239 = vpack.c.b16 %v3223, %v3221
        %v3240 = vpack.c.b16 %v3224, %v3222
        %v3241 = vpack.c.b16 %v3227, %v3225
        %v3242 = vpack.c.b16 %v3228, %v3226
        %v3243 = vpack.c.b16 %v3231, %v3229
        %v3244 = vpack.c.b16 %v3232, %v3230
        %v3245 = vpack.c.b16 %v3235, %v3233
        %v3246 = vpack.c.b16 %v3236, %v3234
        %v3289 = vunpack.c.l.b16 %v3175
        %v3290 = vunpack.c.l.b16 %v3176
        %v3291 = vunpack.c.l.b16 %v3177
        %v3292 = vunpack.c.l.b16 %v3178
        %v3293 = vunpack.c.l.b16 %v3179
        %v3294 = vunpack.c.l.b16 %v3180
        %v3295 = vunpack.c.l.b16 %v3181
        %v3296 = vunpack.c.l.b16 %v3182
        %v3297 = vunpack.c.l.b16 %v3183
        %v3298 = vunpack.c.l.b16 %v3184
        %v3299 = vunpack.c.l.b16 %v3185
        %v3300 = vunpack.c.l.b16 %v3186
        %v3301 = vunpack.c.l.b16 %v3187
        %v3302 = vunpack.c.l.b16 %v3188
        %v3303 = vunpack.c.l.b16 %v3189
        %v3304 = vunpack.c.l.b16 %v3190
        %v3305 = vunpack.c.l.b16 %v3191
        %v3306 = vunpack.c.l.b16 %v3192
        %v3307 = vunpack.c.l.b16 %v3193
        %v3308 = vunpack.c.l.b16 %v3194
        %v3309 = vunpack.c.l.b16 %v3195
        %v3310 = vunpack.c.l.b16 %v3196
        %v3311 = vunpack.c.l.b16 %v3197
        %v3312 = vunpack.c.l.b16 %v3198
        %v3313 = vunpack.c.l.b16 %v3199
        %v3314 = vunpack.c.l.b16 %v3200
        %v3315 = vunpack.c.l.b16 %v3201
        %v3316 = vunpack.c.l.b16 %v3202
        %v3317 = vunpack.c.l.b16 %v3203
        %v3318 = vunpack.c.l.b16 %v3204
        %v3319 = vunpack.c.l.b16 %v3205
        %v3320 = vunpack.c.l.b16 %v3206
        %v3321 = vpack.c.b16 %v3290, %v3289
        %v3322 = vpack.c.b16 %v3292, %v3291
        %v3323 = vpack.c.b16 %v3294, %v3293
        %v3324 = vpack.c.b16 %v3296, %v3295
        %v3325 = vpack.c.b16 %v3298, %v3297
        %v3326 = vpack.c.b16 %v3300, %v3299
        %v3327 = vpack.c.b16 %v3302, %v3301
        %v3328 = vpack.c.b16 %v3304, %v3303
        %v3329 = vpack.c.b16 %v3306, %v3305
        %v3330 = vpack.c.b16 %v3308, %v3307
        %v3331 = vpack.c.b16 %v3310, %v3309
        %v3332 = vpack.c.b16 %v3312, %v3311
        %v3333 = vpack.c.b16 %v3314, %v3313
        %v3334 = vpack.c.b16 %v3316, %v3315
        %v3335 = vpack.c.b16 %v3318, %v3317
        %v3336 = vpack.c.b16 %v3320, %v3319
        %3353 = vmatprep.subr.bf16.mxu0 0
        %3354 = vmatpush1.bf16.msra.mxu0 %v3328
        %3355 = vmatprep.subr.bf16.mxu0 0
        %3356 = vmatpush1.bf16.msra.mxu0 %v3327
        %3357 = vmatprep.subr.bf16.mxu0 0
        %3358 = vmatpush1.bf16.msra.mxu0 %v3326
        %3359 = vmatprep.subr.bf16.mxu0 0
        %3360 = vmatpush1.bf16.msra.mxu0 %v3325
        %3361 = vmatprep.subr.bf16.mxu0 0
        %3362 = vmatpush1.bf16.msra.mxu0 %v3324
        %3363 = vmatprep.subr.bf16.mxu0 0
        %3364 = vmatpush1.bf16.msra.mxu0 %v3323
        %3365 = vmatprep.subr.bf16.mxu0 0
        %3366 = vmatpush1.bf16.msra.mxu0 %v3322
        %3367 = vmatprep.subr.bf16.mxu0 0
        %3368 = vmatpush1.bf16.msra.mxu0 %v3321
        %3369 = vmatprep.subr.bf16.mxu0 0
        %3370 = vmatpush2.bf16.msra.mxu0 %v3336
        %3371 = vmatprep.subr.bf16.mxu0 0
        %3372 = vmatpush2.bf16.msra.mxu0 %v3335
        %3373 = vmatprep.subr.bf16.mxu0 0
        %3374 = vmatpush2.bf16.msra.mxu0 %v3334
        %3375 = vmatprep.subr.bf16.mxu0 0
        %3376 = vmatpush2.bf16.msra.mxu0 %v3333
        %3377 = vmatprep.subr.bf16.mxu0 0
        %3378 = vmatpush2.bf16.msra.mxu0 %v3332
        %3379 = vmatprep.subr.bf16.mxu0 0
        %3380 = vmatpush2.bf16.msra.mxu0 %v3331
        %3381 = vmatprep.subr.bf16.mxu0 0
        %3382 = vmatpush2.bf16.msra.mxu0 %v3330
        %3383 = vmatprep.subr.bf16.mxu0 0
        %3384 = vmatpush2.bf16.msra.mxu0 %v3329
        %3385 = vmatprep.mubr.bf16.mxu0 %v3238
        %3386 = vmatmul.mubr.bf16.gmra.mxu0 %v3237
        %v3387 = vpop.f32.mrf.mxu0
        %v3388 = vadd.f32 0.0, %v3387
        %v3389 = vpop.f32.mrf.mxu0
        %v3390 = vpop.f32.mrf.mxu0
        %v3391 = vadd.f32 0.0, %v3390
        %v3392 = vpop.f32.mrf.mxu0
        %3393 = vmatprep.mubr.bf16.mxu0 %v3240
        %3394 = vmatmul.mubr.bf16.gmra.mxu0 %v3239
        %v3395 = vpop.f32.mrf.mxu0
        %v3396 = vadd.f32 0.0, %v3395
        %v3397 = vpop.f32.mrf.mxu0
        %v3398 = vpop.f32.mrf.mxu0
        %v3399 = vadd.f32 0.0, %v3398
        %v3400 = vpop.f32.mrf.mxu0
        %3401 = vmatprep.mubr.bf16.mxu0 %v3242
        %3402 = vmatmul.mubr.bf16.gmra.mxu0 %v3241
        %v3403 = vpop.f32.mrf.mxu0
        %v3404 = vadd.f32 0.0, %v3403
        %v3405 = vpop.f32.mrf.mxu0
        %v3406 = vpop.f32.mrf.mxu0
        %v3407 = vadd.f32 0.0, %v3406
        %v3408 = vpop.f32.mrf.mxu0
        %3409 = vmatprep.mubr.bf16.mxu0 %v3244
        %3410 = vmatmul.mubr.bf16.gmra.mxu0 %v3243
        %v3411 = vpop.f32.mrf.mxu0
        %v3412 = vadd.f32 0.0, %v3411
        %v3413 = vpop.f32.mrf.mxu0
        %v3414 = vpop.f32.mrf.mxu0
        %v3415 = vadd.f32 0.0, %v3414
        %v3416 = vpop.f32.mrf.mxu0
        %3417 = vmatprep.mubr.bf16.mxu0 %v3246
        %3418 = vmatmul.mubr.bf16.gmra.mxu0 %v3245
        %v3419 = vpop.f32.mrf.mxu0
        %v3420 = vadd.f32 0.0, %v3419
        %v3421 = vpop.f32.mrf.mxu0
        %v3422 = vpop.f32.mrf.mxu0
        %v3423 = vadd.f32 0.0, %v3422
        %v3424 = vpop.f32.mrf.mxu0
        %3425 = vdwg.mxu0
        %v3426 = vadd.f32 %v3153, %v3388
        %v3427 = vadd.f32 %v3154, %v3391
        %v3428 = vadd.f32 %v3155, %v3396
        %v3429 = vadd.f32 %v3156, %v3399
        %v3430 = vadd.f32 %v3157, %v3404
        %v3431 = vadd.f32 %v3158, %v3407
        %v3432 = vadd.f32 %v3159, %v3412
        %v3433 = vadd.f32 %v3160, %v3415
        %v3434 = vadd.f32 %v3161, %v3420
        %v3435 = vadd.f32 %v3162, %v3423
        %v3436 = vld [vmem:[%s3163] sm:$0xff]
        %v3437 = vld [vmem:[%s3163 + $0x8] sm:$0x11]
        %v3438 = vld [vmem:[%s3163 + $0x10] sm:$0xff]
        %v3439 = vld [vmem:[%s3163 + $0x18] sm:$0x11]
        %v3440 = vld [vmem:[%s3163 + $0x20] sm:$0xff]
        %v3441 = vld [vmem:[%s3163 + $0x28] sm:$0x11]
        %v3442 = vld [vmem:[%s3163 + $0x30] sm:$0xff]
        %v3443 = vld [vmem:[%s3163 + $0x38] sm:$0x11]
        %v3444 = vld [vmem:[%s3163 + $0x40] sm:$0xff]
        %v3445 = vld [vmem:[%s3163 + $0x48] sm:$0x11]
        %v3446 = vld [vmem:[%s3163 + $0x50] sm:$0xff]
        %v3447 = vld [vmem:[%s3163 + $0x58] sm:$0x11]
        %v3448 = vld [vmem:[%s3163 + $0x60] sm:$0xff]
        %v3449 = vld [vmem:[%s3163 + $0x68] sm:$0x11]
        %v3450 = vld [vmem:[%s3163 + $0x70] sm:$0xff]
        %v3451 = vld [vmem:[%s3163 + $0x78] sm:$0x11]
        %v3452 = vld [vmem:[%s3163 + $0x80] sm:$0xff]
        %v3453 = vld [vmem:[%s3163 + $0x88] sm:$0x11]
        %v3454 = vld [vmem:[%s3163 + $0x90] sm:$0xff]
        %v3455 = vld [vmem:[%s3163 + $0x98] sm:$0x11]
        %v3457 = vshrl.u32 %v3436, 16
        %v3459 = vrot.slane %v3457, 4
        %v3460 = vshll.u32 %v3436, 16
        %v3462 = vrot.slane %v3460, 5
        %v3463 = vor.u32 %v3459, %v3462
        %v3464 = vrot.slane %v3463, 4
        %v3466 = vshll.u32 %v3437, 16
        %v3468 = vrot.slane %v3466, 5
        %v3469 = vsel %vm1229, %v3464, %v3468
        %v3471 = vshrl.u32 %v3438, 16
        %v3473 = vrot.slane %v3471, 4
        %v3474 = vshll.u32 %v3438, 16
        %v3476 = vrot.slane %v3474, 5
        %v3477 = vor.u32 %v3473, %v3476
        %v3478 = vrot.slane %v3477, 4
        %v3480 = vshll.u32 %v3439, 16
        %v3482 = vrot.slane %v3480, 5
        %v3483 = vsel %vm1229, %v3478, %v3482
        %v3485 = vshrl.u32 %v3440, 16
        %v3487 = vrot.slane %v3485, 4
        %v3488 = vshll.u32 %v3440, 16
        %v3490 = vrot.slane %v3488, 5
        %v3491 = vor.u32 %v3487, %v3490
        %v3492 = vrot.slane %v3491, 4
        %v3494 = vshll.u32 %v3441, 16
        %v3496 = vrot.slane %v3494, 5
        %v3497 = vsel %vm1229, %v3492, %v3496
        %v3499 = vshrl.u32 %v3442, 16
        %v3501 = vrot.slane %v3499, 4
        %v3502 = vshll.u32 %v3442, 16
        %v3504 = vrot.slane %v3502, 5
        %v3505 = vor.u32 %v3501, %v3504
        %v3506 = vrot.slane %v3505, 4
        %v3508 = vshll.u32 %v3443, 16
        %v3510 = vrot.slane %v3508, 5
        %v3511 = vsel %vm1229, %v3506, %v3510
        %v3513 = vshrl.u32 %v3444, 16
        %v3515 = vrot.slane %v3513, 4
        %v3516 = vshll.u32 %v3444, 16
        %v3518 = vrot.slane %v3516, 5
        %v3519 = vor.u32 %v3515, %v3518
        %v3520 = vrot.slane %v3519, 4
        %v3522 = vshll.u32 %v3445, 16
        %v3524 = vrot.slane %v3522, 5
        %v3525 = vsel %vm1229, %v3520, %v3524
        %v3527 = vshrl.u32 %v3446, 16
        %v3529 = vrot.slane %v3527, 4
        %v3530 = vshll.u32 %v3446, 16
        %v3532 = vrot.slane %v3530, 5
        %v3533 = vor.u32 %v3529, %v3532
        %v3534 = vrot.slane %v3533, 4
        %v3536 = vshll.u32 %v3447, 16
        %v3538 = vrot.slane %v3536, 5
        %v3539 = vsel %vm1229, %v3534, %v3538
        %v3541 = vshrl.u32 %v3448, 16
        %v3543 = vrot.slane %v3541, 4
        %v3544 = vshll.u32 %v3448, 16
        %v3546 = vrot.slane %v3544, 5
        %v3547 = vor.u32 %v3543, %v3546
        %v3548 = vrot.slane %v3547, 4
        %v3550 = vshll.u32 %v3449, 16
        %v3552 = vrot.slane %v3550, 5
        %v3553 = vsel %vm1229, %v3548, %v3552
        %v3555 = vshrl.u32 %v3450, 16
        %v3557 = vrot.slane %v3555, 4
        %v3558 = vshll.u32 %v3450, 16
        %v3560 = vrot.slane %v3558, 5
        %v3561 = vor.u32 %v3557, %v3560
        %v3562 = vrot.slane %v3561, 4
        %v3564 = vshll.u32 %v3451, 16
        %v3566 = vrot.slane %v3564, 5
        %v3567 = vsel %vm1229, %v3562, %v3566
        %v3569 = vshrl.u32 %v3452, 16
        %v3571 = vrot.slane %v3569, 4
        %v3572 = vshll.u32 %v3452, 16
        %v3574 = vrot.slane %v3572, 5
        %v3575 = vor.u32 %v3571, %v3574
        %v3576 = vrot.slane %v3575, 4
        %v3578 = vshll.u32 %v3453, 16
        %v3580 = vrot.slane %v3578, 5
        %v3581 = vsel %vm1229, %v3576, %v3580
        %v3583 = vshrl.u32 %v3454, 16
        %v3585 = vrot.slane %v3583, 4
        %v3586 = vshll.u32 %v3454, 16
        %v3588 = vrot.slane %v3586, 5
        %v3589 = vor.u32 %v3585, %v3588
        %v3590 = vrot.slane %v3589, 4
        %v3592 = vshll.u32 %v3455, 16
        %v3594 = vrot.slane %v3592, 5
        %v3595 = vsel %vm1229, %v3590, %v3594
        %s3596 = scalar_lea.vmem [#allocation7], 896
        %v3597 = vld [vmem:[%s3596] sm:$0xf]
        %v3598 = vld [vmem:[%s3596 + $0x4] sm:$0xf]
        %v3599 = vld [vmem:[%s3596 + $0x8] sm:$0xf]
        %v3600 = vld [vmem:[%s3596 + $0xc] sm:$0xf]
        %v3601 = vld [vmem:[%s3596 + $0x10] sm:$0xf]
        %v3602 = vld [vmem:[%s3596 + $0x14] sm:$0xf]
        %v3603 = vld [vmem:[%s3596 + $0x18] sm:$0xf]
        %v3604 = vld [vmem:[%s3596 + $0x1c] sm:$0xf]
        %v3605 = vld [vmem:[%s3596 + $0x20] sm:$0xf]
        %v3606 = vld [vmem:[%s3596 + $0x24] sm:$0xf]
        %v3607 = vld [vmem:[%s3596 + $0x28] sm:$0xf]
        %v3608 = vld [vmem:[%s3596 + $0x2c] sm:$0xf]
        %v3609 = vld [vmem:[%s3596 + $0x30] sm:$0xf]
        %v3610 = vld [vmem:[%s3596 + $0x34] sm:$0xf]
        %v3611 = vld [vmem:[%s3596 + $0x38] sm:$0xf]
        %v3612 = vld [vmem:[%s3596 + $0x3c] sm:$0xf]
        %v3613 = vld [vmem:[%s3596 + $0x40] sm:$0xf]
        %v3614 = vld [vmem:[%s3596 + $0x44] sm:$0xf]
        %v3615 = vld [vmem:[%s3596 + $0x48] sm:$0xf]
        %v3616 = vld [vmem:[%s3596 + $0x4c] sm:$0xf]
        %v3617 = vld [vmem:[%s3596 + $0x50] sm:$0xf]
        %v3618 = vld [vmem:[%s3596 + $0x54] sm:$0xf]
        %v3619 = vld [vmem:[%s3596 + $0x58] sm:$0xf]
        %v3620 = vld [vmem:[%s3596 + $0x5c] sm:$0xf]
        %v3621 = vld [vmem:[%s3596 + $0x60] sm:$0xf]
        %v3622 = vld [vmem:[%s3596 + $0x64] sm:$0xf]
        %v3623 = vld [vmem:[%s3596 + $0x68] sm:$0xf]
        %v3624 = vld [vmem:[%s3596 + $0x6c] sm:$0xf]
        %v3625 = vld [vmem:[%s3596 + $0x70] sm:$0xf]
        %v3626 = vld [vmem:[%s3596 + $0x74] sm:$0xf]
        %v3627 = vld [vmem:[%s3596 + $0x78] sm:$0xf]
        %v3628 = vld [vmem:[%s3596 + $0x7c] sm:$0xf]
        %v3629 = vunpack.c.l.b16 %v3469
        %v3630 = vunpack.c.h.b16 %v3469
        %v3631 = vunpack.c.l.b16 %v3483
        %v3632 = vunpack.c.h.b16 %v3483
        %v3633 = vunpack.c.l.b16 %v3497
        %v3634 = vunpack.c.h.b16 %v3497
        %v3635 = vunpack.c.l.b16 %v3511
        %v3636 = vunpack.c.h.b16 %v3511
        %v3637 = vunpack.c.l.b16 %v3525
        %v3638 = vunpack.c.h.b16 %v3525
        %v3639 = vunpack.c.l.b16 %v3539
        %v3640 = vunpack.c.h.b16 %v3539
        %v3641 = vunpack.c.l.b16 %v3553
        %v3642 = vunpack.c.h.b16 %v3553
        %v3643 = vunpack.c.l.b16 %v3567
        %v3644 = vunpack.c.h.b16 %v3567
        %v3645 = vunpack.c.l.b16 %v3581
        %v3646 = vunpack.c.h.b16 %v3581
        %v3647 = vunpack.c.l.b16 %v3595
        %v3648 = vunpack.c.h.b16 %v3595
        %v3649 = vpack.c.b16 %v3631, %v3629
        %v3650 = vpack.c.b16 %v3632, %v3630
        %v3651 = vpack.c.b16 %v3635, %v3633
        %v3652 = vpack.c.b16 %v3636, %v3634
        %v3653 = vpack.c.b16 %v3639, %v3637
        %v3654 = vpack.c.b16 %v3640, %v3638
        %v3655 = vpack.c.b16 %v3643, %v3641
        %v3656 = vpack.c.b16 %v3644, %v3642
        %v3657 = vpack.c.b16 %v3647, %v3645
        %v3658 = vpack.c.b16 %v3648, %v3646
        %v3701 = vunpack.c.l.b16 %v3597
        %v3702 = vunpack.c.l.b16 %v3598
        %v3703 = vunpack.c.l.b16 %v3599
        %v3704 = vunpack.c.l.b16 %v3600
        %v3705 = vunpack.c.l.b16 %v3601
        %v3706 = vunpack.c.l.b16 %v3602
        %v3707 = vunpack.c.l.b16 %v3603
        %v3708 = vunpack.c.l.b16 %v3604
        %v3709 = vunpack.c.l.b16 %v3605
        %v3710 = vunpack.c.l.b16 %v3606
        %v3711 = vunpack.c.l.b16 %v3607
        %v3712 = vunpack.c.l.b16 %v3608
        %v3713 = vunpack.c.l.b16 %v3609
        %v3714 = vunpack.c.l.b16 %v3610
        %v3715 = vunpack.c.l.b16 %v3611
        %v3716 = vunpack.c.l.b16 %v3612
        %v3717 = vunpack.c.l.b16 %v3613
        %v3718 = vunpack.c.l.b16 %v3614
        %v3719 = vunpack.c.l.b16 %v3615
        %v3720 = vunpack.c.l.b16 %v3616
        %v3721 = vunpack.c.l.b16 %v3617
        %v3722 = vunpack.c.l.b16 %v3618
        %v3723 = vunpack.c.l.b16 %v3619
        %v3724 = vunpack.c.l.b16 %v3620
        %v3725 = vunpack.c.l.b16 %v3621
        %v3726 = vunpack.c.l.b16 %v3622
        %v3727 = vunpack.c.l.b16 %v3623
        %v3728 = vunpack.c.l.b16 %v3624
        %v3729 = vunpack.c.l.b16 %v3625
        %v3730 = vunpack.c.l.b16 %v3626
        %v3731 = vunpack.c.l.b16 %v3627
        %v3732 = vunpack.c.l.b16 %v3628
        %v3733 = vpack.c.b16 %v3702, %v3701
        %v3734 = vpack.c.b16 %v3704, %v3703
        %v3735 = vpack.c.b16 %v3706, %v3705
        %v3736 = vpack.c.b16 %v3708, %v3707
        %v3737 = vpack.c.b16 %v3710, %v3709
        %v3738 = vpack.c.b16 %v3712, %v3711
        %v3739 = vpack.c.b16 %v3714, %v3713
        %v3740 = vpack.c.b16 %v3716, %v3715
        %v3741 = vpack.c.b16 %v3718, %v3717
        %v3742 = vpack.c.b16 %v3720, %v3719
        %v3743 = vpack.c.b16 %v3722, %v3721
        %v3744 = vpack.c.b16 %v3724, %v3723
        %v3745 = vpack.c.b16 %v3726, %v3725
        %v3746 = vpack.c.b16 %v3728, %v3727
        %v3747 = vpack.c.b16 %v3730, %v3729
        %v3748 = vpack.c.b16 %v3732, %v3731
        %3765 = vmatprep.subr.bf16.mxu0 0
        %3766 = vmatpush1.bf16.msra.mxu0 %v3740
        %3767 = vmatprep.subr.bf16.mxu0 0
        %3768 = vmatpush1.bf16.msra.mxu0 %v3739
        %3769 = vmatprep.subr.bf16.mxu0 0
        %3770 = vmatpush1.bf16.msra.mxu0 %v3738
        %3771 = vmatprep.subr.bf16.mxu0 0
        %3772 = vmatpush1.bf16.msra.mxu0 %v3737
        %3773 = vmatprep.subr.bf16.mxu0 0
        %3774 = vmatpush1.bf16.msra.mxu0 %v3736
        %3775 = vmatprep.subr.bf16.mxu0 0
        %3776 = vmatpush1.bf16.msra.mxu0 %v3735
        %3777 = vmatprep.subr.bf16.mxu0 0
        %3778 = vmatpush1.bf16.msra.mxu0 %v3734
        %3779 = vmatprep.subr.bf16.mxu0 0
        %3780 = vmatpush1.bf16.msra.mxu0 %v3733
        %3781 = vmatprep.subr.bf16.mxu0 0
        %3782 = vmatpush2.bf16.msra.mxu0 %v3748
        %3783 = vmatprep.subr.bf16.mxu0 0
        %3784 = vmatpush2.bf16.msra.mxu0 %v3747
        %3785 = vmatprep.subr.bf16.mxu0 0
        %3786 = vmatpush2.bf16.msra.mxu0 %v3746
        %3787 = vmatprep.subr.bf16.mxu0 0
        %3788 = vmatpush2.bf16.msra.mxu0 %v3745
        %3789 = vmatprep.subr.bf16.mxu0 0
        %3790 = vmatpush2.bf16.msra.mxu0 %v3744
        %3791 = vmatprep.subr.bf16.mxu0 0
        %3792 = vmatpush2.bf16.msra.mxu0 %v3743
        %3793 = vmatprep.subr.bf16.mxu0 0
        %3794 = vmatpush2.bf16.msra.mxu0 %v3742
        %3795 = vmatprep.subr.bf16.mxu0 0
        %3796 = vmatpush2.bf16.msra.mxu0 %v3741
        %3797 = vmatprep.mubr.bf16.mxu0 %v3650
        %3798 = vmatmul.mubr.bf16.gmra.mxu0 %v3649
        %v3799 = vpop.f32.mrf.mxu0
        %v3800 = vadd.f32 0.0, %v3799
        %v3801 = vpop.f32.mrf.mxu0
        %v3802 = vpop.f32.mrf.mxu0
        %v3803 = vadd.f32 0.0, %v3802
        %v3804 = vpop.f32.mrf.mxu0
        %3805 = vmatprep.mubr.bf16.mxu0 %v3652
        %3806 = vmatmul.mubr.bf16.gmra.mxu0 %v3651
        %v3807 = vpop.f32.mrf.mxu0
        %v3808 = vadd.f32 0.0, %v3807
        %v3809 = vpop.f32.mrf.mxu0
        %v3810 = vpop.f32.mrf.mxu0
        %v3811 = vadd.f32 0.0, %v3810
        %v3812 = vpop.f32.mrf.mxu0
        %3813 = vmatprep.mubr.bf16.mxu0 %v3654
        %3814 = vmatmul.mubr.bf16.gmra.mxu0 %v3653
        %v3815 = vpop.f32.mrf.mxu0
        %v3816 = vadd.f32 0.0, %v3815
        %v3817 = vpop.f32.mrf.mxu0
        %v3818 = vpop.f32.mrf.mxu0
        %v3819 = vadd.f32 0.0, %v3818
        %v3820 = vpop.f32.mrf.mxu0
        %3821 = vmatprep.mubr.bf16.mxu0 %v3656
        %3822 = vmatmul.mubr.bf16.gmra.mxu0 %v3655
        %v3823 = vpop.f32.mrf.mxu0
        %v3824 = vadd.f32 0.0, %v3823
        %v3825 = vpop.f32.mrf.mxu0
        %v3826 = vpop.f32.mrf.mxu0
        %v3827 = vadd.f32 0.0, %v3826
        %v3828 = vpop.f32.mrf.mxu0
        %3829 = vmatprep.mubr.bf16.mxu0 %v3658
        %3830 = vmatmul.mubr.bf16.gmra.mxu0 %v3657
        %v3831 = vpop.f32.mrf.mxu0
        %v3832 = vadd.f32 0.0, %v3831
        %v3833 = vpop.f32.mrf.mxu0
        %v3834 = vpop.f32.mrf.mxu0
        %v3835 = vadd.f32 0.0, %v3834
        %v3836 = vpop.f32.mrf.mxu0
        %3837 = vdwg.mxu0
        %v3838 = vadd.f32 %v3426, %v3800
        %v3839 = vadd.f32 %v3427, %v3803
        %v3840 = vadd.f32 %v3428, %v3808
        %v3841 = vadd.f32 %v3429, %v3811
        %v3842 = vadd.f32 %v3430, %v3816
        %v3843 = vadd.f32 %v3431, %v3819
        %v3844 = vadd.f32 %v3432, %v3824
        %v3845 = vadd.f32 %v3433, %v3827
        %v3846 = vadd.f32 %v3434, %v3832
        %v3847 = vadd.f32 %v3435, %v3835
        %v3848 = vld [vmem:[%s3163] sm:$0xee]
        %v3849 = vld [vmem:[%s3163 + $0x10] sm:$0xee]
        %v3850 = vld [vmem:[%s3163 + $0x20] sm:$0xee]
        %v3851 = vld [vmem:[%s3163 + $0x30] sm:$0xee]
        %v3852 = vld [vmem:[%s3163 + $0x40] sm:$0xee]
        %v3853 = vld [vmem:[%s3163 + $0x50] sm:$0xee]
        %v3854 = vld [vmem:[%s3163 + $0x60] sm:$0xee]
        %v3855 = vld [vmem:[%s3163 + $0x70] sm:$0xee]
        %v3856 = vld [vmem:[%s3163 + $0x80] sm:$0xee]
        %v3857 = vld [vmem:[%s3163 + $0x90] sm:$0xee]
        %v3878 = vrot.slane %v3848, 5
        %v3879 = vrot.slane %v3878, 4
        %v3880 = vrot.slane %v3437, 5
        %v3881 = vsel %vm1863, %v3879, %v3880
        %v3882 = vrot.slane %v3849, 5
        %v3883 = vrot.slane %v3882, 4
        %v3884 = vrot.slane %v3439, 5
        %v3885 = vsel %vm1863, %v3883, %v3884
        %v3886 = vrot.slane %v3850, 5
        %v3887 = vrot.slane %v3886, 4
        %v3888 = vrot.slane %v3441, 5
        %v3889 = vsel %vm1863, %v3887, %v3888
        %v3890 = vrot.slane %v3851, 5
        %v3891 = vrot.slane %v3890, 4
        %v3892 = vrot.slane %v3443, 5
        %v3893 = vsel %vm1863, %v3891, %v3892
        %v3894 = vrot.slane %v3852, 5
        %v3895 = vrot.slane %v3894, 4
        %v3896 = vrot.slane %v3445, 5
        %v3897 = vsel %vm1863, %v3895, %v3896
        %v3898 = vrot.slane %v3853, 5
        %v3899 = vrot.slane %v3898, 4
        %v3900 = vrot.slane %v3447, 5
        %v3901 = vsel %vm1863, %v3899, %v3900
        %v3902 = vrot.slane %v3854, 5
        %v3903 = vrot.slane %v3902, 4
        %v3904 = vrot.slane %v3449, 5
        %v3905 = vsel %vm1863, %v3903, %v3904
        %v3906 = vrot.slane %v3855, 5
        %v3907 = vrot.slane %v3906, 4
        %v3908 = vrot.slane %v3451, 5
        %v3909 = vsel %vm1863, %v3907, %v3908
        %v3910 = vrot.slane %v3856, 5
        %v3911 = vrot.slane %v3910, 4
        %v3912 = vrot.slane %v3453, 5
        %v3913 = vsel %vm1863, %v3911, %v3912
        %v3914 = vrot.slane %v3857, 5
        %v3915 = vrot.slane %v3914, 4
        %v3916 = vrot.slane %v3455, 5
        %v3917 = vsel %vm1863, %v3915, %v3916
        %s3918 = scalar_lea.vmem [#allocation7], 1024
        %v3919 = vld [vmem:[%s3918] sm:$0xf]
        %v3920 = vld [vmem:[%s3918 + $0x4] sm:$0xf]
        %v3921 = vld [vmem:[%s3918 + $0x8] sm:$0xf]
        %v3922 = vld [vmem:[%s3918 + $0xc] sm:$0xf]
        %v3923 = vld [vmem:[%s3918 + $0x10] sm:$0xf]
        %v3924 = vld [vmem:[%s3918 + $0x14] sm:$0xf]
        %v3925 = vld [vmem:[%s3918 + $0x18] sm:$0xf]
        %v3926 = vld [vmem:[%s3918 + $0x1c] sm:$0xf]
        %v3927 = vld [vmem:[%s3918 + $0x20] sm:$0xf]
        %v3928 = vld [vmem:[%s3918 + $0x24] sm:$0xf]
        %v3929 = vld [vmem:[%s3918 + $0x28] sm:$0xf]
        %v3930 = vld [vmem:[%s3918 + $0x2c] sm:$0xf]
        %v3931 = vld [vmem:[%s3918 + $0x30] sm:$0xf]
        %v3932 = vld [vmem:[%s3918 + $0x34] sm:$0xf]
        %v3933 = vld [vmem:[%s3918 + $0x38] sm:$0xf]
        %v3934 = vld [vmem:[%s3918 + $0x3c] sm:$0xf]
        %v3935 = vld [vmem:[%s3918 + $0x40] sm:$0xf]
        %v3936 = vld [vmem:[%s3918 + $0x44] sm:$0xf]
        %v3937 = vld [vmem:[%s3918 + $0x48] sm:$0xf]
        %v3938 = vld [vmem:[%s3918 + $0x4c] sm:$0xf]
        %v3939 = vld [vmem:[%s3918 + $0x50] sm:$0xf]
        %v3940 = vld [vmem:[%s3918 + $0x54] sm:$0xf]
        %v3941 = vld [vmem:[%s3918 + $0x58] sm:$0xf]
        %v3942 = vld [vmem:[%s3918 + $0x5c] sm:$0xf]
        %v3943 = vld [vmem:[%s3918 + $0x60] sm:$0xf]
        %v3944 = vld [vmem:[%s3918 + $0x64] sm:$0xf]
        %v3945 = vld [vmem:[%s3918 + $0x68] sm:$0xf]
        %v3946 = vld [vmem:[%s3918 + $0x6c] sm:$0xf]
        %v3947 = vld [vmem:[%s3918 + $0x70] sm:$0xf]
        %v3948 = vld [vmem:[%s3918 + $0x74] sm:$0xf]
        %v3949 = vld [vmem:[%s3918 + $0x78] sm:$0xf]
        %v3950 = vld [vmem:[%s3918 + $0x7c] sm:$0xf]
        %v3951 = vunpack.c.l.b16 %v3881
        %v3952 = vunpack.c.h.b16 %v3881
        %v3953 = vunpack.c.l.b16 %v3885
        %v3954 = vunpack.c.h.b16 %v3885
        %v3955 = vunpack.c.l.b16 %v3889
        %v3956 = vunpack.c.h.b16 %v3889
        %v3957 = vunpack.c.l.b16 %v3893
        %v3958 = vunpack.c.h.b16 %v3893
        %v3959 = vunpack.c.l.b16 %v3897
        %v3960 = vunpack.c.h.b16 %v3897
        %v3961 = vunpack.c.l.b16 %v3901
        %v3962 = vunpack.c.h.b16 %v3901
        %v3963 = vunpack.c.l.b16 %v3905
        %v3964 = vunpack.c.h.b16 %v3905
        %v3965 = vunpack.c.l.b16 %v3909
        %v3966 = vunpack.c.h.b16 %v3909
        %v3967 = vunpack.c.l.b16 %v3913
        %v3968 = vunpack.c.h.b16 %v3913
        %v3969 = vunpack.c.l.b16 %v3917
        %v3970 = vunpack.c.h.b16 %v3917
        %v3971 = vpack.c.b16 %v3953, %v3951
        %v3972 = vpack.c.b16 %v3954, %v3952
        %v3973 = vpack.c.b16 %v3957, %v3955
        %v3974 = vpack.c.b16 %v3958, %v3956
        %v3975 = vpack.c.b16 %v3961, %v3959
        %v3976 = vpack.c.b16 %v3962, %v3960
        %v3977 = vpack.c.b16 %v3965, %v3963
        %v3978 = vpack.c.b16 %v3966, %v3964
        %v3979 = vpack.c.b16 %v3969, %v3967
        %v3980 = vpack.c.b16 %v3970, %v3968
        %v4023 = vunpack.c.l.b16 %v3919
        %v4024 = vunpack.c.l.b16 %v3920
        %v4025 = vunpack.c.l.b16 %v3921
        %v4026 = vunpack.c.l.b16 %v3922
        %v4027 = vunpack.c.l.b16 %v3923
        %v4028 = vunpack.c.l.b16 %v3924
        %v4029 = vunpack.c.l.b16 %v3925
        %v4030 = vunpack.c.l.b16 %v3926
        %v4031 = vunpack.c.l.b16 %v3927
        %v4032 = vunpack.c.l.b16 %v3928
        %v4033 = vunpack.c.l.b16 %v3929
        %v4034 = vunpack.c.l.b16 %v3930
        %v4035 = vunpack.c.l.b16 %v3931
        %v4036 = vunpack.c.l.b16 %v3932
        %v4037 = vunpack.c.l.b16 %v3933
        %v4038 = vunpack.c.l.b16 %v3934
        %v4039 = vunpack.c.l.b16 %v3935
        %v4040 = vunpack.c.l.b16 %v3936
        %v4041 = vunpack.c.l.b16 %v3937
        %v4042 = vunpack.c.l.b16 %v3938
        %v4043 = vunpack.c.l.b16 %v3939
        %v4044 = vunpack.c.l.b16 %v3940
        %v4045 = vunpack.c.l.b16 %v3941
        %v4046 = vunpack.c.l.b16 %v3942
        %v4047 = vunpack.c.l.b16 %v3943
        %v4048 = vunpack.c.l.b16 %v3944
        %v4049 = vunpack.c.l.b16 %v3945
        %v4050 = vunpack.c.l.b16 %v3946
        %v4051 = vunpack.c.l.b16 %v3947
        %v4052 = vunpack.c.l.b16 %v3948
        %v4053 = vunpack.c.l.b16 %v3949
        %v4054 = vunpack.c.l.b16 %v3950
        %v4055 = vpack.c.b16 %v4024, %v4023
        %v4056 = vpack.c.b16 %v4026, %v4025
        %v4057 = vpack.c.b16 %v4028, %v4027
        %v4058 = vpack.c.b16 %v4030, %v4029
        %v4059 = vpack.c.b16 %v4032, %v4031
        %v4060 = vpack.c.b16 %v4034, %v4033
        %v4061 = vpack.c.b16 %v4036, %v4035
        %v4062 = vpack.c.b16 %v4038, %v4037
        %v4063 = vpack.c.b16 %v4040, %v4039
        %v4064 = vpack.c.b16 %v4042, %v4041
        %v4065 = vpack.c.b16 %v4044, %v4043
        %v4066 = vpack.c.b16 %v4046, %v4045
        %v4067 = vpack.c.b16 %v4048, %v4047
        %v4068 = vpack.c.b16 %v4050, %v4049
        %v4069 = vpack.c.b16 %v4052, %v4051
        %v4070 = vpack.c.b16 %v4054, %v4053
        %4087 = vmatprep.subr.bf16.mxu0 0
        %4088 = vmatpush1.bf16.msra.mxu0 %v4062
        %4089 = vmatprep.subr.bf16.mxu0 0
        %4090 = vmatpush1.bf16.msra.mxu0 %v4061
        %4091 = vmatprep.subr.bf16.mxu0 0
        %4092 = vmatpush1.bf16.msra.mxu0 %v4060
        %4093 = vmatprep.subr.bf16.mxu0 0
        %4094 = vmatpush1.bf16.msra.mxu0 %v4059
        %4095 = vmatprep.subr.bf16.mxu0 0
        %4096 = vmatpush1.bf16.msra.mxu0 %v4058
        %4097 = vmatprep.subr.bf16.mxu0 0
        %4098 = vmatpush1.bf16.msra.mxu0 %v4057
        %4099 = vmatprep.subr.bf16.mxu0 0
        %4100 = vmatpush1.bf16.msra.mxu0 %v4056
        %4101 = vmatprep.subr.bf16.mxu0 0
        %4102 = vmatpush1.bf16.msra.mxu0 %v4055
        %4103 = vmatprep.subr.bf16.mxu0 0
        %4104 = vmatpush2.bf16.msra.mxu0 %v4070
        %4105 = vmatprep.subr.bf16.mxu0 0
        %4106 = vmatpush2.bf16.msra.mxu0 %v4069
        %4107 = vmatprep.subr.bf16.mxu0 0
        %4108 = vmatpush2.bf16.msra.mxu0 %v4068
        %4109 = vmatprep.subr.bf16.mxu0 0
        %4110 = vmatpush2.bf16.msra.mxu0 %v4067
        %4111 = vmatprep.subr.bf16.mxu0 0
        %4112 = vmatpush2.bf16.msra.mxu0 %v4066
        %4113 = vmatprep.subr.bf16.mxu0 0
        %4114 = vmatpush2.bf16.msra.mxu0 %v4065
        %4115 = vmatprep.subr.bf16.mxu0 0
        %4116 = vmatpush2.bf16.msra.mxu0 %v4064
        %4117 = vmatprep.subr.bf16.mxu0 0
        %4118 = vmatpush2.bf16.msra.mxu0 %v4063
        %4119 = vmatprep.mubr.bf16.mxu0 %v3972
        %4120 = vmatmul.mubr.bf16.gmra.mxu0 %v3971
        %v4121 = vpop.f32.mrf.mxu0
        %v4122 = vadd.f32 0.0, %v4121
        %v4123 = vpop.f32.mrf.mxu0
        %v4124 = vpop.f32.mrf.mxu0
        %v4125 = vadd.f32 0.0, %v4124
        %v4126 = vpop.f32.mrf.mxu0
        %4127 = vmatprep.mubr.bf16.mxu0 %v3974
        %4128 = vmatmul.mubr.bf16.gmra.mxu0 %v3973
        %v4129 = vpop.f32.mrf.mxu0
        %v4130 = vadd.f32 0.0, %v4129
        %v4131 = vpop.f32.mrf.mxu0
        %v4132 = vpop.f32.mrf.mxu0
        %v4133 = vadd.f32 0.0, %v4132
        %v4134 = vpop.f32.mrf.mxu0
        %4135 = vmatprep.mubr.bf16.mxu0 %v3976
        %4136 = vmatmul.mubr.bf16.gmra.mxu0 %v3975
        %v4137 = vpop.f32.mrf.mxu0
        %v4138 = vadd.f32 0.0, %v4137
        %v4139 = vpop.f32.mrf.mxu0
        %v4140 = vpop.f32.mrf.mxu0
        %v4141 = vadd.f32 0.0, %v4140
        %v4142 = vpop.f32.mrf.mxu0
        %4143 = vmatprep.mubr.bf16.mxu0 %v3978
        %4144 = vmatmul.mubr.bf16.gmra.mxu0 %v3977
        %v4145 = vpop.f32.mrf.mxu0
        %v4146 = vadd.f32 0.0, %v4145
        %v4147 = vpop.f32.mrf.mxu0
        %v4148 = vpop.f32.mrf.mxu0
        %v4149 = vadd.f32 0.0, %v4148
        %v4150 = vpop.f32.mrf.mxu0
        %4151 = vmatprep.mubr.bf16.mxu0 %v3980
        %4152 = vmatmul.mubr.bf16.gmra.mxu0 %v3979
        %v4153 = vpop.f32.mrf.mxu0
        %v4154 = vadd.f32 0.0, %v4153
        %v4155 = vpop.f32.mrf.mxu0
        %v4156 = vpop.f32.mrf.mxu0
        %v4157 = vadd.f32 0.0, %v4156
        %v4158 = vpop.f32.mrf.mxu0
        %4159 = vdwg.mxu0
        %v4160 = vadd.f32 %v3838, %v4122
        %v4161 = vadd.f32 %v3839, %v4125
        %v4162 = vadd.f32 %v3840, %v4130
        %v4163 = vadd.f32 %v3841, %v4133
        %v4164 = vadd.f32 %v3842, %v4138
        %v4165 = vadd.f32 %v3843, %v4141
        %v4166 = vadd.f32 %v3844, %v4146
        %v4167 = vadd.f32 %v3845, %v4149
        %v4168 = vadd.f32 %v3846, %v4154
        %v4169 = vadd.f32 %v3847, %v4157
        %v4170 = vld [vmem:[%s7] sm:$0x1]
        %v4172 = vlaneseq
        %v4173 = vshrl.u32 %v4172, 7
        %v4174 = vsub.s32 0, %v4173
        %v4175 = vrot.slane %v4170, %v4174
        %v4177 = vadd.f32 %v4160, %v4175
        %v4178 = vadd.f32 %v4161, %v4175
        %v4179 = vadd.f32 %v4162, %v4175
        %v4180 = vadd.f32 %v4163, %v4175
        %v4181 = vadd.f32 %v4164, %v4175
        %v4182 = vadd.f32 %v4165, %v4175
        %v4183 = vadd.f32 %v4166, %v4175
        %v4184 = vadd.f32 %v4167, %v4175
        %v4185 = vadd.f32 %v4168, %v4175
        %v4186 = vadd.f32 %v4169, %v4175
        %v4187 = vld [vmem:[%s8] sm:$0x1]
        %v4189 = vlaneseq
        %v4190 = vshrl.u32 %v4189, 7
        %v4191 = vsub.s32 0, %v4190
        %v4192 = vrot.slane %v4187, %v4191
        %v4194 = vmul.f32 %v4177, %v4192
        %v4195 = vmul.f32 %v4178, %v4192
        %v4196 = vmul.f32 %v4179, %v4192
        %v4197 = vmul.f32 %v4180, %v4192
        %v4198 = vmul.f32 %v4181, %v4192
        %v4199 = vmul.f32 %v4182, %v4192
        %v4200 = vmul.f32 %v4183, %v4192
        %v4201 = vmul.f32 %v4184, %v4192
        %v4202 = vmul.f32 %v4185, %v4192
        %v4203 = vmul.f32 %v4186, %v4192
        %v4204 = vld [vmem:[%s9] sm:$0x1]
        %v4206 = vlaneseq
        %v4207 = vshrl.u32 %v4206, 7
        %v4208 = vsub.s32 0, %v4207
        %v4209 = vrot.slane %v4204, %v4208
        %v4211 = vadd.f32 %v4194, %v4209
        %v4212 = vadd.f32 %v4195, %v4209
        %v4213 = vadd.f32 %v4196, %v4209
        %v4214 = vadd.f32 %v4197, %v4209
        %v4215 = vadd.f32 %v4198, %v4209
        %v4216 = vadd.f32 %v4199, %v4209
        %v4217 = vadd.f32 %v4200, %v4209
        %v4218 = vadd.f32 %v4201, %v4209
        %v4219 = vadd.f32 %v4202, %v4209
        %v4220 = vadd.f32 %v4203, %v4209
        %v4221 = vxor.u32 %v4211, 2147483648
        %v4222 = vxor.u32 %v4212, 2147483648
        %v4223 = vxor.u32 %v4213, 2147483648
        %v4224 = vxor.u32 %v4214, 2147483648
        %v4225 = vxor.u32 %v4215, 2147483648
        %v4226 = vxor.u32 %v4216, 2147483648
        %v4227 = vxor.u32 %v4217, 2147483648
        %v4228 = vxor.u32 %v4218, 2147483648
        %v4229 = vxor.u32 %v4219, 2147483648
        %v4230 = vxor.u32 %v4220, 2147483648
        %v4231 = vmul.f32 %v4221, 1.442695
        %v4232 = vpow.pop %v4231
        %v4233 = vmul.f32 %v4222, 1.442695
        %v4234 = vpow.pop %v4233
        %v4235 = vmul.f32 %v4223, 1.442695
        %v4236 = vpow.pop %v4235
        %v4237 = vmul.f32 %v4224, 1.442695
        %v4238 = vpow.pop %v4237
        %v4239 = vmul.f32 %v4225, 1.442695
        %v4240 = vpow.pop %v4239
        %v4241 = vmul.f32 %v4226, 1.442695
        %v4242 = vpow.pop %v4241
        %v4243 = vmul.f32 %v4227, 1.442695
        %v4244 = vpow.pop %v4243
        %v4245 = vmul.f32 %v4228, 1.442695
        %v4246 = vpow.pop %v4245
        %v4247 = vmul.f32 %v4229, 1.442695
        %v4248 = vpow.pop %v4247
        %v4249 = vmul.f32 %v4230, 1.442695
        %v4250 = vpow.pop %v4249
        %v4251 = vadd.f32 %v4232, 1.0
        %v4252 = vadd.f32 %v4234, 1.0
        %v4253 = vadd.f32 %v4236, 1.0
        %v4254 = vadd.f32 %v4238, 1.0
        %v4255 = vadd.f32 %v4240, 1.0
        %v4256 = vadd.f32 %v4242, 1.0
        %v4257 = vadd.f32 %v4244, 1.0
        %v4258 = vadd.f32 %v4246, 1.0
        %v4259 = vadd.f32 %v4248, 1.0
        %v4260 = vadd.f32 %v4250, 1.0
        %v4261 = vrcp.pop %v4251
        %v4262 = vmul.f32 1.0, %v4261
        %v4263 = vrcp.pop %v4252
        %v4264 = vmul.f32 1.0, %v4263
        %v4265 = vrcp.pop %v4253
        %v4266 = vmul.f32 1.0, %v4265
        %v4267 = vrcp.pop %v4254
        %v4268 = vmul.f32 1.0, %v4267
        %v4269 = vrcp.pop %v4255
        %v4270 = vmul.f32 1.0, %v4269
        %v4271 = vrcp.pop %v4256
        %v4272 = vmul.f32 1.0, %v4271
        %v4273 = vrcp.pop %v4257
        %v4274 = vmul.f32 1.0, %v4273
        %v4275 = vrcp.pop %v4258
        %v4276 = vmul.f32 1.0, %v4275
        %v4277 = vrcp.pop %v4259
        %v4278 = vmul.f32 1.0, %v4277
        %v4279 = vrcp.pop %v4260
        %v4280 = vmul.f32 1.0, %v4279
        %v4281 = vmul.f32 %v4211, %v4262
        %v4282 = vmul.f32 %v4212, %v4264
        %v4283 = vmul.f32 %v4213, %v4266
        %v4284 = vmul.f32 %v4214, %v4268
        %v4285 = vmul.f32 %v4215, %v4270
        %v4286 = vmul.f32 %v4216, %v4272
        %v4287 = vmul.f32 %v4217, %v4274
        %v4288 = vmul.f32 %v4218, %v4276
        %v4289 = vmul.f32 %v4219, %v4278
        %v4290 = vmul.f32 %v4220, %v4280
        %v4301 = vrot.slane %v4281, 7
        %v4302 = vrot.slane %v4282, 7
        %v4303 = vrot.slane %v4283, 7
        %v4304 = vrot.slane %v4284, 7
        %v4305 = vrot.slane %v4285, 7
        %v4306 = vrot.slane %v4286, 7
        %v4307 = vrot.slane %v4287, 7
        %v4308 = vrot.slane %v4288, 7
        %v4309 = vrot.slane %v4289, 7
        %v4310 = vrot.slane %v4290, 7
        %v4321 = vsel %vm837, 0.0, %v4301
        %v4322 = vsel %vm837, 0.0, %v4302
        %v4323 = vsel %vm837, 0.0, %v4303
        %v4324 = vsel %vm837, 0.0, %v4304
        %v4325 = vsel %vm837, 0.0, %v4305
        %v4326 = vsel %vm837, 0.0, %v4306
        %v4327 = vsel %vm837, 0.0, %v4307
        %v4328 = vsel %vm837, 0.0, %v4308
        %v4329 = vsel %vm837, 0.0, %v4309
        %v4330 = vsel %vm837, 0.0, %v4310
        %v4331 = vsel %vm837, %v4301, 0.0
        %v4332 = vsel %vm837, %v4302, 0.0
        %v4333 = vsel %vm837, %v4303, 0.0
        %v4334 = vsel %vm837, %v4304, 0.0
        %v4335 = vsel %vm837, %v4305, 0.0
        %v4336 = vsel %vm837, %v4306, 0.0
        %v4337 = vsel %vm837, %v4307, 0.0
        %v4338 = vsel %vm837, %v4308, 0.0
        %v4339 = vsel %vm837, %v4309, 0.0
        %v4340 = vsel %vm837, %v4310, 0.0
        %v4341 = vpack.c.bf16 %v4331, %v4321
        %v4342 = vpack.c.bf16 %v4332, %v4322
        %v4343 = vpack.c.bf16 %v4333, %v4323
        %v4344 = vpack.c.bf16 %v4334, %v4324
        %v4345 = vpack.c.bf16 %v4335, %v4325
        %v4346 = vpack.c.bf16 %v4336, %v4326
        %v4347 = vpack.c.bf16 %v4337, %v4327
        %v4348 = vpack.c.bf16 %v4338, %v4328
        %v4349 = vpack.c.bf16 %v4339, %v4329
        %v4350 = vpack.c.bf16 %v4340, %v4330
        %v4361 = vunpack.c.l.b16 %v4341
        %v4362 = vunpack.c.h.b16 %v4341
        %v4363 = vunpack.c.l.b16 %v4342
        %v4364 = vunpack.c.h.b16 %v4342
        %v4365 = vunpack.c.l.b16 %v4343
        %v4366 = vunpack.c.h.b16 %v4343
        %v4367 = vunpack.c.l.b16 %v4344
        %v4368 = vunpack.c.h.b16 %v4344
        %v4369 = vunpack.c.l.b16 %v4345
        %v4370 = vunpack.c.h.b16 %v4345
        %v4371 = vunpack.c.l.b16 %v4346
        %v4372 = vunpack.c.h.b16 %v4346
        %v4373 = vunpack.c.l.b16 %v4347
        %v4374 = vunpack.c.h.b16 %v4347
        %v4375 = vunpack.c.l.b16 %v4348
        %v4376 = vunpack.c.h.b16 %v4348
        %v4377 = vunpack.c.l.b16 %v4349
        %v4378 = vunpack.c.h.b16 %v4349
        %v4379 = vunpack.c.l.b16 %v4350
        %v4380 = vunpack.c.h.b16 %v4350
        %v4381 = vpack.c.b16 %v4361, %v4361
        %v4382 = vpack.c.b16 %v4362, %v4362
        %v4383 = vpack.c.b16 %v4363, %v4363
        %v4384 = vpack.c.b16 %v4364, %v4364
        %v4385 = vpack.c.b16 %v4365, %v4365
        %v4386 = vpack.c.b16 %v4366, %v4366
        %v4387 = vpack.c.b16 %v4367, %v4367
        %v4388 = vpack.c.b16 %v4368, %v4368
        %v4389 = vpack.c.b16 %v4369, %v4369
        %v4390 = vpack.c.b16 %v4370, %v4370
        %v4391 = vpack.c.b16 %v4371, %v4371
        %v4392 = vpack.c.b16 %v4372, %v4372
        %v4393 = vpack.c.b16 %v4373, %v4373
        %v4394 = vpack.c.b16 %v4374, %v4374
        %v4395 = vpack.c.b16 %v4375, %v4375
        %v4396 = vpack.c.b16 %v4376, %v4376
        %v4397 = vpack.c.b16 %v4377, %v4377
        %v4398 = vpack.c.b16 %v4378, %v4378
        %v4399 = vpack.c.b16 %v4379, %v4379
        %v4400 = vpack.c.b16 %v4380, %v4380
        %4421 = vst [vmem:[#allocation5] sm:$0xf] %v4381
        %4422 = vst [vmem:[#allocation5 + $0x4] sm:$0x1] %v4382
        %4423 = vst [vmem:[#allocation5 + $0x8] sm:$0xf] %v4383
        %4424 = vst [vmem:[#allocation5 + $0xc] sm:$0x1] %v4384
        %4425 = vst [vmem:[#allocation5 + $0x10] sm:$0xf] %v4385
        %4426 = vst [vmem:[#allocation5 + $0x14] sm:$0x1] %v4386
        %4427 = vst [vmem:[#allocation5 + $0x18] sm:$0xf] %v4387
        %4428 = vst [vmem:[#allocation5 + $0x1c] sm:$0x1] %v4388
        %4429 = vst [vmem:[#allocation5 + $0x20] sm:$0xf] %v4389
        %4430 = vst [vmem:[#allocation5 + $0x24] sm:$0x1] %v4390
        %4431 = vst [vmem:[#allocation5 + $0x28] sm:$0xf] %v4391
        %4432 = vst [vmem:[#allocation5 + $0x2c] sm:$0x1] %v4392
        %4433 = vst [vmem:[#allocation5 + $0x30] sm:$0xf] %v4393
        %4434 = vst [vmem:[#allocation5 + $0x34] sm:$0x1] %v4394
        %4435 = vst [vmem:[#allocation5 + $0x38] sm:$0xf] %v4395
        %4436 = vst [vmem:[#allocation5 + $0x3c] sm:$0x1] %v4396
        %4437 = vst [vmem:[#allocation5 + $0x40] sm:$0xf] %v4397
        %4438 = vst [vmem:[#allocation5 + $0x44] sm:$0x1] %v4398
        %4439 = vst [vmem:[#allocation5 + $0x48] sm:$0xf] %v4399
        %4440 = vst [vmem:[#allocation5 + $0x4c] sm:$0x1] %v4400
        // Predicated region
        $region101: #{tpu_custom_call.1} parent=71 // pred_check
          %p4441 = pneg %p1162
        $region102: #{tpu_custom_call.1} parent=71 // pred_check_branch
          %4443 = sbr.rel (%p4441) target = $region104
        $region103: #{tpu_custom_call.1} parent=71 // pred_region
          %4444 = vst [vmem:[#allocation5] sm:$0xf] 0
          %4445 = vst [vmem:[#allocation5 + $0x4] sm:$0x1] 0
          %s4446 = scalar_lea.vmem [#allocation5], 72
          %4447 = vst [vmem:[%s4446] sm:$0xf] 0
          %4448 = vst [vmem:[%s4446 + $0x4] sm:$0x1] 0
        $region104: #{tpu_custom_call.1} parent=71 // pred_fallthru
          _
        %v4449 = vld [vmem:[#allocation5] sm:$0xf]
        %v4450 = vld [vmem:[#allocation5 + $0x8] sm:$0xf]
        %v4451 = vld [vmem:[#allocation5 + $0x10] sm:$0xf]
        %v4452 = vld [vmem:[#allocation5 + $0x18] sm:$0xf]
        %v4453 = vld [vmem:[#allocation5 + $0x20] sm:$0xf]
        %v4454 = vld [vmem:[#allocation5 + $0x28] sm:$0xf]
        %v4455 = vld [vmem:[#allocation5 + $0x30] sm:$0xf]
        %v4456 = vld [vmem:[#allocation5 + $0x38] sm:$0xf]
        %s4457 = scalar_lea.vmem [#allocation5], 8
        %v4458 = vld [vmem:[%s4457] sm:$0xf]
        %v4459 = vld [vmem:[%s4457 + $0x8] sm:$0xf]
        %v4460 = vld [vmem:[%s4457 + $0x10] sm:$0xf]
        %v4461 = vld [vmem:[%s4457 + $0x18] sm:$0xf]
        %v4462 = vld [vmem:[%s4457 + $0x20] sm:$0xf]
        %v4463 = vld [vmem:[%s4457 + $0x28] sm:$0xf]
        %v4464 = vld [vmem:[%s4457 + $0x30] sm:$0xf]
        %v4465 = vld [vmem:[%s4457 + $0x38] sm:$0xf]
        %s4466 = scalar_lea.vmem [#allocation5], 16
        %v4467 = vld [vmem:[%s4466] sm:$0xf]
        %v4468 = vld [vmem:[%s4466 + $0x8] sm:$0xf]
        %v4469 = vld [vmem:[%s4466 + $0x10] sm:$0xf]
        %v4470 = vld [vmem:[%s4466 + $0x18] sm:$0xf]
        %v4471 = vld [vmem:[%s4466 + $0x20] sm:$0xf]
        %v4472 = vld [vmem:[%s4466 + $0x28] sm:$0xf]
        %v4473 = vld [vmem:[%s4466 + $0x30] sm:$0xf]
        %v4474 = vld [vmem:[%s4466 + $0x38] sm:$0xf]
        %v4499 = vunpack.c.l.b16 %v4449
        %v4500 = vunpack.c.l.b16 %v4458
        %v4501 = vunpack.c.l.b16 %v4467
        %v4502 = vunpack.c.l.b16 %v4450
        %v4503 = vunpack.c.l.b16 %v4459
        %v4504 = vunpack.c.l.b16 %v4468
        %v4505 = vunpack.c.l.b16 %v4451
        %v4506 = vunpack.c.l.b16 %v4460
        %v4507 = vunpack.c.l.b16 %v4469
        %v4508 = vunpack.c.l.b16 %v4452
        %v4509 = vunpack.c.l.b16 %v4461
        %v4510 = vunpack.c.l.b16 %v4470
        %v4511 = vunpack.c.l.b16 %v4453
        %v4512 = vunpack.c.l.b16 %v4462
        %v4513 = vunpack.c.l.b16 %v4471
        %v4514 = vunpack.c.l.b16 %v4454
        %v4515 = vunpack.c.l.b16 %v4463
        %v4516 = vunpack.c.l.b16 %v4472
        %v4517 = vunpack.c.l.b16 %v4455
        %v4518 = vunpack.c.l.b16 %v4464
        %v4519 = vunpack.c.l.b16 %v4473
        %v4520 = vunpack.c.l.b16 %v4456
        %v4521 = vunpack.c.l.b16 %v4465
        %v4522 = vunpack.c.l.b16 %v4474
        %v4523 = vld [vmem:[#allocation10] sm:$0xf]
        %v4524 = vld [vmem:[#allocation10 + $0x4] sm:$0xf]
        %v4525 = vld [vmem:[#allocation10 + $0x8] sm:$0xf]
        %v4526 = vld [vmem:[#allocation10 + $0xc] sm:$0xf]
        %v4527 = vld [vmem:[#allocation10 + $0x10] sm:$0xf]
        %v4528 = vld [vmem:[#allocation10 + $0x14] sm:$0xf]
        %v4529 = vld [vmem:[#allocation10 + $0x18] sm:$0xf]
        %v4530 = vld [vmem:[#allocation10 + $0x1c] sm:$0xf]
        %v4531 = vld [vmem:[#allocation10 + $0x20] sm:$0xf]
        %v4532 = vld [vmem:[#allocation10 + $0x24] sm:$0xf]
        %v4533 = vld [vmem:[#allocation10 + $0x28] sm:$0xf]
        %v4534 = vld [vmem:[#allocation10 + $0x2c] sm:$0xf]
        %v4535 = vld [vmem:[#allocation10 + $0x30] sm:$0xf]
        %v4536 = vld [vmem:[#allocation10 + $0x34] sm:$0xf]
        %v4537 = vld [vmem:[#allocation10 + $0x38] sm:$0xf]
        %v4538 = vld [vmem:[#allocation10 + $0x3c] sm:$0xf]
        %v4539 = vld [vmem:[#allocation10 + $0x40] sm:$0xf]
        %v4540 = vld [vmem:[#allocation10 + $0x44] sm:$0xf]
        %v4541 = vld [vmem:[#allocation10 + $0x48] sm:$0xf]
        %v4542 = vld [vmem:[#allocation10 + $0x4c] sm:$0xf]
        %v4543 = vld [vmem:[#allocation10 + $0x50] sm:$0xf]
        %v4544 = vld [vmem:[#allocation10 + $0x54] sm:$0xf]
        %v4545 = vld [vmem:[#allocation10 + $0x58] sm:$0xf]
        %v4546 = vld [vmem:[#allocation10 + $0x5c] sm:$0xf]
        %v4547 = vld [vmem:[#allocation10 + $0x60] sm:$0xf]
        %v4548 = vld [vmem:[#allocation10 + $0x64] sm:$0xf]
        %v4549 = vld [vmem:[#allocation10 + $0x68] sm:$0xf]
        %v4550 = vld [vmem:[#allocation10 + $0x6c] sm:$0xf]
        %v4551 = vld [vmem:[#allocation10 + $0x70] sm:$0xf]
        %v4552 = vld [vmem:[#allocation10 + $0x74] sm:$0xf]
        %v4553 = vld [vmem:[#allocation10 + $0x78] sm:$0xf]
        %v4554 = vld [vmem:[#allocation10 + $0x7c] sm:$0xf]
        %v4555 = vld [vmem:[#allocation10 + $0x80] sm:$0xf]
        %v4556 = vld [vmem:[#allocation10 + $0x84] sm:$0xf]
        %v4557 = vld [vmem:[#allocation10 + $0x88] sm:$0xf]
        %v4558 = vld [vmem:[#allocation10 + $0x8c] sm:$0xf]
        %v4559 = vld [vmem:[#allocation10 + $0x90] sm:$0xf]
        %v4560 = vld [vmem:[#allocation10 + $0x94] sm:$0xf]
        %v4561 = vld [vmem:[#allocation10 + $0x98] sm:$0xf]
        %v4562 = vld [vmem:[#allocation10 + $0x9c] sm:$0xf]
        %v4563 = vld [vmem:[#allocation10 + $0xa0] sm:$0xf]
        %v4564 = vld [vmem:[#allocation10 + $0xa4] sm:$0xf]
        %v4565 = vld [vmem:[#allocation10 + $0xa8] sm:$0xf]
        %v4566 = vld [vmem:[#allocation10 + $0xac] sm:$0xf]
        %v4567 = vld [vmem:[#allocation10 + $0xb0] sm:$0xf]
        %v4568 = vld [vmem:[#allocation10 + $0xb4] sm:$0xf]
        %v4569 = vld [vmem:[#allocation10 + $0xb8] sm:$0xf]
        %v4570 = vld [vmem:[#allocation10 + $0xbc] sm:$0xf]
        %v4571 = vld [vmem:[#allocation5 + $0x4] sm:$0x1]
        %v4572 = vld [vmem:[#allocation5 + $0xc] sm:$0x1]
        %v4573 = vld [vmem:[#allocation5 + $0x14] sm:$0x1]
        %v4574 = vld [vmem:[#allocation5 + $0x1c] sm:$0x1]
        %v4575 = vld [vmem:[#allocation5 + $0x24] sm:$0x1]
        %v4576 = vld [vmem:[#allocation5 + $0x2c] sm:$0x1]
        %v4577 = vld [vmem:[#allocation5 + $0x34] sm:$0x1]
        %v4578 = vld [vmem:[#allocation5 + $0x3c] sm:$0x1]
        %v4579 = vld [vmem:[%s4457 + $0x4] sm:$0x1]
        %v4580 = vld [vmem:[%s4457 + $0xc] sm:$0x1]
        %v4581 = vld [vmem:[%s4457 + $0x14] sm:$0x1]
        %v4582 = vld [vmem:[%s4457 + $0x1c] sm:$0x1]
        %v4583 = vld [vmem:[%s4457 + $0x24] sm:$0x1]
        %v4584 = vld [vmem:[%s4457 + $0x2c] sm:$0x1]
        %v4585 = vld [vmem:[%s4457 + $0x34] sm:$0x1]
        %v4586 = vld [vmem:[%s4457 + $0x3c] sm:$0x1]
        %v4587 = vld [vmem:[%s4466 + $0x4] sm:$0x1]
        %v4588 = vld [vmem:[%s4466 + $0xc] sm:$0x1]
        %v4589 = vld [vmem:[%s4466 + $0x14] sm:$0x1]
        %v4590 = vld [vmem:[%s4466 + $0x1c] sm:$0x1]
        %v4591 = vld [vmem:[%s4466 + $0x24] sm:$0x1]
        %v4592 = vld [vmem:[%s4466 + $0x2c] sm:$0x1]
        %v4593 = vld [vmem:[%s4466 + $0x34] sm:$0x1]
        %v4594 = vld [vmem:[%s4466 + $0x3c] sm:$0x1]
        %v4603 = vunpack.c.l.b16 %v4571
        %v4604 = vunpack.c.l.b16 %v4572
        %v4605 = vunpack.c.l.b16 %v4573
        %v4606 = vunpack.c.l.b16 %v4574
        %v4607 = vunpack.c.l.b16 %v4575
        %v4608 = vunpack.c.l.b16 %v4576
        %v4609 = vunpack.c.l.b16 %v4577
        %v4610 = vunpack.c.l.b16 %v4578
        %v4619 = vunpack.c.l.b16 %v4579
        %v4620 = vunpack.c.l.b16 %v4580
        %v4621 = vunpack.c.l.b16 %v4581
        %v4622 = vunpack.c.l.b16 %v4582
        %v4623 = vunpack.c.l.b16 %v4583
        %v4624 = vunpack.c.l.b16 %v4584
        %v4625 = vunpack.c.l.b16 %v4585
        %v4626 = vunpack.c.l.b16 %v4586
        %v4635 = vunpack.c.l.b16 %v4587
        %v4636 = vunpack.c.l.b16 %v4588
        %v4637 = vunpack.c.l.b16 %v4589
        %v4638 = vunpack.c.l.b16 %v4590
        %v4639 = vunpack.c.l.b16 %v4591
        %v4640 = vunpack.c.l.b16 %v4592
        %v4641 = vunpack.c.l.b16 %v4593
        %v4642 = vunpack.c.l.b16 %v4594
        %v4643 = vpack.c.b16 %v4500, %v4499
        %v4644 = vpack.c.b16 %v4501, %v4501
        %v4645 = vpack.c.b16 %v4619, %v4603
        %v4646 = vpack.c.b16 %v4635, %v4635
        %v4647 = vpack.c.b16 %v4503, %v4502
        %v4648 = vpack.c.b16 %v4504, %v4504
        %v4649 = vpack.c.b16 %v4620, %v4604
        %v4650 = vpack.c.b16 %v4636, %v4636
        %v4651 = vpack.c.b16 %v4506, %v4505
        %v4652 = vpack.c.b16 %v4507, %v4507
        %v4653 = vpack.c.b16 %v4621, %v4605
        %v4654 = vpack.c.b16 %v4637, %v4637
        %v4655 = vpack.c.b16 %v4509, %v4508
        %v4656 = vpack.c.b16 %v4510, %v4510
        %v4657 = vpack.c.b16 %v4622, %v4606
        %v4658 = vpack.c.b16 %v4638, %v4638
        %v4659 = vpack.c.b16 %v4512, %v4511
        %v4660 = vpack.c.b16 %v4513, %v4513
        %v4661 = vpack.c.b16 %v4623, %v4607
        %v4662 = vpack.c.b16 %v4639, %v4639
        %v4663 = vpack.c.b16 %v4515, %v4514
        %v4664 = vpack.c.b16 %v4516, %v4516
        %v4665 = vpack.c.b16 %v4624, %v4608
        %v4666 = vpack.c.b16 %v4640, %v4640
        %v4667 = vpack.c.b16 %v4518, %v4517
        %v4668 = vpack.c.b16 %v4519, %v4519
        %v4669 = vpack.c.b16 %v4625, %v4609
        %v4670 = vpack.c.b16 %v4641, %v4641
        %v4671 = vpack.c.b16 %v4521, %v4520
        %v4672 = vpack.c.b16 %v4522, %v4522
        %v4673 = vpack.c.b16 %v4626, %v4610
        %v4674 = vpack.c.b16 %v4642, %v4642
        %v4676 = vshrl.u32 %v4643, 16
        %v4678 = vrot.slane %v4676, 4
        %v4679 = vshll.u32 %v4643, 16
        %v4681 = vrot.slane %v4679, 5
        %v4682 = vor.u32 %v4678, %v4681
        %v4683 = vrot.slane %v4682, 4
        %v4685 = vshll.u32 %v4645, 16
        %v4687 = vrot.slane %v4685, 5
        %v4688 = vsel %vm1229, %v4683, %v4687
        %v4690 = vshrl.u32 %v4644, 16
        %v4692 = vrot.slane %v4690, 4
        %v4693 = vshll.u32 %v4644, 16
        %v4695 = vrot.slane %v4693, 5
        %v4696 = vor.u32 %v4692, %v4695
        %v4697 = vrot.slane %v4696, 4
        %v4699 = vshll.u32 %v4646, 16
        %v4701 = vrot.slane %v4699, 5
        %v4702 = vsel %vm1229, %v4697, %v4701
        %v4704 = vshrl.u32 %v4647, 16
        %v4706 = vrot.slane %v4704, 4
        %v4707 = vshll.u32 %v4647, 16
        %v4709 = vrot.slane %v4707, 5
        %v4710 = vor.u32 %v4706, %v4709
        %v4711 = vrot.slane %v4710, 4
        %v4713 = vshll.u32 %v4649, 16
        %v4715 = vrot.slane %v4713, 5
        %v4716 = vsel %vm1229, %v4711, %v4715
        %v4718 = vshrl.u32 %v4648, 16
        %v4720 = vrot.slane %v4718, 4
        %v4721 = vshll.u32 %v4648, 16
        %v4723 = vrot.slane %v4721, 5
        %v4724 = vor.u32 %v4720, %v4723
        %v4725 = vrot.slane %v4724, 4
        %v4727 = vshll.u32 %v4650, 16
        %v4729 = vrot.slane %v4727, 5
        %v4730 = vsel %vm1229, %v4725, %v4729
        %v4732 = vshrl.u32 %v4651, 16
        %v4734 = vrot.slane %v4732, 4
        %v4735 = vshll.u32 %v4651, 16
        %v4737 = vrot.slane %v4735, 5
        %v4738 = vor.u32 %v4734, %v4737
        %v4739 = vrot.slane %v4738, 4
        %v4741 = vshll.u32 %v4653, 16
        %v4743 = vrot.slane %v4741, 5
        %v4744 = vsel %vm1229, %v4739, %v4743
        %v4746 = vshrl.u32 %v4652, 16
        %v4748 = vrot.slane %v4746, 4
        %v4749 = vshll.u32 %v4652, 16
        %v4751 = vrot.slane %v4749, 5
        %v4752 = vor.u32 %v4748, %v4751
        %v4753 = vrot.slane %v4752, 4
        %v4755 = vshll.u32 %v4654, 16
        %v4757 = vrot.slane %v4755, 5
        %v4758 = vsel %vm1229, %v4753, %v4757
        %v4760 = vshrl.u32 %v4655, 16
        %v4762 = vrot.slane %v4760, 4
        %v4763 = vshll.u32 %v4655, 16
        %v4765 = vrot.slane %v4763, 5
        %v4766 = vor.u32 %v4762, %v4765
        %v4767 = vrot.slane %v4766, 4
        %v4769 = vshll.u32 %v4657, 16
        %v4771 = vrot.slane %v4769, 5
        %v4772 = vsel %vm1229, %v4767, %v4771
        %v4774 = vshrl.u32 %v4656, 16
        %v4776 = vrot.slane %v4774, 4
        %v4777 = vshll.u32 %v4656, 16
        %v4779 = vrot.slane %v4777, 5
        %v4780 = vor.u32 %v4776, %v4779
        %v4781 = vrot.slane %v4780, 4
        %v4783 = vshll.u32 %v4658, 16
        %v4785 = vrot.slane %v4783, 5
        %v4786 = vsel %vm1229, %v4781, %v4785
        %v4788 = vshrl.u32 %v4659, 16
        %v4790 = vrot.slane %v4788, 4
        %v4791 = vshll.u32 %v4659, 16
        %v4793 = vrot.slane %v4791, 5
        %v4794 = vor.u32 %v4790, %v4793
        %v4795 = vrot.slane %v4794, 4
        %v4797 = vshll.u32 %v4661, 16
        %v4799 = vrot.slane %v4797, 5
        %v4800 = vsel %vm1229, %v4795, %v4799
        %v4802 = vshrl.u32 %v4660, 16
        %v4804 = vrot.slane %v4802, 4
        %v4805 = vshll.u32 %v4660, 16
        %v4807 = vrot.slane %v4805, 5
        %v4808 = vor.u32 %v4804, %v4807
        %v4809 = vrot.slane %v4808, 4
        %v4811 = vshll.u32 %v4662, 16
        %v4813 = vrot.slane %v4811, 5
        %v4814 = vsel %vm1229, %v4809, %v4813
        %v4816 = vshrl.u32 %v4663, 16
        %v4818 = vrot.slane %v4816, 4
        %v4819 = vshll.u32 %v4663, 16
        %v4821 = vrot.slane %v4819, 5
        %v4822 = vor.u32 %v4818, %v4821
        %v4823 = vrot.slane %v4822, 4
        %v4825 = vshll.u32 %v4665, 16
        %v4827 = vrot.slane %v4825, 5
        %v4828 = vsel %vm1229, %v4823, %v4827
        %v4830 = vshrl.u32 %v4664, 16
        %v4832 = vrot.slane %v4830, 4
        %v4833 = vshll.u32 %v4664, 16
        %v4835 = vrot.slane %v4833, 5
        %v4836 = vor.u32 %v4832, %v4835
        %v4837 = vrot.slane %v4836, 4
        %v4839 = vshll.u32 %v4666, 16
        %v4841 = vrot.slane %v4839, 5
        %v4842 = vsel %vm1229, %v4837, %v4841
        %v4844 = vshrl.u32 %v4667, 16
        %v4846 = vrot.slane %v4844, 4
        %v4847 = vshll.u32 %v4667, 16
        %v4849 = vrot.slane %v4847, 5
        %v4850 = vor.u32 %v4846, %v4849
        %v4851 = vrot.slane %v4850, 4
        %v4853 = vshll.u32 %v4669, 16
        %v4855 = vrot.slane %v4853, 5
        %v4856 = vsel %vm1229, %v4851, %v4855
        %v4858 = vshrl.u32 %v4668, 16
        %v4860 = vrot.slane %v4858, 4
        %v4861 = vshll.u32 %v4668, 16
        %v4863 = vrot.slane %v4861, 5
        %v4864 = vor.u32 %v4860, %v4863
        %v4865 = vrot.slane %v4864, 4
        %v4867 = vshll.u32 %v4670, 16
        %v4869 = vrot.slane %v4867, 5
        %v4870 = vsel %vm1229, %v4865, %v4869
        %v4872 = vshrl.u32 %v4671, 16
        %v4874 = vrot.slane %v4872, 4
        %v4875 = vshll.u32 %v4671, 16
        %v4877 = vrot.slane %v4875, 5
        %v4878 = vor.u32 %v4874, %v4877
        %v4879 = vrot.slane %v4878, 4
        %v4881 = vshll.u32 %v4673, 16
        %v4883 = vrot.slane %v4881, 5
        %v4884 = vsel %vm1229, %v4879, %v4883
        %v4886 = vshrl.u32 %v4672, 16
        %v4888 = vrot.slane %v4886, 4
        %v4889 = vshll.u32 %v4672, 16
        %v4891 = vrot.slane %v4889, 5
        %v4892 = vor.u32 %v4888, %v4891
        %v4893 = vrot.slane %v4892, 4
        %v4895 = vshll.u32 %v4674, 16
        %v4897 = vrot.slane %v4895, 5
        %v4898 = vsel %vm1229, %v4893, %v4897
        %s4899 = scalar_lea.vmem [#allocation10], 192
        %v4900 = vld [vmem:[%s4899] sm:$0xf]
        %v4901 = vld [vmem:[%s4899 + $0x4] sm:$0xf]
        %v4902 = vld [vmem:[%s4899 + $0x8] sm:$0xf]
        %v4903 = vld [vmem:[%s4899 + $0xc] sm:$0xf]
        %v4904 = vld [vmem:[%s4899 + $0x10] sm:$0xf]
        %v4905 = vld [vmem:[%s4899 + $0x14] sm:$0xf]
        %v4906 = vld [vmem:[%s4899 + $0x18] sm:$0xf]
        %v4907 = vld [vmem:[%s4899 + $0x1c] sm:$0xf]
        %v4908 = vld [vmem:[%s4899 + $0x20] sm:$0xf]
        %v4909 = vld [vmem:[%s4899 + $0x24] sm:$0xf]
        %v4910 = vld [vmem:[%s4899 + $0x28] sm:$0xf]
        %v4911 = vld [vmem:[%s4899 + $0x2c] sm:$0xf]
        %v4912 = vld [vmem:[%s4899 + $0x30] sm:$0xf]
        %v4913 = vld [vmem:[%s4899 + $0x34] sm:$0xf]
        %v4914 = vld [vmem:[%s4899 + $0x38] sm:$0xf]
        %v4915 = vld [vmem:[%s4899 + $0x3c] sm:$0xf]
        %v4916 = vld [vmem:[%s4899 + $0x40] sm:$0xf]
        %v4917 = vld [vmem:[%s4899 + $0x44] sm:$0xf]
        %v4918 = vld [vmem:[%s4899 + $0x48] sm:$0xf]
        %v4919 = vld [vmem:[%s4899 + $0x4c] sm:$0xf]
        %v4920 = vld [vmem:[%s4899 + $0x50] sm:$0xf]
        %v4921 = vld [vmem:[%s4899 + $0x54] sm:$0xf]
        %v4922 = vld [vmem:[%s4899 + $0x58] sm:$0xf]
        %v4923 = vld [vmem:[%s4899 + $0x5c] sm:$0xf]
        %v4924 = vld [vmem:[%s4899 + $0x60] sm:$0xf]
        %v4925 = vld [vmem:[%s4899 + $0x64] sm:$0xf]
        %v4926 = vld [vmem:[%s4899 + $0x68] sm:$0xf]
        %v4927 = vld [vmem:[%s4899 + $0x6c] sm:$0xf]
        %v4928 = vld [vmem:[%s4899 + $0x70] sm:$0xf]
        %v4929 = vld [vmem:[%s4899 + $0x74] sm:$0xf]
        %v4930 = vld [vmem:[%s4899 + $0x78] sm:$0xf]
        %v4931 = vld [vmem:[%s4899 + $0x7c] sm:$0xf]
        %v4932 = vld [vmem:[%s4899 + $0x80] sm:$0xf]
        %v4933 = vld [vmem:[%s4899 + $0x84] sm:$0xf]
        %v4934 = vld [vmem:[%s4899 + $0x88] sm:$0xf]
        %v4935 = vld [vmem:[%s4899 + $0x8c] sm:$0xf]
        %v4936 = vld [vmem:[%s4899 + $0x90] sm:$0xf]
        %v4937 = vld [vmem:[%s4899 + $0x94] sm:$0xf]
        %v4938 = vld [vmem:[%s4899 + $0x98] sm:$0xf]
        %v4939 = vld [vmem:[%s4899 + $0x9c] sm:$0xf]
        %v4940 = vld [vmem:[%s4899 + $0xa0] sm:$0xf]
        %v4941 = vld [vmem:[%s4899 + $0xa4] sm:$0xf]
        %v4942 = vld [vmem:[%s4899 + $0xa8] sm:$0xf]
        %v4943 = vld [vmem:[%s4899 + $0xac] sm:$0xf]
        %v4944 = vld [vmem:[%s4899 + $0xb0] sm:$0xf]
        %v4945 = vld [vmem:[%s4899 + $0xb4] sm:$0xf]
        %v4946 = vld [vmem:[%s4899 + $0xb8] sm:$0xf]
        %v4947 = vld [vmem:[%s4899 + $0xbc] sm:$0xf]
        %v4948 = vunpack.c.l.b16 %v4688
        %v4949 = vunpack.c.h.b16 %v4688
        %v4950 = vunpack.c.l.b16 %v4702
        %v4951 = vunpack.c.l.b16 %v4716
        %v4952 = vunpack.c.h.b16 %v4716
        %v4953 = vunpack.c.l.b16 %v4730
        %v4954 = vunpack.c.l.b16 %v4744
        %v4955 = vunpack.c.h.b16 %v4744
        %v4956 = vunpack.c.l.b16 %v4758
        %v4957 = vunpack.c.l.b16 %v4772
        %v4958 = vunpack.c.h.b16 %v4772
        %v4959 = vunpack.c.l.b16 %v4786
        %v4960 = vunpack.c.l.b16 %v4800
        %v4961 = vunpack.c.h.b16 %v4800
        %v4962 = vunpack.c.l.b16 %v4814
        %v4963 = vunpack.c.l.b16 %v4828
        %v4964 = vunpack.c.h.b16 %v4828
        %v4965 = vunpack.c.l.b16 %v4842
        %v4966 = vunpack.c.l.b16 %v4856
        %v4967 = vunpack.c.h.b16 %v4856
        %v4968 = vunpack.c.l.b16 %v4870
        %v4969 = vunpack.c.l.b16 %v4884
        %v4970 = vunpack.c.h.b16 %v4884
        %v4971 = vunpack.c.l.b16 %v4898
        %v4972 = vpack.c.b16 %v4951, %v4948
        %v4973 = vpack.c.b16 %v4952, %v4949
        %v4974 = vpack.c.b16 %v4953, %v4950
        %v4975 = vpack.c.b16 %v4957, %v4954
        %v4976 = vpack.c.b16 %v4958, %v4955
        %v4977 = vpack.c.b16 %v4959, %v4956
        %v4978 = vpack.c.b16 %v4963, %v4960
        %v4979 = vpack.c.b16 %v4964, %v4961
        %v4980 = vpack.c.b16 %v4965, %v4962
        %v4981 = vpack.c.b16 %v4969, %v4966
        %v4982 = vpack.c.b16 %v4970, %v4967
        %v4983 = vpack.c.b16 %v4971, %v4968
        %v5044 = vunpack.c.l.b16 %v4900
        %v5045 = vunpack.c.l.b16 %v4901
        %v5046 = vunpack.c.l.b16 %v4902
        %v5047 = vunpack.c.l.b16 %v4903
        %v5048 = vunpack.c.l.b16 %v4904
        %v5049 = vunpack.c.l.b16 %v4905
        %v5050 = vunpack.c.l.b16 %v4906
        %v5051 = vunpack.c.l.b16 %v4907
        %v5052 = vunpack.c.l.b16 %v4908
        %v5053 = vunpack.c.l.b16 %v4909
        %v5054 = vunpack.c.l.b16 %v4910
        %v5055 = vunpack.c.l.b16 %v4911
        %v5056 = vunpack.c.l.b16 %v4912
        %v5057 = vunpack.c.l.b16 %v4913
        %v5058 = vunpack.c.l.b16 %v4914
        %v5059 = vunpack.c.l.b16 %v4915
        %v5060 = vunpack.c.l.b16 %v4916
        %v5061 = vunpack.c.l.b16 %v4917
        %v5062 = vunpack.c.l.b16 %v4918
        %v5063 = vunpack.c.l.b16 %v4919
        %v5064 = vunpack.c.l.b16 %v4920
        %v5065 = vunpack.c.l.b16 %v4921
        %v5066 = vunpack.c.l.b16 %v4922
        %v5067 = vunpack.c.l.b16 %v4923
        %v5068 = vunpack.c.l.b16 %v4924
        %v5069 = vunpack.c.l.b16 %v4925
        %v5070 = vunpack.c.l.b16 %v4926
        %v5071 = vunpack.c.l.b16 %v4927
        %v5072 = vunpack.c.l.b16 %v4928
        %v5073 = vunpack.c.l.b16 %v4929
        %v5074 = vunpack.c.l.b16 %v4930
        %v5075 = vunpack.c.l.b16 %v4931
        %v5076 = vunpack.c.l.b16 %v4932
        %v5077 = vunpack.c.l.b16 %v4933
        %v5078 = vunpack.c.l.b16 %v4934
        %v5079 = vunpack.c.l.b16 %v4935
        %v5080 = vunpack.c.l.b16 %v4936
        %v5081 = vunpack.c.l.b16 %v4937
        %v5082 = vunpack.c.l.b16 %v4938
        %v5083 = vunpack.c.l.b16 %v4939
        %v5084 = vunpack.c.l.b16 %v4940
        %v5085 = vunpack.c.l.b16 %v4941
        %v5086 = vunpack.c.l.b16 %v4942
        %v5087 = vunpack.c.l.b16 %v4943
        %v5088 = vunpack.c.l.b16 %v4944
        %v5089 = vunpack.c.l.b16 %v4945
        %v5090 = vunpack.c.l.b16 %v4946
        %v5091 = vunpack.c.l.b16 %v4947
        %v5092 = vpack.c.b16 %v5045, %v5044
        %v5093 = vpack.c.b16 %v5047, %v5046
        %v5094 = vpack.c.b16 %v5049, %v5048
        %v5095 = vpack.c.b16 %v5051, %v5050
        %v5096 = vpack.c.b16 %v5053, %v5052
        %v5097 = vpack.c.b16 %v5055, %v5054
        %v5098 = vpack.c.b16 %v5057, %v5056
        %v5099 = vpack.c.b16 %v5059, %v5058
        %v5100 = vpack.c.b16 %v5061, %v5060
        %v5101 = vpack.c.b16 %v5063, %v5062
        %v5102 = vpack.c.b16 %v5065, %v5064
        %v5103 = vpack.c.b16 %v5067, %v5066
        %v5104 = vpack.c.b16 %v5069, %v5068
        %v5105 = vpack.c.b16 %v5071, %v5070
        %v5106 = vpack.c.b16 %v5073, %v5072
        %v5107 = vpack.c.b16 %v5075, %v5074
        %v5108 = vpack.c.b16 %v5077, %v5076
        %v5109 = vpack.c.b16 %v5079, %v5078
        %v5110 = vpack.c.b16 %v5081, %v5080
        %v5111 = vpack.c.b16 %v5083, %v5082
        %v5112 = vpack.c.b16 %v5085, %v5084
        %v5113 = vpack.c.b16 %v5087, %v5086
        %v5114 = vpack.c.b16 %v5089, %v5088
        %v5115 = vpack.c.b16 %v5091, %v5090
        %5140 = vmatprep.subr.bf16.mxu0 0
        %5141 = vmatpush1.bf16.msra.mxu0 %v5099
        %5142 = vmatprep.subr.bf16.mxu0 0
        %5143 = vmatpush1.bf16.msra.mxu0 %v5098
        %5144 = vmatprep.subr.bf16.mxu0 0
        %5145 = vmatpush1.bf16.msra.mxu0 %v5097
        %5146 = vmatprep.subr.bf16.mxu0 0
        %5147 = vmatpush1.bf16.msra.mxu0 %v5096
        %5148 = vmatprep.subr.bf16.mxu0 0
        %5149 = vmatpush1.bf16.msra.mxu0 %v5095
        %5150 = vmatprep.subr.bf16.mxu0 0
        %5151 = vmatpush1.bf16.msra.mxu0 %v5094
        %5152 = vmatprep.subr.bf16.mxu0 0
        %5153 = vmatpush1.bf16.msra.mxu0 %v5093
        %5154 = vmatprep.subr.bf16.mxu0 0
        %5155 = vmatpush1.bf16.msra.mxu0 %v5092
        %5156 = vmatprep.subr.bf16.mxu0 0
        %5157 = vmatpush2.bf16.msra.mxu0 %v5107
        %5158 = vmatprep.subr.bf16.mxu0 0
        %5159 = vmatpush2.bf16.msra.mxu0 %v5106
        %5160 = vmatprep.subr.bf16.mxu0 0
        %5161 = vmatpush2.bf16.msra.mxu0 %v5105
        %5162 = vmatprep.subr.bf16.mxu0 0
        %5163 = vmatpush2.bf16.msra.mxu0 %v5104
        %5164 = vmatprep.subr.bf16.mxu0 0
        %5165 = vmatpush2.bf16.msra.mxu0 %v5103
        %5166 = vmatprep.subr.bf16.mxu0 0
        %5167 = vmatpush2.bf16.msra.mxu0 %v5102
        %5168 = vmatprep.subr.bf16.mxu0 0
        %5169 = vmatpush2.bf16.msra.mxu0 %v5101
        %5170 = vmatprep.subr.bf16.mxu0 0
        %5171 = vmatpush2.bf16.msra.mxu0 %v5100
        %5172 = vmatprep.mubr.bf16.mxu0 %v4973
        %5173 = vmatmul.mubr.bf16.gmra.mxu0 %v4972
        %v5174 = vpop.f32.mrf.mxu0
        %v5175 = vadd.f32 0.0, %v5174
        %v5176 = vpop.f32.mrf.mxu0
        %v5177 = vpop.f32.mrf.mxu0
        %v5178 = vadd.f32 0.0, %v5177
        %v5179 = vpop.f32.mrf.mxu0
        %5180 = vmatprep.mubr.bf16.mxu0 %v4976
        %5181 = vmatmul.mubr.bf16.gmra.mxu0 %v4975
        %v5182 = vpop.f32.mrf.mxu0
        %v5183 = vadd.f32 0.0, %v5182
        %v5184 = vpop.f32.mrf.mxu0
        %v5185 = vpop.f32.mrf.mxu0
        %v5186 = vadd.f32 0.0, %v5185
        %v5187 = vpop.f32.mrf.mxu0
        %5188 = vmatprep.mubr.bf16.mxu0 %v4979
        %5189 = vmatmul.mubr.bf16.gmra.mxu0 %v4978
        %v5190 = vpop.f32.mrf.mxu0
        %v5191 = vadd.f32 0.0, %v5190
        %v5192 = vpop.f32.mrf.mxu0
        %v5193 = vpop.f32.mrf.mxu0
        %v5194 = vadd.f32 0.0, %v5193
        %v5195 = vpop.f32.mrf.mxu0
        %5196 = vmatprep.mubr.bf16.mxu0 %v4982
        %5197 = vmatmul.mubr.bf16.gmra.mxu0 %v4981
        %v5198 = vpop.f32.mrf.mxu0
        %v5199 = vadd.f32 0.0, %v5198
        %v5200 = vpop.f32.mrf.mxu0
        %v5201 = vpop.f32.mrf.mxu0
        %v5202 = vadd.f32 0.0, %v5201
        %v5203 = vpop.f32.mrf.mxu0
        %5204 = vdwg.mxu0
        %5205 = vmatprep.subr.bf16.mxu0 0
        %5206 = vmatpush1.bf16.msra.mxu0 %v5115
        %5207 = vmatprep.subr.bf16.mxu0 0
        %5208 = vmatpush1.bf16.msra.mxu0 %v5114
        %5209 = vmatprep.subr.bf16.mxu0 0
        %5210 = vmatpush1.bf16.msra.mxu0 %v5113
        %5211 = vmatprep.subr.bf16.mxu0 0
        %5212 = vmatpush1.bf16.msra.mxu0 %v5112
        %5213 = vmatprep.subr.bf16.mxu0 0
        %5214 = vmatpush1.bf16.msra.mxu0 %v5111
        %5215 = vmatprep.subr.bf16.mxu0 0
        %5216 = vmatpush1.bf16.msra.mxu0 %v5110
        %5217 = vmatprep.subr.bf16.mxu0 0
        %5218 = vmatpush1.bf16.msra.mxu0 %v5109
        %5219 = vmatprep.subr.bf16.mxu0 0
        %5220 = vmatpush1.bf16.msra.mxu0 %v5108
        %5221 = vmatprep.subr.bf16.mxu0 0
        %5222 = vmatpush2.bf16.msra.mxu0 0
        %5223 = vmatprep.subr.bf16.mxu0 0
        %5224 = vmatpush2.bf16.msra.mxu0 0
        %5225 = vmatprep.subr.bf16.mxu0 0
        %5226 = vmatpush2.bf16.msra.mxu0 0
        %5227 = vmatprep.subr.bf16.mxu0 0
        %5228 = vmatpush2.bf16.msra.mxu0 0
        %5229 = vmatprep.subr.bf16.mxu0 0
        %5230 = vmatpush2.bf16.msra.mxu0 0
        %5231 = vmatprep.subr.bf16.mxu0 0
        %5232 = vmatpush2.bf16.msra.mxu0 0
        %5233 = vmatprep.subr.bf16.mxu0 0
        %5234 = vmatpush2.bf16.msra.mxu0 0
        %5235 = vmatprep.subr.bf16.mxu0 0
        %5236 = vmatpush2.bf16.msra.mxu0 0
        %5237 = vmatprep.mubr.bf16.mxu0 0
        %5238 = vmatmul.mubr.bf16.gmra.mxu0 %v4974
        %v5239 = vpop.f32.mrf.mxu0
        %v5240 = vadd.f32 %v5175, %v5239
        %v5241 = vpop.f32.mrf.mxu0
        %v5242 = vpop.f32.mrf.mxu0
        %v5243 = vadd.f32 %v5178, %v5242
        %v5244 = vpop.f32.mrf.mxu0
        %5245 = vmatprep.mubr.bf16.mxu0 0
        %5246 = vmatmul.mubr.bf16.gmra.mxu0 %v4977
        %v5247 = vpop.f32.mrf.mxu0
        %v5248 = vadd.f32 %v5183, %v5247
        %v5249 = vpop.f32.mrf.mxu0
        %v5250 = vpop.f32.mrf.mxu0
        %v5251 = vadd.f32 %v5186, %v5250
        %v5252 = vpop.f32.mrf.mxu0
        %5253 = vmatprep.mubr.bf16.mxu0 0
        %5254 = vmatmul.mubr.bf16.gmra.mxu0 %v4980
        %v5255 = vpop.f32.mrf.mxu0
        %v5256 = vadd.f32 %v5191, %v5255
        %v5257 = vpop.f32.mrf.mxu0
        %v5258 = vpop.f32.mrf.mxu0
        %v5259 = vadd.f32 %v5194, %v5258
        %v5260 = vpop.f32.mrf.mxu0
        %5261 = vmatprep.mubr.bf16.mxu0 0
        %5262 = vmatmul.mubr.bf16.gmra.mxu0 %v4983
        %v5263 = vpop.f32.mrf.mxu0
        %v5264 = vadd.f32 %v5199, %v5263
        %v5265 = vpop.f32.mrf.mxu0
        %v5266 = vpop.f32.mrf.mxu0
        %v5267 = vadd.f32 %v5202, %v5266
        %v5268 = vpop.f32.mrf.mxu0
        %5269 = vdwg.mxu0
        %v5270 = vpack.c.b16 %v4502, %v4499
        %v5271 = vpack.c.b16 %v4503, %v4500
        %v5272 = vpack.c.b16 %v4504, %v4501
        %v5273 = vpack.c.b16 %v4508, %v4505
        %v5274 = vpack.c.b16 %v4509, %v4506
        %v5275 = vpack.c.b16 %v4510, %v4507
        %v5276 = vpack.c.b16 %v4514, %v4511
        %v5277 = vpack.c.b16 %v4515, %v4512
        %v5278 = vpack.c.b16 %v4516, %v4513
        %v5279 = vpack.c.b16 %v4520, %v4517
        %v5280 = vpack.c.b16 %v4521, %v4518
        %v5281 = vpack.c.b16 %v4522, %v4519
        %v5342 = vunpack.c.l.b16 %v4523
        %v5343 = vunpack.c.l.b16 %v4524
        %v5344 = vunpack.c.l.b16 %v4525
        %v5345 = vunpack.c.l.b16 %v4526
        %v5346 = vunpack.c.l.b16 %v4527
        %v5347 = vunpack.c.l.b16 %v4528
        %v5348 = vunpack.c.l.b16 %v4529
        %v5349 = vunpack.c.l.b16 %v4530
        %v5350 = vunpack.c.l.b16 %v4531
        %v5351 = vunpack.c.l.b16 %v4532
        %v5352 = vunpack.c.l.b16 %v4533
        %v5353 = vunpack.c.l.b16 %v4534
        %v5354 = vunpack.c.l.b16 %v4535
        %v5355 = vunpack.c.l.b16 %v4536
        %v5356 = vunpack.c.l.b16 %v4537
        %v5357 = vunpack.c.l.b16 %v4538
        %v5358 = vunpack.c.l.b16 %v4539
        %v5359 = vunpack.c.l.b16 %v4540
        %v5360 = vunpack.c.l.b16 %v4541
        %v5361 = vunpack.c.l.b16 %v4542
        %v5362 = vunpack.c.l.b16 %v4543
        %v5363 = vunpack.c.l.b16 %v4544
        %v5364 = vunpack.c.l.b16 %v4545
        %v5365 = vunpack.c.l.b16 %v4546
        %v5366 = vunpack.c.l.b16 %v4547
        %v5367 = vunpack.c.l.b16 %v4548
        %v5368 = vunpack.c.l.b16 %v4549
        %v5369 = vunpack.c.l.b16 %v4550
        %v5370 = vunpack.c.l.b16 %v4551
        %v5371 = vunpack.c.l.b16 %v4552
        %v5372 = vunpack.c.l.b16 %v4553
        %v5373 = vunpack.c.l.b16 %v4554
        %v5374 = vunpack.c.l.b16 %v4555
        %v5375 = vunpack.c.l.b16 %v4556
        %v5376 = vunpack.c.l.b16 %v4557
        %v5377 = vunpack.c.l.b16 %v4558
        %v5378 = vunpack.c.l.b16 %v4559
        %v5379 = vunpack.c.l.b16 %v4560
        %v5380 = vunpack.c.l.b16 %v4561
        %v5381 = vunpack.c.l.b16 %v4562
        %v5382 = vunpack.c.l.b16 %v4563
        %v5383 = vunpack.c.l.b16 %v4564
        %v5384 = vunpack.c.l.b16 %v4565
        %v5385 = vunpack.c.l.b16 %v4566
        %v5386 = vunpack.c.l.b16 %v4567
        %v5387 = vunpack.c.l.b16 %v4568
        %v5388 = vunpack.c.l.b16 %v4569
        %v5389 = vunpack.c.l.b16 %v4570
        %v5390 = vpack.c.b16 %v5343, %v5342
        %v5391 = vpack.c.b16 %v5345, %v5344
        %v5392 = vpack.c.b16 %v5347, %v5346
        %v5393 = vpack.c.b16 %v5349, %v5348
        %v5394 = vpack.c.b16 %v5351, %v5350
        %v5395 = vpack.c.b16 %v5353, %v5352
        %v5396 = vpack.c.b16 %v5355, %v5354
        %v5397 = vpack.c.b16 %v5357, %v5356
        %v5398 = vpack.c.b16 %v5359, %v5358
        %v5399 = vpack.c.b16 %v5361, %v5360
        %v5400 = vpack.c.b16 %v5363, %v5362
        %v5401 = vpack.c.b16 %v5365, %v5364
        %v5402 = vpack.c.b16 %v5367, %v5366
        %v5403 = vpack.c.b16 %v5369, %v5368
        %v5404 = vpack.c.b16 %v5371, %v5370
        %v5405 = vpack.c.b16 %v5373, %v5372
        %v5406 = vpack.c.b16 %v5375, %v5374
        %v5407 = vpack.c.b16 %v5377, %v5376
        %v5408 = vpack.c.b16 %v5379, %v5378
        %v5409 = vpack.c.b16 %v5381, %v5380
        %v5410 = vpack.c.b16 %v5383, %v5382
        %v5411 = vpack.c.b16 %v5385, %v5384
        %v5412 = vpack.c.b16 %v5387, %v5386
        %v5413 = vpack.c.b16 %v5389, %v5388
        %5438 = vmatprep.subr.bf16.mxu0 0
        %5439 = vmatpush1.bf16.msra.mxu0 %v5397
        %5440 = vmatprep.subr.bf16.mxu0 0
        %5441 = vmatpush1.bf16.msra.mxu0 %v5396
        %5442 = vmatprep.subr.bf16.mxu0 0
        %5443 = vmatpush1.bf16.msra.mxu0 %v5395
        %5444 = vmatprep.subr.bf16.mxu0 0
        %5445 = vmatpush1.bf16.msra.mxu0 %v5394
        %5446 = vmatprep.subr.bf16.mxu0 0
        %5447 = vmatpush1.bf16.msra.mxu0 %v5393
        %5448 = vmatprep.subr.bf16.mxu0 0
        %5449 = vmatpush1.bf16.msra.mxu0 %v5392
        %5450 = vmatprep.subr.bf16.mxu0 0
        %5451 = vmatpush1.bf16.msra.mxu0 %v5391
        %5452 = vmatprep.subr.bf16.mxu0 0
        %5453 = vmatpush1.bf16.msra.mxu0 %v5390
        %5454 = vmatprep.subr.bf16.mxu0 0
        %5455 = vmatpush2.bf16.msra.mxu0 %v5405
        %5456 = vmatprep.subr.bf16.mxu0 0
        %5457 = vmatpush2.bf16.msra.mxu0 %v5404
        %5458 = vmatprep.subr.bf16.mxu0 0
        %5459 = vmatpush2.bf16.msra.mxu0 %v5403
        %5460 = vmatprep.subr.bf16.mxu0 0
        %5461 = vmatpush2.bf16.msra.mxu0 %v5402
        %5462 = vmatprep.subr.bf16.mxu0 0
        %5463 = vmatpush2.bf16.msra.mxu0 %v5401
        %5464 = vmatprep.subr.bf16.mxu0 0
        %5465 = vmatpush2.bf16.msra.mxu0 %v5400
        %5466 = vmatprep.subr.bf16.mxu0 0
        %5467 = vmatpush2.bf16.msra.mxu0 %v5399
        %5468 = vmatprep.subr.bf16.mxu0 0
        %5469 = vmatpush2.bf16.msra.mxu0 %v5398
        %5470 = vmatprep.mubr.bf16.mxu0 %v5271
        %5471 = vmatmul.mubr.bf16.gmra.mxu0 %v5270
        %v5472 = vpop.f32.mrf.mxu0
        %v5473 = vadd.f32 %v5240, %v5472
        %v5474 = vpop.f32.mrf.mxu0
        %v5475 = vpop.f32.mrf.mxu0
        %v5476 = vadd.f32 %v5243, %v5475
        %v5477 = vpop.f32.mrf.mxu0
        %5478 = vmatprep.mubr.bf16.mxu0 %v5274
        %5479 = vmatmul.mubr.bf16.gmra.mxu0 %v5273
        %v5480 = vpop.f32.mrf.mxu0
        %v5481 = vadd.f32 %v5248, %v5480
        %v5482 = vpop.f32.mrf.mxu0
        %v5483 = vpop.f32.mrf.mxu0
        %v5484 = vadd.f32 %v5251, %v5483
        %v5485 = vpop.f32.mrf.mxu0
        %5486 = vmatprep.mubr.bf16.mxu0 %v5277
        %5487 = vmatmul.mubr.bf16.gmra.mxu0 %v5276
        %v5488 = vpop.f32.mrf.mxu0
        %v5489 = vadd.f32 %v5256, %v5488
        %v5490 = vpop.f32.mrf.mxu0
        %v5491 = vpop.f32.mrf.mxu0
        %v5492 = vadd.f32 %v5259, %v5491
        %v5493 = vpop.f32.mrf.mxu0
        %5494 = vmatprep.mubr.bf16.mxu0 %v5280
        %5495 = vmatmul.mubr.bf16.gmra.mxu0 %v5279
        %v5496 = vpop.f32.mrf.mxu0
        %v5497 = vadd.f32 %v5264, %v5496
        %v5498 = vpop.f32.mrf.mxu0
        %v5499 = vpop.f32.mrf.mxu0
        %v5500 = vadd.f32 %v5267, %v5499
        %v5501 = vpop.f32.mrf.mxu0
        %5502 = vdwg.mxu0
        %5503 = vmatprep.subr.bf16.mxu0 0
        %5504 = vmatpush1.bf16.msra.mxu0 %v5413
        %5505 = vmatprep.subr.bf16.mxu0 0
        %5506 = vmatpush1.bf16.msra.mxu0 %v5412
        %5507 = vmatprep.subr.bf16.mxu0 0
        %5508 = vmatpush1.bf16.msra.mxu0 %v5411
        %5509 = vmatprep.subr.bf16.mxu0 0
        %5510 = vmatpush1.bf16.msra.mxu0 %v5410
        %5511 = vmatprep.subr.bf16.mxu0 0
        %5512 = vmatpush1.bf16.msra.mxu0 %v5409
        %5513 = vmatprep.subr.bf16.mxu0 0
        %5514 = vmatpush1.bf16.msra.mxu0 %v5408
        %5515 = vmatprep.subr.bf16.mxu0 0
        %5516 = vmatpush1.bf16.msra.mxu0 %v5407
        %5517 = vmatprep.subr.bf16.mxu0 0
        %5518 = vmatpush1.bf16.msra.mxu0 %v5406
        %5519 = vmatprep.subr.bf16.mxu0 0
        %5520 = vmatpush2.bf16.msra.mxu0 0
        %5521 = vmatprep.subr.bf16.mxu0 0
        %5522 = vmatpush2.bf16.msra.mxu0 0
        %5523 = vmatprep.subr.bf16.mxu0 0
        %5524 = vmatpush2.bf16.msra.mxu0 0
        %5525 = vmatprep.subr.bf16.mxu0 0
        %5526 = vmatpush2.bf16.msra.mxu0 0
        %5527 = vmatprep.subr.bf16.mxu0 0
        %5528 = vmatpush2.bf16.msra.mxu0 0
        %5529 = vmatprep.subr.bf16.mxu0 0
        %5530 = vmatpush2.bf16.msra.mxu0 0
        %5531 = vmatprep.subr.bf16.mxu0 0
        %5532 = vmatpush2.bf16.msra.mxu0 0
        %5533 = vmatprep.subr.bf16.mxu0 0
        %5534 = vmatpush2.bf16.msra.mxu0 0
        %5535 = vmatprep.mubr.bf16.mxu0 0
        %5536 = vmatmul.mubr.bf16.gmra.mxu0 %v5272
        %v5537 = vpop.f32.mrf.mxu0
        %v5538 = vadd.f32 %v5473, %v5537
        %v5539 = vpop.f32.mrf.mxu0
        %v5540 = vpop.f32.mrf.mxu0
        %v5541 = vadd.f32 %v5476, %v5540
        %v5542 = vpop.f32.mrf.mxu0
        %5543 = vmatprep.mubr.bf16.mxu0 0
        %5544 = vmatmul.mubr.bf16.gmra.mxu0 %v5275
        %v5545 = vpop.f32.mrf.mxu0
        %v5546 = vadd.f32 %v5481, %v5545
        %v5547 = vpop.f32.mrf.mxu0
        %v5548 = vpop.f32.mrf.mxu0
        %v5549 = vadd.f32 %v5484, %v5548
        %v5550 = vpop.f32.mrf.mxu0
        %5551 = vmatprep.mubr.bf16.mxu0 0
        %5552 = vmatmul.mubr.bf16.gmra.mxu0 %v5278
        %v5553 = vpop.f32.mrf.mxu0
        %v5554 = vadd.f32 %v5489, %v5553
        %v5555 = vpop.f32.mrf.mxu0
        %v5556 = vpop.f32.mrf.mxu0
        %v5557 = vadd.f32 %v5492, %v5556
        %v5558 = vpop.f32.mrf.mxu0
        %5559 = vmatprep.mubr.bf16.mxu0 0
        %5560 = vmatmul.mubr.bf16.gmra.mxu0 %v5281
        %v5561 = vpop.f32.mrf.mxu0
        %v5562 = vadd.f32 %v5497, %v5561
        %v5563 = vpop.f32.mrf.mxu0
        %v5564 = vpop.f32.mrf.mxu0
        %v5565 = vadd.f32 %v5500, %v5564
        %v5566 = vpop.f32.mrf.mxu0
        %5567 = vdwg.mxu0
        %v5568 = vld [vmem:[#allocation5] sm:$0xe]
        %v5569 = vld [vmem:[#allocation5 + $0x8] sm:$0xe]
        %v5570 = vld [vmem:[#allocation5 + $0x10] sm:$0xe]
        %v5571 = vld [vmem:[#allocation5 + $0x18] sm:$0xe]
        %v5572 = vld [vmem:[#allocation5 + $0x20] sm:$0xe]
        %v5573 = vld [vmem:[#allocation5 + $0x28] sm:$0xe]
        %v5574 = vld [vmem:[#allocation5 + $0x30] sm:$0xe]
        %v5575 = vld [vmem:[#allocation5 + $0x38] sm:$0xe]
        %v5576 = vld [vmem:[%s4457] sm:$0xe]
        %v5577 = vld [vmem:[%s4457 + $0x8] sm:$0xe]
        %v5578 = vld [vmem:[%s4457 + $0x10] sm:$0xe]
        %v5579 = vld [vmem:[%s4457 + $0x18] sm:$0xe]
        %v5580 = vld [vmem:[%s4457 + $0x20] sm:$0xe]
        %v5581 = vld [vmem:[%s4457 + $0x28] sm:$0xe]
        %v5582 = vld [vmem:[%s4457 + $0x30] sm:$0xe]
        %v5583 = vld [vmem:[%s4457 + $0x38] sm:$0xe]
        %v5584 = vld [vmem:[%s4466] sm:$0xe]
        %v5585 = vld [vmem:[%s4466 + $0x8] sm:$0xe]
        %v5586 = vld [vmem:[%s4466 + $0x10] sm:$0xe]
        %v5587 = vld [vmem:[%s4466 + $0x18] sm:$0xe]
        %v5588 = vld [vmem:[%s4466 + $0x20] sm:$0xe]
        %v5589 = vld [vmem:[%s4466 + $0x28] sm:$0xe]
        %v5590 = vld [vmem:[%s4466 + $0x30] sm:$0xe]
        %v5591 = vld [vmem:[%s4466 + $0x38] sm:$0xe]
        %v5600 = vunpack.c.l.b16 %v5568
        %v5601 = vunpack.c.l.b16 %v5569
        %v5602 = vunpack.c.l.b16 %v5570
        %v5603 = vunpack.c.l.b16 %v5571
        %v5604 = vunpack.c.l.b16 %v5572
        %v5605 = vunpack.c.l.b16 %v5573
        %v5606 = vunpack.c.l.b16 %v5574
        %v5607 = vunpack.c.l.b16 %v5575
        %v5616 = vunpack.c.l.b16 %v5576
        %v5617 = vunpack.c.l.b16 %v5577
        %v5618 = vunpack.c.l.b16 %v5578
        %v5619 = vunpack.c.l.b16 %v5579
        %v5620 = vunpack.c.l.b16 %v5580
        %v5621 = vunpack.c.l.b16 %v5581
        %v5622 = vunpack.c.l.b16 %v5582
        %v5623 = vunpack.c.l.b16 %v5583
        %v5632 = vunpack.c.l.b16 %v5584
        %v5633 = vunpack.c.l.b16 %v5585
        %v5634 = vunpack.c.l.b16 %v5586
        %v5635 = vunpack.c.l.b16 %v5587
        %v5636 = vunpack.c.l.b16 %v5588
        %v5637 = vunpack.c.l.b16 %v5589
        %v5638 = vunpack.c.l.b16 %v5590
        %v5639 = vunpack.c.l.b16 %v5591
        %v5640 = vpack.c.b16 %v5616, %v5600
        %v5641 = vpack.c.b16 %v5632, %v5632
        %v5642 = vpack.c.b16 %v5617, %v5601
        %v5643 = vpack.c.b16 %v5633, %v5633
        %v5644 = vpack.c.b16 %v5618, %v5602
        %v5645 = vpack.c.b16 %v5634, %v5634
        %v5646 = vpack.c.b16 %v5619, %v5603
        %v5647 = vpack.c.b16 %v5635, %v5635
        %v5648 = vpack.c.b16 %v5620, %v5604
        %v5649 = vpack.c.b16 %v5636, %v5636
        %v5650 = vpack.c.b16 %v5621, %v5605
        %v5651 = vpack.c.b16 %v5637, %v5637
        %v5652 = vpack.c.b16 %v5622, %v5606
        %v5653 = vpack.c.b16 %v5638, %v5638
        %v5654 = vpack.c.b16 %v5623, %v5607
        %v5655 = vpack.c.b16 %v5639, %v5639
        %v5656 = vrot.slane %v5640, 5
        %v5657 = vrot.slane %v5656, 4
        %v5658 = vrot.slane %v4645, 5
        %v5659 = vsel %vm1863, %v5657, %v5658
        %v5660 = vrot.slane %v5641, 5
        %v5661 = vrot.slane %v5660, 4
        %v5662 = vrot.slane %v4646, 5
        %v5663 = vsel %vm1863, %v5661, %v5662
        %v5664 = vrot.slane %v5642, 5
        %v5665 = vrot.slane %v5664, 4
        %v5666 = vrot.slane %v4649, 5
        %v5667 = vsel %vm1863, %v5665, %v5666
        %v5668 = vrot.slane %v5643, 5
        %v5669 = vrot.slane %v5668, 4
        %v5670 = vrot.slane %v4650, 5
        %v5671 = vsel %vm1863, %v5669, %v5670
        %v5672 = vrot.slane %v5644, 5
        %v5673 = vrot.slane %v5672, 4
        %v5674 = vrot.slane %v4653, 5
        %v5675 = vsel %vm1863, %v5673, %v5674
        %v5676 = vrot.slane %v5645, 5
        %v5677 = vrot.slane %v5676, 4
        %v5678 = vrot.slane %v4654, 5
        %v5679 = vsel %vm1863, %v5677, %v5678
        %v5680 = vrot.slane %v5646, 5
        %v5681 = vrot.slane %v5680, 4
        %v5682 = vrot.slane %v4657, 5
        %v5683 = vsel %vm1863, %v5681, %v5682
        %v5684 = vrot.slane %v5647, 5
        %v5685 = vrot.slane %v5684, 4
        %v5686 = vrot.slane %v4658, 5
        %v5687 = vsel %vm1863, %v5685, %v5686
        %v5688 = vrot.slane %v5648, 5
        %v5689 = vrot.slane %v5688, 4
        %v5690 = vrot.slane %v4661, 5
        %v5691 = vsel %vm1863, %v5689, %v5690
        %v5692 = vrot.slane %v5649, 5
        %v5693 = vrot.slane %v5692, 4
        %v5694 = vrot.slane %v4662, 5
        %v5695 = vsel %vm1863, %v5693, %v5694
        %v5696 = vrot.slane %v5650, 5
        %v5697 = vrot.slane %v5696, 4
        %v5698 = vrot.slane %v4665, 5
        %v5699 = vsel %vm1863, %v5697, %v5698
        %v5700 = vrot.slane %v5651, 5
        %v5701 = vrot.slane %v5700, 4
        %v5702 = vrot.slane %v4666, 5
        %v5703 = vsel %vm1863, %v5701, %v5702
        %v5704 = vrot.slane %v5652, 5
        %v5705 = vrot.slane %v5704, 4
        %v5706 = vrot.slane %v4669, 5
        %v5707 = vsel %vm1863, %v5705, %v5706
        %v5708 = vrot.slane %v5653, 5
        %v5709 = vrot.slane %v5708, 4
        %v5710 = vrot.slane %v4670, 5
        %v5711 = vsel %vm1863, %v5709, %v5710
        %v5712 = vrot.slane %v5654, 5
        %v5713 = vrot.slane %v5712, 4
        %v5714 = vrot.slane %v4673, 5
        %v5715 = vsel %vm1863, %v5713, %v5714
        %v5716 = vrot.slane %v5655, 5
        %v5717 = vrot.slane %v5716, 4
        %v5718 = vrot.slane %v4674, 5
        %v5719 = vsel %vm1863, %v5717, %v5718
        %s5720 = scalar_lea.vmem [#allocation10], 384
        %v5721 = vld [vmem:[%s5720] sm:$0xf]
        %v5722 = vld [vmem:[%s5720 + $0x4] sm:$0xf]
        %v5723 = vld [vmem:[%s5720 + $0x8] sm:$0xf]
        %v5724 = vld [vmem:[%s5720 + $0xc] sm:$0xf]
        %v5725 = vld [vmem:[%s5720 + $0x10] sm:$0xf]
        %v5726 = vld [vmem:[%s5720 + $0x14] sm:$0xf]
        %v5727 = vld [vmem:[%s5720 + $0x18] sm:$0xf]
        %v5728 = vld [vmem:[%s5720 + $0x1c] sm:$0xf]
        %v5729 = vld [vmem:[%s5720 + $0x20] sm:$0xf]
        %v5730 = vld [vmem:[%s5720 + $0x24] sm:$0xf]
        %v5731 = vld [vmem:[%s5720 + $0x28] sm:$0xf]
        %v5732 = vld [vmem:[%s5720 + $0x2c] sm:$0xf]
        %v5733 = vld [vmem:[%s5720 + $0x30] sm:$0xf]
        %v5734 = vld [vmem:[%s5720 + $0x34] sm:$0xf]
        %v5735 = vld [vmem:[%s5720 + $0x38] sm:$0xf]
        %v5736 = vld [vmem:[%s5720 + $0x3c] sm:$0xf]
        %v5737 = vld [vmem:[%s5720 + $0x40] sm:$0xf]
        %v5738 = vld [vmem:[%s5720 + $0x44] sm:$0xf]
        %v5739 = vld [vmem:[%s5720 + $0x48] sm:$0xf]
        %v5740 = vld [vmem:[%s5720 + $0x4c] sm:$0xf]
        %v5741 = vld [vmem:[%s5720 + $0x50] sm:$0xf]
        %v5742 = vld [vmem:[%s5720 + $0x54] sm:$0xf]
        %v5743 = vld [vmem:[%s5720 + $0x58] sm:$0xf]
        %v5744 = vld [vmem:[%s5720 + $0x5c] sm:$0xf]
        %v5745 = vld [vmem:[%s5720 + $0x60] sm:$0xf]
        %v5746 = vld [vmem:[%s5720 + $0x64] sm:$0xf]
        %v5747 = vld [vmem:[%s5720 + $0x68] sm:$0xf]
        %v5748 = vld [vmem:[%s5720 + $0x6c] sm:$0xf]
        %v5749 = vld [vmem:[%s5720 + $0x70] sm:$0xf]
        %v5750 = vld [vmem:[%s5720 + $0x74] sm:$0xf]
        %v5751 = vld [vmem:[%s5720 + $0x78] sm:$0xf]
        %v5752 = vld [vmem:[%s5720 + $0x7c] sm:$0xf]
        %v5753 = vld [vmem:[%s5720 + $0x80] sm:$0xf]
        %v5754 = vld [vmem:[%s5720 + $0x84] sm:$0xf]
        %v5755 = vld [vmem:[%s5720 + $0x88] sm:$0xf]
        %v5756 = vld [vmem:[%s5720 + $0x8c] sm:$0xf]
        %v5757 = vld [vmem:[%s5720 + $0x90] sm:$0xf]
        %v5758 = vld [vmem:[%s5720 + $0x94] sm:$0xf]
        %v5759 = vld [vmem:[%s5720 + $0x98] sm:$0xf]
        %v5760 = vld [vmem:[%s5720 + $0x9c] sm:$0xf]
        %v5761 = vld [vmem:[%s5720 + $0xa0] sm:$0xf]
        %v5762 = vld [vmem:[%s5720 + $0xa4] sm:$0xf]
        %v5763 = vld [vmem:[%s5720 + $0xa8] sm:$0xf]
        %v5764 = vld [vmem:[%s5720 + $0xac] sm:$0xf]
        %v5765 = vld [vmem:[%s5720 + $0xb0] sm:$0xf]
        %v5766 = vld [vmem:[%s5720 + $0xb4] sm:$0xf]
        %v5767 = vld [vmem:[%s5720 + $0xb8] sm:$0xf]
        %v5768 = vld [vmem:[%s5720 + $0xbc] sm:$0xf]
        %v5769 = vunpack.c.l.b16 %v5659
        %v5770 = vunpack.c.h.b16 %v5659
        %v5771 = vunpack.c.l.b16 %v5663
        %v5772 = vunpack.c.l.b16 %v5667
        %v5773 = vunpack.c.h.b16 %v5667
        %v5774 = vunpack.c.l.b16 %v5671
        %v5775 = vunpack.c.l.b16 %v5675
        %v5776 = vunpack.c.h.b16 %v5675
        %v5777 = vunpack.c.l.b16 %v5679
        %v5778 = vunpack.c.l.b16 %v5683
        %v5779 = vunpack.c.h.b16 %v5683
        %v5780 = vunpack.c.l.b16 %v5687
        %v5781 = vunpack.c.l.b16 %v5691
        %v5782 = vunpack.c.h.b16 %v5691
        %v5783 = vunpack.c.l.b16 %v5695
        %v5784 = vunpack.c.l.b16 %v5699
        %v5785 = vunpack.c.h.b16 %v5699
        %v5786 = vunpack.c.l.b16 %v5703
        %v5787 = vunpack.c.l.b16 %v5707
        %v5788 = vunpack.c.h.b16 %v5707
        %v5789 = vunpack.c.l.b16 %v5711
        %v5790 = vunpack.c.l.b16 %v5715
        %v5791 = vunpack.c.h.b16 %v5715
        %v5792 = vunpack.c.l.b16 %v5719
        %v5793 = vpack.c.b16 %v5772, %v5769
        %v5794 = vpack.c.b16 %v5773, %v5770
        %v5795 = vpack.c.b16 %v5774, %v5771
        %v5796 = vpack.c.b16 %v5778, %v5775
        %v5797 = vpack.c.b16 %v5779, %v5776
        %v5798 = vpack.c.b16 %v5780, %v5777
        %v5799 = vpack.c.b16 %v5784, %v5781
        %v5800 = vpack.c.b16 %v5785, %v5782
        %v5801 = vpack.c.b16 %v5786, %v5783
        %v5802 = vpack.c.b16 %v5790, %v5787
        %v5803 = vpack.c.b16 %v5791, %v5788
        %v5804 = vpack.c.b16 %v5792, %v5789
        %v5865 = vunpack.c.l.b16 %v5721
        %v5866 = vunpack.c.l.b16 %v5722
        %v5867 = vunpack.c.l.b16 %v5723
        %v5868 = vunpack.c.l.b16 %v5724
        %v5869 = vunpack.c.l.b16 %v5725
        %v5870 = vunpack.c.l.b16 %v5726
        %v5871 = vunpack.c.l.b16 %v5727
        %v5872 = vunpack.c.l.b16 %v5728
        %v5873 = vunpack.c.l.b16 %v5729
        %v5874 = vunpack.c.l.b16 %v5730
        %v5875 = vunpack.c.l.b16 %v5731
        %v5876 = vunpack.c.l.b16 %v5732
        %v5877 = vunpack.c.l.b16 %v5733
        %v5878 = vunpack.c.l.b16 %v5734
        %v5879 = vunpack.c.l.b16 %v5735
        %v5880 = vunpack.c.l.b16 %v5736
        %v5881 = vunpack.c.l.b16 %v5737
        %v5882 = vunpack.c.l.b16 %v5738
        %v5883 = vunpack.c.l.b16 %v5739
        %v5884 = vunpack.c.l.b16 %v5740
        %v5885 = vunpack.c.l.b16 %v5741
        %v5886 = vunpack.c.l.b16 %v5742
        %v5887 = vunpack.c.l.b16 %v5743
        %v5888 = vunpack.c.l.b16 %v5744
        %v5889 = vunpack.c.l.b16 %v5745
        %v5890 = vunpack.c.l.b16 %v5746
        %v5891 = vunpack.c.l.b16 %v5747
        %v5892 = vunpack.c.l.b16 %v5748
        %v5893 = vunpack.c.l.b16 %v5749
        %v5894 = vunpack.c.l.b16 %v5750
        %v5895 = vunpack.c.l.b16 %v5751
        %v5896 = vunpack.c.l.b16 %v5752
        %v5897 = vunpack.c.l.b16 %v5753
        %v5898 = vunpack.c.l.b16 %v5754
        %v5899 = vunpack.c.l.b16 %v5755
        %v5900 = vunpack.c.l.b16 %v5756
        %v5901 = vunpack.c.l.b16 %v5757
        %v5902 = vunpack.c.l.b16 %v5758
        %v5903 = vunpack.c.l.b16 %v5759
        %v5904 = vunpack.c.l.b16 %v5760
        %v5905 = vunpack.c.l.b16 %v5761
        %v5906 = vunpack.c.l.b16 %v5762
        %v5907 = vunpack.c.l.b16 %v5763
        %v5908 = vunpack.c.l.b16 %v5764
        %v5909 = vunpack.c.l.b16 %v5765
        %v5910 = vunpack.c.l.b16 %v5766
        %v5911 = vunpack.c.l.b16 %v5767
        %v5912 = vunpack.c.l.b16 %v5768
        %v5913 = vpack.c.b16 %v5866, %v5865
        %v5914 = vpack.c.b16 %v5868, %v5867
        %v5915 = vpack.c.b16 %v5870, %v5869
        %v5916 = vpack.c.b16 %v5872, %v5871
        %v5917 = vpack.c.b16 %v5874, %v5873
        %v5918 = vpack.c.b16 %v5876, %v5875
        %v5919 = vpack.c.b16 %v5878, %v5877
        %v5920 = vpack.c.b16 %v5880, %v5879
        %v5921 = vpack.c.b16 %v5882, %v5881
        %v5922 = vpack.c.b16 %v5884, %v5883
        %v5923 = vpack.c.b16 %v5886, %v5885
        %v5924 = vpack.c.b16 %v5888, %v5887
        %v5925 = vpack.c.b16 %v5890, %v5889
        %v5926 = vpack.c.b16 %v5892, %v5891
        %v5927 = vpack.c.b16 %v5894, %v5893
        %v5928 = vpack.c.b16 %v5896, %v5895
        %v5929 = vpack.c.b16 %v5898, %v5897
        %v5930 = vpack.c.b16 %v5900, %v5899
        %v5931 = vpack.c.b16 %v5902, %v5901
        %v5932 = vpack.c.b16 %v5904, %v5903
        %v5933 = vpack.c.b16 %v5906, %v5905
        %v5934 = vpack.c.b16 %v5908, %v5907
        %v5935 = vpack.c.b16 %v5910, %v5909
        %v5936 = vpack.c.b16 %v5912, %v5911
        %5961 = vmatprep.subr.bf16.mxu0 0
        %5962 = vmatpush1.bf16.msra.mxu0 %v5920
        %5963 = vmatprep.subr.bf16.mxu0 0
        %5964 = vmatpush1.bf16.msra.mxu0 %v5919
        %5965 = vmatprep.subr.bf16.mxu0 0
        %5966 = vmatpush1.bf16.msra.mxu0 %v5918
        %5967 = vmatprep.subr.bf16.mxu0 0
        %5968 = vmatpush1.bf16.msra.mxu0 %v5917
        %5969 = vmatprep.subr.bf16.mxu0 0
        %5970 = vmatpush1.bf16.msra.mxu0 %v5916
        %5971 = vmatprep.subr.bf16.mxu0 0
        %5972 = vmatpush1.bf16.msra.mxu0 %v5915
        %5973 = vmatprep.subr.bf16.mxu0 0
        %5974 = vmatpush1.bf16.msra.mxu0 %v5914
        %5975 = vmatprep.subr.bf16.mxu0 0
        %5976 = vmatpush1.bf16.msra.mxu0 %v5913
        %5977 = vmatprep.subr.bf16.mxu0 0
        %5978 = vmatpush2.bf16.msra.mxu0 %v5928
        %5979 = vmatprep.subr.bf16.mxu0 0
        %5980 = vmatpush2.bf16.msra.mxu0 %v5927
        %5981 = vmatprep.subr.bf16.mxu0 0
        %5982 = vmatpush2.bf16.msra.mxu0 %v5926
        %5983 = vmatprep.subr.bf16.mxu0 0
        %5984 = vmatpush2.bf16.msra.mxu0 %v5925
        %5985 = vmatprep.subr.bf16.mxu0 0
        %5986 = vmatpush2.bf16.msra.mxu0 %v5924
        %5987 = vmatprep.subr.bf16.mxu0 0
        %5988 = vmatpush2.bf16.msra.mxu0 %v5923
        %5989 = vmatprep.subr.bf16.mxu0 0
        %5990 = vmatpush2.bf16.msra.mxu0 %v5922
        %5991 = vmatprep.subr.bf16.mxu0 0
        %5992 = vmatpush2.bf16.msra.mxu0 %v5921
        %5993 = vmatprep.mubr.bf16.mxu0 %v5794
        %5994 = vmatmul.mubr.bf16.gmra.mxu0 %v5793
        %v5995 = vpop.f32.mrf.mxu0
        %v5996 = vadd.f32 0.0, %v5995
        %v5997 = vpop.f32.mrf.mxu0
        %v5998 = vpop.f32.mrf.mxu0
        %v5999 = vadd.f32 0.0, %v5998
        %v6000 = vpop.f32.mrf.mxu0
        %6001 = vmatprep.mubr.bf16.mxu0 %v5797
        %6002 = vmatmul.mubr.bf16.gmra.mxu0 %v5796
        %v6003 = vpop.f32.mrf.mxu0
        %v6004 = vadd.f32 0.0, %v6003
        %v6005 = vpop.f32.mrf.mxu0
        %v6006 = vpop.f32.mrf.mxu0
        %v6007 = vadd.f32 0.0, %v6006
        %v6008 = vpop.f32.mrf.mxu0
        %6009 = vmatprep.mubr.bf16.mxu0 %v5800
        %6010 = vmatmul.mubr.bf16.gmra.mxu0 %v5799
        %v6011 = vpop.f32.mrf.mxu0
        %v6012 = vadd.f32 0.0, %v6011
        %v6013 = vpop.f32.mrf.mxu0
        %v6014 = vpop.f32.mrf.mxu0
        %v6015 = vadd.f32 0.0, %v6014
        %v6016 = vpop.f32.mrf.mxu0
        %6017 = vmatprep.mubr.bf16.mxu0 %v5803
        %6018 = vmatmul.mubr.bf16.gmra.mxu0 %v5802
        %v6019 = vpop.f32.mrf.mxu0
        %v6020 = vadd.f32 0.0, %v6019
        %v6021 = vpop.f32.mrf.mxu0
        %v6022 = vpop.f32.mrf.mxu0
        %v6023 = vadd.f32 0.0, %v6022
        %v6024 = vpop.f32.mrf.mxu0
        %6025 = vdwg.mxu0
        %6026 = vmatprep.subr.bf16.mxu0 0
        %6027 = vmatpush1.bf16.msra.mxu0 %v5936
        %6028 = vmatprep.subr.bf16.mxu0 0
        %6029 = vmatpush1.bf16.msra.mxu0 %v5935
        %6030 = vmatprep.subr.bf16.mxu0 0
        %6031 = vmatpush1.bf16.msra.mxu0 %v5934
        %6032 = vmatprep.subr.bf16.mxu0 0
        %6033 = vmatpush1.bf16.msra.mxu0 %v5933
        %6034 = vmatprep.subr.bf16.mxu0 0
        %6035 = vmatpush1.bf16.msra.mxu0 %v5932
        %6036 = vmatprep.subr.bf16.mxu0 0
        %6037 = vmatpush1.bf16.msra.mxu0 %v5931
        %6038 = vmatprep.subr.bf16.mxu0 0
        %6039 = vmatpush1.bf16.msra.mxu0 %v5930
        %6040 = vmatprep.subr.bf16.mxu0 0
        %6041 = vmatpush1.bf16.msra.mxu0 %v5929
        %6042 = vmatprep.subr.bf16.mxu0 0
        %6043 = vmatpush2.bf16.msra.mxu0 0
        %6044 = vmatprep.subr.bf16.mxu0 0
        %6045 = vmatpush2.bf16.msra.mxu0 0
        %6046 = vmatprep.subr.bf16.mxu0 0
        %6047 = vmatpush2.bf16.msra.mxu0 0
        %6048 = vmatprep.subr.bf16.mxu0 0
        %6049 = vmatpush2.bf16.msra.mxu0 0
        %6050 = vmatprep.subr.bf16.mxu0 0
        %6051 = vmatpush2.bf16.msra.mxu0 0
        %6052 = vmatprep.subr.bf16.mxu0 0
        %6053 = vmatpush2.bf16.msra.mxu0 0
        %6054 = vmatprep.subr.bf16.mxu0 0
        %6055 = vmatpush2.bf16.msra.mxu0 0
        %6056 = vmatprep.subr.bf16.mxu0 0
        %6057 = vmatpush2.bf16.msra.mxu0 0
        %6058 = vmatprep.mubr.bf16.mxu0 0
        %6059 = vmatmul.mubr.bf16.gmra.mxu0 %v5795
        %v6060 = vpop.f32.mrf.mxu0
        %v6061 = vadd.f32 %v5996, %v6060
        %v6062 = vpop.f32.mrf.mxu0
        %v6063 = vpop.f32.mrf.mxu0
        %v6064 = vadd.f32 %v5999, %v6063
        %v6065 = vpop.f32.mrf.mxu0
        %6066 = vmatprep.mubr.bf16.mxu0 0
        %6067 = vmatmul.mubr.bf16.gmra.mxu0 %v5798
        %v6068 = vpop.f32.mrf.mxu0
        %v6069 = vadd.f32 %v6004, %v6068
        %v6070 = vpop.f32.mrf.mxu0
        %v6071 = vpop.f32.mrf.mxu0
        %v6072 = vadd.f32 %v6007, %v6071
        %v6073 = vpop.f32.mrf.mxu0
        %6074 = vmatprep.mubr.bf16.mxu0 0
        %6075 = vmatmul.mubr.bf16.gmra.mxu0 %v5801
        %v6076 = vpop.f32.mrf.mxu0
        %v6077 = vadd.f32 %v6012, %v6076
        %v6078 = vpop.f32.mrf.mxu0
        %v6079 = vpop.f32.mrf.mxu0
        %v6080 = vadd.f32 %v6015, %v6079
        %v6081 = vpop.f32.mrf.mxu0
        %6082 = vmatprep.mubr.bf16.mxu0 0
        %6083 = vmatmul.mubr.bf16.gmra.mxu0 %v5804
        %v6084 = vpop.f32.mrf.mxu0
        %v6085 = vadd.f32 %v6020, %v6084
        %v6086 = vpop.f32.mrf.mxu0
        %v6087 = vpop.f32.mrf.mxu0
        %v6088 = vadd.f32 %v6023, %v6087
        %v6089 = vpop.f32.mrf.mxu0
        %6090 = vdwg.mxu0
        %v6091 = vadd.f32 %v5538, %v6061
        %v6092 = vadd.f32 %v5541, %v6064
        %v6093 = vadd.f32 %v5546, %v6069
        %v6094 = vadd.f32 %v5549, %v6072
        %v6095 = vadd.f32 %v5554, %v6077
        %v6096 = vadd.f32 %v5557, %v6080
        %v6097 = vadd.f32 %v5562, %v6085
        %v6098 = vadd.f32 %v5565, %v6088
        %v6099 = vld [vmem:[%s11] sm:$0x1]
        %v6101 = vlaneseq
        %v6102 = vshrl.u32 %v6101, 7
        %v6103 = vsub.s32 0, %v6102
        %v6104 = vrot.slane %v6099, %v6103
        %v6106 = vadd.f32 %v6091, %v6104
        %v6107 = vadd.f32 %v6092, %v6104
        %v6108 = vadd.f32 %v6093, %v6104
        %v6109 = vadd.f32 %v6094, %v6104
        %v6110 = vadd.f32 %v6095, %v6104
        %v6111 = vadd.f32 %v6096, %v6104
        %v6112 = vadd.f32 %v6097, %v6104
        %v6113 = vadd.f32 %v6098, %v6104
        %s6114 = scalar_lea.vmem [#allocation2], 16
        %v6115 = vld [vmem:[%s6114] sm:$0xff]
        %v6116 = vld [vmem:[%s6114 + $0x8] sm:$0xff]
        %v6117 = vld [vmem:[%s6114 + $0x10] sm:$0xff]
        %v6118 = vld [vmem:[%s6114 + $0x18] sm:$0xff]
        %v6119 = vld [vmem:[%s6114 + $0x20] sm:$0xff]
        %v6120 = vld [vmem:[%s6114 + $0x28] sm:$0xff]
        %v6121 = vld [vmem:[%s6114 + $0x30] sm:$0xff]
        %v6122 = vld [vmem:[%s6114 + $0x38] sm:$0xff]
        %v6123 = vpack.c.bf16 %v6116, %v6115
        %v6124 = vpack.c.bf16 %v6118, %v6117
        %v6125 = vpack.c.bf16 %v6120, %v6119
        %v6126 = vpack.c.bf16 %v6122, %v6121
        %s6127 = scalar_lea.vmem [#allocation3], 16
        %v6128 = vld [vmem:[%s6127] sm:$0xff]
        %v6129 = vld [vmem:[%s6127 + $0x8] sm:$0xff]
        %v6130 = vld [vmem:[%s6127 + $0x10] sm:$0xff]
        %v6131 = vld [vmem:[%s6127 + $0x18] sm:$0xff]
        %v6132 = vld [vmem:[%s6127 + $0x20] sm:$0xff]
        %v6133 = vld [vmem:[%s6127 + $0x28] sm:$0xff]
        %v6134 = vld [vmem:[%s6127 + $0x30] sm:$0xff]
        %v6135 = vld [vmem:[%s6127 + $0x38] sm:$0xff]
        %v6136 = vpack.c.bf16 %v6129, %v6128
        %v6137 = vpack.c.bf16 %v6131, %v6130
        %v6138 = vpack.c.bf16 %v6133, %v6132
        %v6139 = vpack.c.bf16 %v6135, %v6134
        %v6140 = vld [vmem:[#allocation12] sm:$0xf]
        %v6141 = vld [vmem:[#allocation12 + $0x4] sm:$0xf]
        %v6142 = vld [vmem:[#allocation12 + $0x8] sm:$0xf]
        %v6143 = vld [vmem:[#allocation12 + $0xc] sm:$0xf]
        %v6144 = vld [vmem:[#allocation12 + $0x10] sm:$0xf]
        %v6145 = vld [vmem:[#allocation12 + $0x14] sm:$0xf]
        %v6146 = vld [vmem:[#allocation12 + $0x18] sm:$0xf]
        %v6147 = vld [vmem:[#allocation12 + $0x1c] sm:$0xf]
        %v6148 = vld [vmem:[#allocation12 + $0x20] sm:$0xf]
        %v6149 = vld [vmem:[#allocation12 + $0x24] sm:$0xf]
        %v6150 = vld [vmem:[#allocation12 + $0x28] sm:$0xf]
        %v6151 = vld [vmem:[#allocation12 + $0x2c] sm:$0xf]
        %v6152 = vld [vmem:[#allocation12 + $0x30] sm:$0xf]
        %v6153 = vld [vmem:[#allocation12 + $0x34] sm:$0xf]
        %v6154 = vld [vmem:[#allocation12 + $0x38] sm:$0xf]
        %v6155 = vld [vmem:[#allocation12 + $0x3c] sm:$0xf]
        %v6156 = vld [vmem:[#allocation13] sm:$0xf]
        %v6157 = vld [vmem:[#allocation13 + $0x4] sm:$0xf]
        %v6158 = vld [vmem:[#allocation13 + $0x8] sm:$0xf]
        %v6159 = vld [vmem:[#allocation13 + $0xc] sm:$0xf]
        %v6160 = vld [vmem:[#allocation13 + $0x10] sm:$0xf]
        %v6161 = vld [vmem:[#allocation13 + $0x14] sm:$0xf]
        %v6162 = vld [vmem:[#allocation13 + $0x18] sm:$0xf]
        %v6163 = vld [vmem:[#allocation13 + $0x1c] sm:$0xf]
        %v6164 = vld [vmem:[#allocation13 + $0x20] sm:$0xf]
        %v6165 = vld [vmem:[#allocation13 + $0x24] sm:$0xf]
        %v6166 = vld [vmem:[#allocation13 + $0x28] sm:$0xf]
        %v6167 = vld [vmem:[#allocation13 + $0x2c] sm:$0xf]
        %v6168 = vld [vmem:[#allocation13 + $0x30] sm:$0xf]
        %v6169 = vld [vmem:[#allocation13 + $0x34] sm:$0xf]
        %v6170 = vld [vmem:[#allocation13 + $0x38] sm:$0xf]
        %v6171 = vld [vmem:[#allocation13 + $0x3c] sm:$0xf]
        %v6188 = vunpack.c.l.b16 %v6156
        %v6189 = vunpack.c.l.b16 %v6157
        %v6190 = vunpack.c.l.b16 %v6158
        %v6191 = vunpack.c.l.b16 %v6159
        %v6192 = vunpack.c.l.b16 %v6160
        %v6193 = vunpack.c.l.b16 %v6161
        %v6194 = vunpack.c.l.b16 %v6162
        %v6195 = vunpack.c.l.b16 %v6163
        %v6196 = vunpack.c.l.b16 %v6164
        %v6197 = vunpack.c.l.b16 %v6165
        %v6198 = vunpack.c.l.b16 %v6166
        %v6199 = vunpack.c.l.b16 %v6167
        %v6200 = vunpack.c.l.b16 %v6168
        %v6201 = vunpack.c.l.b16 %v6169
        %v6202 = vunpack.c.l.b16 %v6170
        %v6203 = vunpack.c.l.b16 %v6171
        %v6204 = vpack.c.b16 %v6189, %v6188
        %v6205 = vpack.c.b16 %v6191, %v6190
        %v6206 = vpack.c.b16 %v6193, %v6192
        %v6207 = vpack.c.b16 %v6195, %v6194
        %v6208 = vpack.c.b16 %v6197, %v6196
        %v6209 = vpack.c.b16 %v6199, %v6198
        %v6210 = vpack.c.b16 %v6201, %v6200
        %v6211 = vpack.c.b16 %v6203, %v6202
        %6220 = vmatprep.subr.bf16.mxu0 0
        %6221 = vmatpush1.bf16.msra.mxu0 %v6211
        %6222 = vmatprep.subr.bf16.mxu0 0
        %6223 = vmatpush1.bf16.msra.mxu0 %v6210
        %6224 = vmatprep.subr.bf16.mxu0 0
        %6225 = vmatpush1.bf16.msra.mxu0 %v6209
        %6226 = vmatprep.subr.bf16.mxu0 0
        %6227 = vmatpush1.bf16.msra.mxu0 %v6208
        %6228 = vmatprep.subr.bf16.mxu0 0
        %6229 = vmatpush1.bf16.msra.mxu0 %v6207
        %6230 = vmatprep.subr.bf16.mxu0 0
        %6231 = vmatpush1.bf16.msra.mxu0 %v6206
        %6232 = vmatprep.subr.bf16.mxu0 0
        %6233 = vmatpush1.bf16.msra.mxu0 %v6205
        %6234 = vmatprep.subr.bf16.mxu0 0
        %6235 = vmatpush1.bf16.msra.mxu0 %v6204
        %6236 = vmatprep.subr.bf16.mxu0 0
        %6237 = vmatpush2.bf16.msra.mxu0 0
        %6238 = vmatprep.subr.bf16.mxu0 0
        %6239 = vmatpush2.bf16.msra.mxu0 0
        %6240 = vmatprep.subr.bf16.mxu0 0
        %6241 = vmatpush2.bf16.msra.mxu0 0
        %6242 = vmatprep.subr.bf16.mxu0 0
        %6243 = vmatpush2.bf16.msra.mxu0 0
        %6244 = vmatprep.subr.bf16.mxu0 0
        %6245 = vmatpush2.bf16.msra.mxu0 0
        %6246 = vmatprep.subr.bf16.mxu0 0
        %6247 = vmatpush2.bf16.msra.mxu0 0
        %6248 = vmatprep.subr.bf16.mxu0 0
        %6249 = vmatpush2.bf16.msra.mxu0 0
        %6250 = vmatprep.subr.bf16.mxu0 0
        %6251 = vmatpush2.bf16.msra.mxu0 0
        %6252 = vmatprep.mubr.bf16.mxu0 0
        %6253 = vmatmul.mubr.bf16.gmra.mxu0 %v6136
        %v6254 = vpop.f32.mrf.mxu0
        %v6255 = vadd.f32 0.0, %v6254
        %v6256 = vpop.f32.mrf.mxu0
        %v6257 = vpop.f32.mrf.mxu0
        %v6258 = vadd.f32 0.0, %v6257
        %v6259 = vpop.f32.mrf.mxu0
        %6260 = vmatprep.mubr.bf16.mxu0 0
        %6261 = vmatmul.mubr.bf16.gmra.mxu0 %v6137
        %v6262 = vpop.f32.mrf.mxu0
        %v6263 = vadd.f32 0.0, %v6262
        %v6264 = vpop.f32.mrf.mxu0
        %v6265 = vpop.f32.mrf.mxu0
        %v6266 = vadd.f32 0.0, %v6265
        %v6267 = vpop.f32.mrf.mxu0
        %6268 = vmatprep.mubr.bf16.mxu0 0
        %6269 = vmatmul.mubr.bf16.gmra.mxu0 %v6138
        %v6270 = vpop.f32.mrf.mxu0
        %v6271 = vadd.f32 0.0, %v6270
        %v6272 = vpop.f32.mrf.mxu0
        %v6273 = vpop.f32.mrf.mxu0
        %v6274 = vadd.f32 0.0, %v6273
        %v6275 = vpop.f32.mrf.mxu0
        %6276 = vmatprep.mubr.bf16.mxu0 0
        %6277 = vmatmul.mubr.bf16.gmra.mxu0 %v6139
        %v6278 = vpop.f32.mrf.mxu0
        %v6279 = vadd.f32 0.0, %v6278
        %v6280 = vpop.f32.mrf.mxu0
        %v6281 = vpop.f32.mrf.mxu0
        %v6282 = vadd.f32 0.0, %v6281
        %v6283 = vpop.f32.mrf.mxu0
        %6284 = vdwg.mxu0
        %v6301 = vunpack.c.l.b16 %v6140
        %v6302 = vunpack.c.l.b16 %v6141
        %v6303 = vunpack.c.l.b16 %v6142
        %v6304 = vunpack.c.l.b16 %v6143
        %v6305 = vunpack.c.l.b16 %v6144
        %v6306 = vunpack.c.l.b16 %v6145
        %v6307 = vunpack.c.l.b16 %v6146
        %v6308 = vunpack.c.l.b16 %v6147
        %v6309 = vunpack.c.l.b16 %v6148
        %v6310 = vunpack.c.l.b16 %v6149
        %v6311 = vunpack.c.l.b16 %v6150
        %v6312 = vunpack.c.l.b16 %v6151
        %v6313 = vunpack.c.l.b16 %v6152
        %v6314 = vunpack.c.l.b16 %v6153
        %v6315 = vunpack.c.l.b16 %v6154
        %v6316 = vunpack.c.l.b16 %v6155
        %v6317 = vpack.c.b16 %v6302, %v6301
        %v6318 = vpack.c.b16 %v6304, %v6303
        %v6319 = vpack.c.b16 %v6306, %v6305
        %v6320 = vpack.c.b16 %v6308, %v6307
        %v6321 = vpack.c.b16 %v6310, %v6309
        %v6322 = vpack.c.b16 %v6312, %v6311
        %v6323 = vpack.c.b16 %v6314, %v6313
        %v6324 = vpack.c.b16 %v6316, %v6315
        %6333 = vmatprep.subr.bf16.mxu0 0
        %6334 = vmatpush1.bf16.msra.mxu0 %v6324
        %6335 = vmatprep.subr.bf16.mxu0 0
        %6336 = vmatpush1.bf16.msra.mxu0 %v6323
        %6337 = vmatprep.subr.bf16.mxu0 0
        %6338 = vmatpush1.bf16.msra.mxu0 %v6322
        %6339 = vmatprep.subr.bf16.mxu0 0
        %6340 = vmatpush1.bf16.msra.mxu0 %v6321
        %6341 = vmatprep.subr.bf16.mxu0 0
        %6342 = vmatpush1.bf16.msra.mxu0 %v6320
        %6343 = vmatprep.subr.bf16.mxu0 0
        %6344 = vmatpush1.bf16.msra.mxu0 %v6319
        %6345 = vmatprep.subr.bf16.mxu0 0
        %6346 = vmatpush1.bf16.msra.mxu0 %v6318
        %6347 = vmatprep.subr.bf16.mxu0 0
        %6348 = vmatpush1.bf16.msra.mxu0 %v6317
        %6349 = vmatprep.subr.bf16.mxu0 0
        %6350 = vmatpush2.bf16.msra.mxu0 0
        %6351 = vmatprep.subr.bf16.mxu0 0
        %6352 = vmatpush2.bf16.msra.mxu0 0
        %6353 = vmatprep.subr.bf16.mxu0 0
        %6354 = vmatpush2.bf16.msra.mxu0 0
        %6355 = vmatprep.subr.bf16.mxu0 0
        %6356 = vmatpush2.bf16.msra.mxu0 0
        %6357 = vmatprep.subr.bf16.mxu0 0
        %6358 = vmatpush2.bf16.msra.mxu0 0
        %6359 = vmatprep.subr.bf16.mxu0 0
        %6360 = vmatpush2.bf16.msra.mxu0 0
        %6361 = vmatprep.subr.bf16.mxu0 0
        %6362 = vmatpush2.bf16.msra.mxu0 0
        %6363 = vmatprep.subr.bf16.mxu0 0
        %6364 = vmatpush2.bf16.msra.mxu0 0
        %6365 = vmatprep.mubr.bf16.mxu0 0
        %6366 = vmatmul.mubr.bf16.gmra.mxu0 %v6123
        %v6367 = vpop.f32.mrf.mxu0
        %v6368 = vadd.f32 %v6255, %v6367
        %v6369 = vpop.f32.mrf.mxu0
        %v6370 = vpop.f32.mrf.mxu0
        %v6371 = vadd.f32 %v6258, %v6370
        %v6372 = vpop.f32.mrf.mxu0
        %6373 = vmatprep.mubr.bf16.mxu0 0
        %6374 = vmatmul.mubr.bf16.gmra.mxu0 %v6124
        %v6375 = vpop.f32.mrf.mxu0
        %v6376 = vadd.f32 %v6263, %v6375
        %v6377 = vpop.f32.mrf.mxu0
        %v6378 = vpop.f32.mrf.mxu0
        %v6379 = vadd.f32 %v6266, %v6378
        %v6380 = vpop.f32.mrf.mxu0
        %6381 = vmatprep.mubr.bf16.mxu0 0
        %6382 = vmatmul.mubr.bf16.gmra.mxu0 %v6125
        %v6383 = vpop.f32.mrf.mxu0
        %v6384 = vadd.f32 %v6271, %v6383
        %v6385 = vpop.f32.mrf.mxu0
        %v6386 = vpop.f32.mrf.mxu0
        %v6387 = vadd.f32 %v6274, %v6386
        %v6388 = vpop.f32.mrf.mxu0
        %6389 = vmatprep.mubr.bf16.mxu0 0
        %6390 = vmatmul.mubr.bf16.gmra.mxu0 %v6126
        %v6391 = vpop.f32.mrf.mxu0
        %v6392 = vadd.f32 %v6279, %v6391
        %v6393 = vpop.f32.mrf.mxu0
        %v6394 = vpop.f32.mrf.mxu0
        %v6395 = vadd.f32 %v6282, %v6394
        %v6396 = vpop.f32.mrf.mxu0
        %6397 = vdwg.mxu0
        %v6398 = vld [vmem:[%s14] sm:$0x1]
        %v6400 = vlaneseq
        %v6401 = vshrl.u32 %v6400, 7
        %v6402 = vsub.s32 0, %v6401
        %v6403 = vrot.slane %v6398, %v6402
        %v6405 = vadd.f32 %v6368, %v6403
        %v6406 = vadd.f32 %v6371, %v6403
        %v6407 = vadd.f32 %v6376, %v6403
        %v6408 = vadd.f32 %v6379, %v6403
        %v6409 = vadd.f32 %v6384, %v6403
        %v6410 = vadd.f32 %v6387, %v6403
        %v6411 = vadd.f32 %v6392, %v6403
        %v6412 = vadd.f32 %v6395, %v6403
        %v6413 = vadd.f32 %v6106, %v6405
        %v6414 = vadd.f32 %v6107, %v6406
        %v6415 = vadd.f32 %v6108, %v6407
        %v6416 = vadd.f32 %v6109, %v6408
        %v6417 = vadd.f32 %v6110, %v6409
        %v6418 = vadd.f32 %v6111, %v6410
        %v6419 = vadd.f32 %v6112, %v6411
        %v6420 = vadd.f32 %v6113, %v6412
        %6421 = vst [vmem:[%s493] sm:$0xff] %v6413
        %6422 = vst [vmem:[%s493 + $0x8] sm:$0xff] %v6414
        %6423 = vst [vmem:[%s493 + $0x10] sm:$0xff] %v6415
        %6424 = vst [vmem:[%s493 + $0x18] sm:$0xff] %v6416
        %6425 = vst [vmem:[%s493 + $0x20] sm:$0xff] %v6417
        %6426 = vst [vmem:[%s493 + $0x28] sm:$0xff] %v6418
        %6427 = vst [vmem:[%s493 + $0x30] sm:$0xff] %v6419
        %6428 = vst [vmem:[%s493 + $0x38] sm:$0xff] %v6420
        %s6429 = sand.u32 %s327, 1
        %s6430 = scalar_lea.sflag [#allocation9], %s6429
        %s6431 = sand.u32 %s327, 1
        %s6432 = smul.addr %s6431, 64
        %s6433 = scalar_lea.vmem [#allocation15], %s6432
        // Predicated region
        $region105: #{tpu_custom_call.1} parent=71 // pred_check
          %p6434 = pneg %p337
        $region106: #{tpu_custom_call.1} parent=71 // pred_check_branch
          %6436 = sbr.rel (%p6434) target = $region108
        $region107: #{tpu_custom_call.1} parent=71 // pred_region
          %s6437 = smul.u32 8, %s37
          %s6439 = ssub.s32 1024, 1024
          %6440 = vsyncadd %s6430, %s6439
          %s6441 = smul.addr %s36, 8
          %s6442 = sadd.s32 %s6437, %s6441
          %s6443 = smul.addr %s6442, 128
          %s6444 = scalar_lea.hbm %s15, %s6443
          %s6445 = sshll.u32 %s6433, 4
          %s6446 = int_to_ptr.vmem [resolvable:$true] %s6445
          %6451 = dma.vmem_to_hbm [thread:$0]  %s6446, 1024, %s6444, %s6430, 128, 128, 8
        $region108: #{tpu_custom_call.1} parent=71 // pred_fallthru
          _
      $region72: #{tpu_custom_call.1} parent=5 // pred_fallthru
        _
      %p6452 = scmp.le.s32.totalorder 2, %s27
      // Predicated region
      $region109: #{tpu_custom_call.1} parent=5 // pred_check
        %p6453 = pneg %p6452
      $region110: #{tpu_custom_call.1} parent=5 // pred_check_branch
        %6455 = sbr.rel (%p6453) target = $region112
      $region111: #{tpu_custom_call.1} parent=5 // pred_region
        %s6456 = ssub.s32 %s27, 2
        // Predicated region
        $region113: #{tpu_custom_call.1} parent=111 // pred_check
          %p6457 = pneg %p343
        $region114: #{tpu_custom_call.1} parent=111 // pred_check_branch
          %6459 = sbr.rel (%p6457) target = $region116
        $region115: #{tpu_custom_call.1} parent=111 // pred_region
          %s6460 = sand.u32 %s328, 1
          %s6461 = scalar_lea.sflag [#allocation9], %s6460
          %s6462 = sand.u32 %s328, 1
          %s6463 = smul.addr %s6462, 64
          %s6464 = scalar_lea.vmem [#allocation15], %s6463
          %6465 = dma.done %s6461, 1024
        $region116: #{tpu_custom_call.1} parent=111 // pred_fallthru
          _
      $region112: #{tpu_custom_call.1} parent=5 // pred_fallthru
        _
    $region6: #{tpu_custom_call.1} parent=1 // loop_footer
      %s31 = sadd.s32 1, %s27
    $region7: #{tpu_custom_call.1} parent=1 // loop_footer_branch
      %26 = sbr.rel target = $region3
    $region8: #{tpu_custom_call.1} parent=1 // loop_exit
      _
    %6466 = vsyncpa [#allocation8], 1
    %s6467 = scalar_lea.sflag [#allocation8], 1
    %6468 = vsyncpa %s6467, 1
    %6469 = vsyncpa [#allocation11], 1
    %6470 = vsyncpa [#allocation14], 1
    %6471 = vsyncpa [#allocation9], 1
    %s6472 = scalar_lea.sflag [#allocation9], 1
    %6473 = vsyncpa %s6472, 1
  %6474 = vsyncmov [#allocation6]
  %s6475 = vpop.sfrf %6474
  %p6476 = scmp.eq.s32.totalorder %s6475, 0
  %p6477 = pneg %p6476
  %6479 = shalt.err (%p6477)
  %s6480 = scalar_lea.sflag [#allocation6], 1
  %6481 = vsyncmov %s6480
  %s6482 = vpop.sfrf %6481
  %p6483 = scmp.eq.s32.totalorder %s6482, 0
  %p6484 = pneg %p6483
  %6486 = shalt.err (%p6484)

</llo_original>
